<compile_context>
chip_gen: v5e
topology: v5e:2x2
jax: 0.10.0
libtpu: 0.0.40
codegen_flags: <defaults>
</compile_context>

<pallas_src>
import functools

import jax
import jax.numpy as jnp
from jax.experimental import pallas as pl
from jax.experimental.pallas import tpu as pltpu

EPS = 1e-5
LANE = 128                 # channel dims padded to a multiple of the lane width


def _round_up(x, m):
    return (x + m - 1) // m * m


def _cdiv(a, b):
    return (a + b - 1) // b


def _pad_to(x, shape, value=0.0):
    pads = [(0, t - s) for s, t in zip(x.shape, shape)]
    if all(p == (0, 0) for p in pads):
        return x
    return jnp.pad(x, pads, constant_values=value)


def _pick_tm(bytes_per_row, m, *, cap=2048, budget=16 << 20):
    """Row-tile size from a VMEM budget (x2 for double-buffered blocks)."""
    tm = int(budget // (2 * max(bytes_per_row, 1)))
    tm = min(tm, cap)
    if tm >= m:
        return m                     # single full block (any m is a legal full dim)
    return max((tm // 8) * 8, 8)


def _compiler_params(semantics, vmem_bytes_est):
    # Raise the scoped-VMEM limit only when the working set needs it; cap at
    # 48 MiB to leave headroom inside v7x's 64 MiB per-core VMEM.
    limit = None
    if vmem_bytes_est > (16 << 20):
        limit = int(min(_round_up(vmem_bytes_est, 1 << 20), 48 << 20))
    return pltpu.CompilerParams(dimension_semantics=semantics,
                                vmem_limit_bytes=limit)


def _bn_coeffs(s_ref, q_ref, g_ref, b_ref, m_rows):
    """Per-channel scale/shift from reduced sum / sum-of-squares (f32)."""
    inv_m = 1.0 / float(m_rows)
    mean = s_ref[...] * inv_m
    var = jnp.maximum(q_ref[...] * inv_m - mean * mean, 0.0)   # biased var (BN)
    scale = jax.lax.rsqrt(var + EPS) * g_ref[...]              # EUP rsqrt
    shift = b_ref[...] - mean * scale
    return scale, shift


def _partial_stats(y, ps_ref, pq_ref, *, m_rows, tm):
    """Write this tile's (sum, sum-of-squares); row-mask only the last tile."""
    i = pl.program_id(0)
    full = (i + 1) * tm <= m_rows

    @pl.when(full)
    def _():
        ps_ref[...] = jnp.sum(y, axis=0, keepdims=True).reshape(ps_ref.shape)
        pq_ref[...] = jnp.sum(y * y, axis=0, keepdims=True).reshape(pq_ref.shape)

    @pl.when(jnp.logical_not(full))
    def _():
        row = jax.lax.broadcasted_iota(jnp.int32, y.shape, 0)
        ym = jnp.where(row < m_rows - i * tm, y, 0.0)
        ps_ref[...] = jnp.sum(ym, axis=0, keepdims=True).reshape(ps_ref.shape)
        pq_ref[...] = jnp.sum(ym * ym, axis=0, keepdims=True).reshape(pq_ref.shape)


# ---------------------------------------------------------------------------
# Kernel 1: conv1 (1x1) row-tiled matmul + bn1 partial statistics.
# ---------------------------------------------------------------------------
def _conv1x1_stats_kernel(x_ref, w_ref, y_ref, ps_ref, pq_ref, *, m_rows, tm):
    y = jnp.dot(x_ref[...], w_ref[...], preferred_element_type=jnp.float32)
    y_ref[...] = y.astype(y_ref.dtype)
    _partial_stats(y, ps_ref, pq_ref, m_rows=m_rows, tm=tm)


def conv1x1_stats(x, w, *, m_rows, tm):
    m, cin = x.shape
    cout = w.shape[1]
    nt = _cdiv(m, tm)
    vmem_est = (2 * 2 * tm * (cin + cout)       # bf16 in/out blocks, double-buffered
                + 2 * 2 * cin * cout            # bf16 weights
                + 2 * 4 * tm * cout             # f32 matmul result temporaries
                + (2 << 20))
    return pl.pallas_call(
        functools.partial(_conv1x1_stats_kernel, m_rows=m_rows, tm=tm),
        grid=(nt,),
        in_specs=[
            pl.BlockSpec((tm, cin), lambda i: (i, 0)),
            pl.BlockSpec((cin, cout), lambda i: (0, 0)),       # resident weight
        ],
        out_specs=[
            pl.BlockSpec((tm, cout), lambda i: (i, 0)),
            pl.BlockSpec((1, 1, cout), lambda i: (i, 0, 0)),   # per-tile partial stats
            pl.BlockSpec((1, 1, cout), lambda i: (i, 0, 0)),
        ],
        out_shape=[
            jax.ShapeDtypeStruct((m, cout), jnp.bfloat16),
            jax.ShapeDtypeStruct((nt, 1, cout), jnp.float32),
            jax.ShapeDtypeStruct((nt, 1, cout), jnp.float32),
        ],
        compiler_params=_compiler_params(("parallel",), vmem_est),
    )(x, w)


# ---------------------------------------------------------------------------
# Kernel 2: bn1+relu fused into conv2 (3x3, padding=1) as 9 matmuls over the
#           full padded width + per-image bn2 partial statistics.  No im2col,
#           no per-tap unaligned slices: dy = contiguous major-axis slice,
#           dx = accumulator choice + one column-offset crop at the end.
# ---------------------------------------------------------------------------
def _bn_relu_conv3x3_stats_kernel(a_ref, s_ref, q_ref, g_ref, b_ref, w_ref,
                                  y_ref, ps_ref, pq_ref, pad_ref, acc_ref,
                                  *, m_rows, h, w, wp):
    cp = a_ref.shape[-1]
    cout = w_ref.shape[-1]
    hw = h * w

    # bn1 coefficients from the globally reduced conv1 statistics.
    scale, shift = _bn_coeffs(s_ref, q_ref, g_ref, b_ref, m_rows)

    # Zero halo + accumulators every step (grid is "parallel": no "first
    # iteration" to rely on; scratch is per-core and reused sequentially).
    pad_ref[...] = jnp.zeros_like(pad_ref)
    acc_ref[...] = jnp.zeros_like(acc_ref)

    # bn1 + relu in f32, stored once (bf16) into the halo interior.
    act = jnp.maximum(a_ref[...].astype(jnp.float32) * scale + shift, 0.0)
    pad_ref[pl.ds(1, h), pl.ds(1, w), :] = (
        act.reshape(h, w, cp).astype(pad_ref.dtype))

    # 9 shift-accumulated matmuls over the full padded width (wp % 8 == 0 so
    # the (h, wp, cp) -> (h*wp, cp) reshape is a free relayout).
    for dy in range(3):
        lhs = pad_ref[pl.ds(dy, h), :, :].reshape(h * wp, cp)
        for dx in range(3):
            acc_ref[dx] += jnp.dot(lhs, w_ref[3 * dy + dx],
                                   preferred_element_type=jnp.float32)

    # Resolve the dx shift with one column-offset crop per accumulator.
    a0 = acc_ref[0].reshape(h, wp, cout)
    a1 = acc_ref[1].reshape(h, wp, cout)
    a2 = acc_ref[2].reshape(h, wp, cout)
    y = (a0[:, 0:w, :] + a1[:, 1:1 + w, :] + a2[:, 2:2 + w, :]).reshape(hw, cout)

    y_ref[...] = y.astype(y_ref.dtype)
    ps_ref[...] = jnp.sum(y, axis=0, keepdims=True).reshape(ps_ref.shape)
    pq_ref[...] = jnp.sum(y * y, axis=0, keepdims=True).reshape(pq_ref.shape)


def bn_relu_conv3x3_stats(y1, s, q, g, b, w2, *, m_rows, n, h, w):
    m, cp = y1.shape
    cout = w2.shape[-1]
    hw = h * w
    wp = _round_up(w + 2, 8)
    vmem_est = (2 * 2 * hw * (cp + cout)        # bf16 in/out image blocks, double-buffered
                + 2 * 2 * 9 * cp * cout         # bf16 weights
                + 2 * (h + 2) * wp * cp         # bf16 halo scratch
                + 3 * 4 * h * wp * cout         # f32 per-dx accumulators
                + 2 * 4 * h * wp * cout         # matmul / crop temporaries
                + (2 << 20))
    # TODO(synk): for very large H*W a second (row-strip) grid axis would give
    # intra-image pipelining/megacore sharding; per-image is enough here.
    return pl.pallas_call(
        functools.partial(_bn_relu_conv3x3_stats_kernel,
                          m_rows=m_rows, h=h, w=w, wp=wp),
        grid=(n,),
        in_specs=[
            pl.BlockSpec((hw, cp), lambda i: (i, 0)),
            pl.BlockSpec((1, cp), lambda i: (0, 0)),
            pl.BlockSpec((1, cp), lambda i: (0, 0)),
            pl.BlockSpec((1, cp), lambda i: (0, 0)),
            pl.BlockSpec((1, cp), lambda i: (0, 0)),
            pl.BlockSpec((9, cp, cout), lambda i: (0, 0, 0)),  # resident weight
        ],
        out_specs=[
            pl.BlockSpec((hw, cout), lambda i: (i, 0)),
            pl.BlockSpec((1, 1, cout), lambda i: (i, 0, 0)),   # per-image partial stats
            pl.BlockSpec((1, 1, cout), lambda i: (i, 0, 0)),
        ],
        out_shape=[
            jax.ShapeDtypeStruct((m, cout), jnp.bfloat16),
            jax.ShapeDtypeStruct((n, 1, cout), jnp.float32),
            jax.ShapeDtypeStruct((n, 1, cout), jnp.float32),
        ],
        scratch_shapes=[
            pltpu.VMEM((h + 2, wp, cp), jnp.bfloat16),         # zero-halo activations
            pltpu.VMEM((3, h * wp, cout), jnp.float32),        # per-dx accumulators
        ],
        compiler_params=_compiler_params(("parallel",), vmem_est),
    )(y1, s, q, g, b, w2)


# ---------------------------------------------------------------------------
# Kernel 3: bn2+relu fused into conv3 (1x1) + bn3 partial statistics.
# ---------------------------------------------------------------------------
def _bn_relu_conv1x1_stats_kernel(a_ref, s_ref, q_ref, g_ref, b_ref, w_ref,
                                  y_ref, ps_ref, pq_ref, *, m_rows, tm):
    scale, shift = _bn_coeffs(s_ref, q_ref, g_ref, b_ref, m_rows)
    act = jnp.maximum(a_ref[...].astype(jnp.float32) * scale + shift, 0.0)
    y = jnp.dot(act.astype(jnp.bfloat16), w_ref[...],
                preferred_element_type=jnp.float32)
    y_ref[...] = y.astype(y_ref.dtype)
    _partial_stats(y, ps_ref, pq_ref, m_rows=m_rows, tm=tm)


def bn_relu_conv1x1_stats(a, s, q, g, b, w, *, m_rows, tm):
    m, cin = a.shape
    cout = w.shape[1]
    nt = _cdiv(m, tm)
    vmem_est = (2 * 2 * tm * (cin + cout)
                + 2 * 2 * cin * cout
                + 4 * tm * cin + 2 * 4 * tm * cout
                + (2 << 20))
    return pl.pallas_call(
        functools.partial(_bn_relu_conv1x1_stats_kernel, m_rows=m_rows, tm=tm),
        grid=(nt,),
        in_specs=[
            pl.BlockSpec((tm, cin), lambda i: (i, 0)),
            pl.BlockSpec((1, cin), lambda i: (0, 0)),
            pl.BlockSpec((1, cin), lambda i: (0, 0)),
            pl.BlockSpec((1, cin), lambda i: (0, 0)),
            pl.BlockSpec((1, cin), lambda i: (0, 0)),
            pl.BlockSpec((cin, cout), lambda i: (0, 0)),       # resident weight
        ],
        out_specs=[
            pl.BlockSpec((tm, cout), lambda i: (i, 0)),
            pl.BlockSpec((1, 1, cout), lambda i: (i, 0, 0)),
            pl.BlockSpec((1, 1, cout), lambda i: (i, 0, 0)),
        ],
        out_shape=[
            jax.ShapeDtypeStruct((m, cout), jnp.bfloat16),
            jax.ShapeDtypeStruct((nt, 1, cout), jnp.float32),
            jax.ShapeDtypeStruct((nt, 1, cout), jnp.float32),
        ],
        compiler_params=_compiler_params(("parallel",), vmem_est),
    )(a, s, q, g, b, w)


# ---------------------------------------------------------------------------
# Kernel 4: bn3 + residual add + relu (elementwise, bf16 in / f32 out).
# ---------------------------------------------------------------------------
def _bn_add_relu_kernel(y_ref, s_ref, q_ref, g_ref, b_ref, r_ref, o_ref,
                        *, m_rows):
    scale, shift = _bn_coeffs(s_ref, q_ref, g_ref, b_ref, m_rows)
    out = (y_ref[...].astype(jnp.float32) * scale + shift
           + r_ref[...].astype(jnp.float32))
    o_ref[...] = jnp.maximum(out, 0.0).astype(o_ref.dtype)


def bn_add_relu(y, s, q, g, b, res, *, m_rows, tm):
    m, cout = y.shape
    nt = _cdiv(m, tm)
    vmem_est = (2 * tm * cout * (2 + 2 + 4)     # bf16 y + bf16 residual + f32 out (x2)
                + 4 * tm * cout
                + (2 << 20))
    return pl.pallas_call(
        functools.partial(_bn_add_relu_kernel, m_rows=m_rows),
        grid=(nt,),
        in_specs=[
            pl.BlockSpec((tm, cout), lambda i: (i, 0)),
            pl.BlockSpec((1, cout), lambda i: (0, 0)),
            pl.BlockSpec((1, cout), lambda i: (0, 0)),
            pl.BlockSpec((1, cout), lambda i: (0, 0)),
            pl.BlockSpec((1, cout), lambda i: (0, 0)),
            pl.BlockSpec((tm, cout), lambda i: (i, 0)),
        ],
        out_specs=pl.BlockSpec((tm, cout), lambda i: (i, 0)),
        out_shape=jax.ShapeDtypeStruct((m, cout), jnp.float32),
        compiler_params=_compiler_params(("parallel",), vmem_est),
    )(y, s, q, g, b, res)


# ---------------------------------------------------------------------------
# Orchestration.
# ---------------------------------------------------------------------------
def bottleneck_forward(x_nchw, params, *, planes):
    n, cin, h, w = x_nchw.shape
    c4 = planes * 4
    assert cin == c4, "identity residual requires inplanes == planes * 4"

    cp = _round_up(planes, LANE)
    c4p = _round_up(c4, LANE)
    m = n * h * w

    # Single bf16 NHWC row-major copy: conv1 input AND residual (kernel 4
    # upcasts in-register).  Zero-padded channels stay exactly zero end-to-end.
    x_rows = jnp.transpose(x_nchw, (0, 2, 3, 1)).reshape(m, cin)
    x_bf = _pad_to(x_rows, (m, c4p)).astype(jnp.bfloat16)

    w1 = _pad_to(params["w1"], (c4p, cp)).astype(jnp.bfloat16)
    w2 = _pad_to(params["w2"], (9, cp, cp)).astype(jnp.bfloat16)
    w3 = _pad_to(params["w3"], (cp, c4p)).astype(jnp.bfloat16)
    g1 = _pad_to(params["g1"].reshape(1, -1), (1, cp), 1.0)
    b1 = _pad_to(params["b1"].reshape(1, -1), (1, cp))
    g2 = _pad_to(params["g2"].reshape(1, -1), (1, cp), 1.0)
    b2 = _pad_to(params["b2"].reshape(1, -1), (1, cp))
    g3 = _pad_to(params["g3"].reshape(1, -1), (1, c4p), 1.0)
    b3 = _pad_to(params["b3"].reshape(1, -1), (1, c4p))

    tm1 = _pick_tm(2 * (c4p + cp), m)
    tm3 = _pick_tm(2 * cp + 4 * cp + 2 * c4p, m)
    tm4 = _pick_tm((2 + 2 + 4) * c4p, m, cap=4096)

    # conv1 (1x1) + bn1 partial statistics.
    y1, ps1, pq1 = conv1x1_stats(x_bf, w1, m_rows=m, tm=tm1)
    s1, q1 = jnp.sum(ps1, axis=0), jnp.sum(pq1, axis=0)          # tiny XLA reduce

    # bn1+relu fused into the 3x3 conv (+ bn2 partial statistics).  No im2col.
    y2, ps2, pq2 = bn_relu_conv3x3_stats(y1, s1, q1, g1, b1, w2,
                                         m_rows=m, n=n, h=h, w=w)
    s2, q2 = jnp.sum(ps2, axis=0), jnp.sum(pq2, axis=0)

    # bn2+relu fused into conv3 (1x1) (+ bn3 partial statistics).
    y3, ps3, pq3 = bn_relu_conv1x1_stats(y2, s2, q2, g2, b2, w3,
                                         m_rows=m, tm=tm3)
    s3, q3 = jnp.sum(ps3, axis=0), jnp.sum(pq3, axis=0)

    # bn3 + residual add + relu.
    out = bn_add_relu(y3, s3, q3, g3, b3, x_bf, m_rows=m, tm=tm4)

    out = out[:, :c4].reshape(n, h, w, c4)
    return jnp.transpose(out, (0, 3, 1, 2))                      # back to NCHW


def init_params(key, inplanes, planes):
    k1, k2, k3, k4, k5, k6 = jax.random.split(key, 6)
    # Conv weights kept directly in matmul layout:
    #   w1: [inplanes, planes]   (1x1)
    #   w2: [9, planes, planes]  (3x3, k = 3*ky + kx)
    #   w3: [planes, 4*planes]   (1x1)
    w1 = 0.1 * jax.random.normal(k1, (inplanes, planes), jnp.float32)
    w2 = 0.1 * jax.random.normal(k2, (9, planes, planes), jnp.float32)
    w3 = 0.1 * jax.random.normal(k3, (planes, 4 * planes), jnp.float32)
    g1 = 1.0 + 0.1 * jax.random.normal(k4, (planes,), jnp.float32)
    b1 = jnp.zeros((planes,), jnp.float32)
    g2 = 1.0 + 0.1 * jax.random.normal(k5, (planes,), jnp.float32)
    b2 = jnp.zeros((planes,), jnp.float32)
    g3 = 1.0 + 0.1 * jax.random.normal(k6, (4 * planes,), jnp.float32)
    b3 = jnp.zeros((4 * planes,), jnp.float32)
    return dict(w1=w1, w2=w2, w3=w3, g1=g1, b1=b1, g2=g2, b2=b2, g3=g3, b3=b3)


def reference_forward(x_nchw, params, *, planes):
    """Pure-JAX f32 reference matching the PyTorch module (training-mode BN)."""
    x = jnp.transpose(x_nchw, (0, 2, 3, 1))
    n, h, w, _ = x.shape

    def bn(y, g, b):
        mean = jnp.mean(y, axis=(0, 1, 2), keepdims=True)
        var = jnp.mean((y - mean) ** 2, axis=(0, 1, 2), keepdims=True)
        return (y - mean) * jax.lax.rsqrt(var + EPS) * g + b

    y1 = jnp.einsum("nhwc,cd->nhwd", x, params["w1"])
    a1 = jnp.maximum(bn(y1, params["g1"], params["b1"]), 0.0)

    a1p = jnp.pad(a1, ((0, 0), (1, 1), (1, 1), (0, 0)))
    y2 = jnp.zeros((n, h, w, planes), jnp.float32)
    for k in range(9):
        dy, dx = k // 3, k % 3
        y2 = y2 + jnp.einsum("nhwc,cd->nhwd",
                             a1p[:, dy:dy + h, dx:dx + w, :], params["w2"][k])
    a2 = jnp.maximum(bn(y2, params["g2"], params["b2"]), 0.0)

    y3 = jnp.einsum("nhwc,cd->nhwd", a2, params["w3"])
    out = jnp.maximum(bn(y3, params["g3"], params["b3"]) + x, 0.0)
    return jnp.transpose(out, (0, 3, 1, 2))


if __name__ == "__main__":
    # Small shapes consistent with the module; identity residual needs
    # inplanes == planes * expansion(=4).
    N, planes, H, W = 2, 4, 8, 8
    inplanes = planes * 4
    key = jax.random.PRNGKey(0)
    kx, kp = jax.random.split(key)
    x = jax.random.normal(kx, (N, inplanes, H, W), jnp.float32)   # NCHW like PyTorch
    params = init_params(kp, inplanes, planes)

    fwd = jax.jit(functools.partial(bottleneck_forward, planes=planes))
    out = jax.block_until_ready(fwd(x, params))
    assert out.shape == (N, planes * 4, H, W), out.shape

    ref = reference_forward(x, params, planes=planes)
    max_err = float(jnp.max(jnp.abs(out - ref)))
    assert max_err < 1e-1, f"max abs error vs reference: {max_err}"
    print("KERNEL_OK")
</pallas_src>

<mosaic_0001>
module attributes {stable_mosaic.version = 11 : i64} {
  func.func @_conv1x1_stats_kernel(%arg0: i32, %arg1: memref<128x128xbf16, #tpu.memory_space<vmem>>, %arg2: memref<128x128xbf16, #tpu.memory_space<vmem>>, %arg3: memref<128x128xbf16, #tpu.memory_space<vmem>>, %arg4: memref<1x1x128xf32, #tpu.memory_space<vmem>>, %arg5: memref<1x1x128xf32, #tpu.memory_space<vmem>>) attributes {dimension_semantics = [#tpu.dimension_semantics<parallel>], iteration_bounds = array<i64: 1>, scalar_prefetch = 0 : i64, scratch_operands = 0 : i64, tpu.core_type = #tpu.core_type<tc>, window_params = [{transform_indices = @transform_0, window_bounds = array<i64: 128, 128>}, {pipeline_mode = #tpu.pipeline_mode<synchronous>, transform_indices = @transform_1, window_bounds = array<i64: 128, 128>}, {transform_indices = @transform_2, window_bounds = array<i64: 128, 128>}, {transform_indices = @transform_3, window_bounds = array<i64: 1, 1, 128>}, {transform_indices = @transform_4, window_bounds = array<i64: 1, 1, 128>}]} {
    %c0 = arith.constant 0 : index
    %c0_0 = arith.constant 0 : index
    %0 = vector.load %arg1[%c0, %c0_0] : memref<128x128xbf16, #tpu.memory_space<vmem>>, vector<128x128xbf16>
    %c0_1 = arith.constant 0 : index
    %c0_2 = arith.constant 0 : index
    %1 = vector.load %arg2[%c0_1, %c0_2] : memref<128x128xbf16, #tpu.memory_space<vmem>>, vector<128x128xbf16>
    %cst = arith.constant dense<0.000000e+00> : vector<128x128xf32>
    %2 = tpu.matmul %0, %1, %cst {dimension_numbers = #tpu.dot_dimension_numbers<[1], [0], [0], [1], [0, 0, 1, 1], [], []>} : vector<128x128xbf16>, vector<128x128xbf16>, vector<128x128xf32> -> vector<128x128xf32>
    %3 = arith.truncf %2 : vector<128x128xf32> to vector<128x128xbf16>
    %c0_3 = arith.constant 0 : index
    %c0_4 = arith.constant 0 : index
    %4 = vector.load %arg3[%c0_3, %c0_4] : memref<128x128xbf16, #tpu.memory_space<vmem>>, vector<128x128xbf16>
    tpu.vector_store %arg3[%c0_3, %c0_4], %3 {strides = array<i32>} : memref<128x128xbf16, #tpu.memory_space<vmem>>, vector<128x128xbf16>,
    %c1_i32 = arith.constant 1 : i32
    %5 = arith.addi %arg0, %c1_i32 : i32
    %c128_i32 = arith.constant 128 : i32
    %6 = arith.muli %5, %c128_i32 : i32
    %c128_i32_5 = arith.constant 128 : i32
    %7 = arith.cmpi sle, %6, %c128_i32_5 : i32
    %8 = arith.extui %7 : i1 to i32
    %c0_i32 = arith.constant 0 : i32
    %9 = arith.cmpi ne, %8, %c0_i32 : i32
    scf.if %9 {
      %cst_7 = arith.constant dense<0.000000e+00> : vector<128xf32>
      %13 = vector.multi_reduction <add>, %2, %cst_7 [0] : vector<128x128xf32> to vector<128xf32>
      %14 = vector.shape_cast %13 : vector<128xf32> to vector<1x128xf32>
      %15 = vector.shape_cast %14 : vector<1x128xf32> to vector<1x1x128xf32>
      %c0_8 = arith.constant 0 : index
      %c0_9 = arith.constant 0 : index
      %c0_10 = arith.constant 0 : index
      %16 = vector.load %arg4[%c0_8, %c0_9, %c0_10] : memref<1x1x128xf32, #tpu.memory_space<vmem>>, vector<1x1x128xf32>
      tpu.vector_store %arg4[%c0_8, %c0_9, %c0_10], %15 {strides = array<i32>} : memref<1x1x128xf32, #tpu.memory_space<vmem>>, vector<1x1x128xf32>,
      %17 = arith.mulf %2, %2 : vector<128x128xf32>
      %cst_11 = arith.constant dense<0.000000e+00> : vector<128xf32>
      %18 = vector.multi_reduction <add>, %17, %cst_11 [0] : vector<128x128xf32> to vector<128xf32>
      %19 = vector.shape_cast %18 : vector<128xf32> to vector<1x128xf32>
      %20 = vector.shape_cast %19 : vector<1x128xf32> to vector<1x1x128xf32>
      %c0_12 = arith.constant 0 : index
      %c0_13 = arith.constant 0 : index
      %c0_14 = arith.constant 0 : index
      %21 = vector.load %arg5[%c0_12, %c0_13, %c0_14] : memref<1x1x128xf32, #tpu.memory_space<vmem>>, vector<1x1x128xf32>
      tpu.vector_store %arg5[%c0_12, %c0_13, %c0_14], %20 {strides = array<i32>} : memref<1x1x128xf32, #tpu.memory_space<vmem>>, vector<1x1x128xf32>,
    } else {
    }
    %true = arith.constant true
    %10 = arith.xori %7, %true : i1
    %11 = arith.extui %10 : i1 to i32
    %c0_i32_6 = arith.constant 0 : i32
    %12 = arith.cmpi ne, %11, %c0_i32_6 : i32
    scf.if %12 {
      %13 = tpu.iota {dimensions = array<i32: 0>} : vector<128x128xi32>
      %c128_i32_7 = arith.constant 128 : i32
      %14 = arith.muli %arg0, %c128_i32_7 : i32
      %c128_i32_8 = arith.constant 128 : i32
      %15 = arith.subi %c128_i32_8, %14 : i32
      %16 = vector.broadcast %15 : i32 to vector<128x128xi32>
      %17 = arith.cmpi slt, %13, %16 : vector<128x128xi32>
      %cst_9 = arith.constant 0.000000e+00 : f32
      %18 = vector.broadcast %cst_9 : f32 to vector<128x128xf32>
      %19 = arith.select %17, %2, %18 : vector<128x128xi1>, vector<128x128xf32>
      %cst_10 = arith.constant dense<0.000000e+00> : vector<128xf32>
      %20 = vector.multi_reduction <add>, %19, %cst_10 [0] : vector<128x128xf32> to vector<128xf32>
      %21 = vector.shape_cast %20 : vector<128xf32> to vector<1x128xf32>
      %22 = vector.shape_cast %21 : vector<1x128xf32> to vector<1x1x128xf32>
      %c0_11 = arith.constant 0 : index
      %c0_12 = arith.constant 0 : index
      %c0_13 = arith.constant 0 : index
      %23 = vector.load %arg4[%c0_11, %c0_12, %c0_13] : memref<1x1x128xf32, #tpu.memory_space<vmem>>, vector<1x1x128xf32>
      tpu.vector_store %arg4[%c0_11, %c0_12, %c0_13], %22 {strides = array<i32>} : memref<1x1x128xf32, #tpu.memory_space<vmem>>, vector<1x1x128xf32>,
      %24 = arith.mulf %19, %19 : vector<128x128xf32>
      %cst_14 = arith.constant dense<0.000000e+00> : vector<128xf32>
      %25 = vector.multi_reduction <add>, %24, %cst_14 [0] : vector<128x128xf32> to vector<128xf32>
      %26 = vector.shape_cast %25 : vector<128xf32> to vector<1x128xf32>
      %27 = vector.shape_cast %26 : vector<1x128xf32> to vector<1x1x128xf32>
      %c0_15 = arith.constant 0 : index
      %c0_16 = arith.constant 0 : index
      %c0_17 = arith.constant 0 : index
      %28 = vector.load %arg5[%c0_15, %c0_16, %c0_17] : memref<1x1x128xf32, #tpu.memory_space<vmem>>, vector<1x1x128xf32>
      tpu.vector_store %arg5[%c0_15, %c0_16, %c0_17], %27 {strides = array<i32>} : memref<1x1x128xf32, #tpu.memory_space<vmem>>, vector<1x1x128xf32>,
    } else {
    }
    return
  }
  func.func @transform_0(%arg0: i32) -> (i32, i32) {
    %c0_i32 = arith.constant 0 : i32
    %c0_i32_0 = arith.constant 0 : i32
    return %arg0, %c0_i32 : i32, i32
  }
  func.func @transform_1(%arg0: i32) -> (i32, i32) {
    %c0_i32 = arith.constant 0 : i32
    %c0_i32_0 = arith.constant 0 : i32
    %c0_i32_1 = arith.constant 0 : i32
    return %c0_i32, %c0_i32_0 : i32, i32
  }
  func.func @transform_2(%arg0: i32) -> (i32, i32) {
    %c0_i32 = arith.constant 0 : i32
    %c0_i32_0 = arith.constant 0 : i32
    return %arg0, %c0_i32 : i32, i32
  }
  func.func @transform_3(%arg0: i32) -> (i32, i32, i32) {
    %c0_i32 = arith.constant 0 : i32
    %c0_i32_0 = arith.constant 0 : i32
    %c0_i32_1 = arith.constant 0 : i32
    return %arg0, %c0_i32, %c0_i32_0 : i32, i32, i32
  }
  func.func @transform_4(%arg0: i32) -> (i32, i32, i32) {
    %c0_i32 = arith.constant 0 : i32
    %c0_i32_0 = arith.constant 0 : i32
    %c0_i32_1 = arith.constant 0 : i32
    return %arg0, %c0_i32, %c0_i32_0 : i32, i32, i32
  }
}

module attributes {stable_mosaic.version = 11 : i64} {
  func.func @_bn_relu_conv3x3_stats_kernel(%arg0: i32, %arg1: memref<64x128xbf16, #tpu.memory_space<vmem>>, %arg2: memref<1x128xf32, #tpu.memory_space<vmem>>, %arg3: memref<1x128xf32, #tpu.memory_space<vmem>>, %arg4: memref<1x128xf32, #tpu.memory_space<vmem>>, %arg5: memref<1x128xf32, #tpu.memory_space<vmem>>, %arg6: memref<9x128x128xbf16, #tpu.memory_space<vmem>>, %arg7: memref<64x128xbf16, #tpu.memory_space<vmem>>, %arg8: memref<1x1x128xf32, #tpu.memory_space<vmem>>, %arg9: memref<1x1x128xf32, #tpu.memory_space<vmem>>, %arg10: memref<10x16x128xbf16, #tpu.memory_space<vmem>>, %arg11: memref<3x128x128xf32, #tpu.memory_space<vmem>>) attributes {dimension_semantics = [#tpu.dimension_semantics<parallel>], iteration_bounds = array<i64: 2>, scalar_prefetch = 0 : i64, scratch_operands = 2 : i64, tpu.core_type = #tpu.core_type<tc>, window_params = [{transform_indices = @transform_0, window_bounds = array<i64: 64, 128>}, {pipeline_mode = #tpu.pipeline_mode<synchronous>, transform_indices = @transform_1, window_bounds = array<i64: 1, 128>}, {pipeline_mode = #tpu.pipeline_mode<synchronous>, transform_indices = @transform_2, window_bounds = array<i64: 1, 128>}, {pipeline_mode = #tpu.pipeline_mode<synchronous>, transform_indices = @transform_3, window_bounds = array<i64: 1, 128>}, {pipeline_mode = #tpu.pipeline_mode<synchronous>, transform_indices = @transform_4, window_bounds = array<i64: 1, 128>}, {pipeline_mode = #tpu.pipeline_mode<synchronous>, transform_indices = @transform_5, window_bounds = array<i64: 9, 128, 128>}, {transform_indices = @transform_6, window_bounds = array<i64: 64, 128>}, {transform_indices = @transform_7, window_bounds = array<i64: 1, 1, 128>}, {transform_indices = @transform_8, window_bounds = array<i64: 1, 1, 128>}]} {
    %c0 = arith.constant 0 : index
    %c0_0 = arith.constant 0 : index
    %0 = vector.load %arg2[%c0, %c0_0] : memref<1x128xf32, #tpu.memory_space<vmem>>, vector<1x128xf32>
    %cst = arith.constant 7.812500e-03 : f32
    %1 = vector.broadcast %cst : f32 to vector<1x128xf32>
    %2 = arith.mulf %0, %1 : vector<1x128xf32>
    %c0_1 = arith.constant 0 : index
    %c0_2 = arith.constant 0 : index
    %3 = vector.load %arg3[%c0_1, %c0_2] : memref<1x128xf32, #tpu.memory_space<vmem>>, vector<1x128xf32>
    %cst_3 = arith.constant 7.812500e-03 : f32
    %4 = vector.broadcast %cst_3 : f32 to vector<1x128xf32>
    %5 = arith.mulf %3, %4 : vector<1x128xf32>
    %6 = arith.mulf %2, %2 : vector<1x128xf32>
    %7 = arith.subf %5, %6 : vector<1x128xf32>
    %cst_4 = arith.constant 0.000000e+00 : f32
    %8 = vector.broadcast %cst_4 : f32 to vector<1x128xf32>
    %9 = arith.maximumf %7, %8 : vector<1x128xf32>
    %cst_5 = arith.constant 9.99999974E-6 : f32
    %10 = vector.broadcast %cst_5 : f32 to vector<1x128xf32>
    %11 = arith.addf %9, %10 : vector<1x128xf32>
    %12 = math.rsqrt %11 : vector<1x128xf32>
    %c0_6 = arith.constant 0 : index
    %c0_7 = arith.constant 0 : index
    %13 = vector.load %arg4[%c0_6, %c0_7] : memref<1x128xf32, #tpu.memory_space<vmem>>, vector<1x128xf32>
    %14 = arith.mulf %12, %13 : vector<1x128xf32>
    %c0_8 = arith.constant 0 : index
    %c0_9 = arith.constant 0 : index
    %15 = vector.load %arg5[%c0_8, %c0_9] : memref<1x128xf32, #tpu.memory_space<vmem>>, vector<1x128xf32>
    %16 = arith.mulf %2, %14 : vector<1x128xf32>
    %17 = arith.subf %15, %16 : vector<1x128xf32>
    %cst_10 = arith.constant 0.000000e+00 : bf16
    %18 = vector.broadcast %cst_10 : bf16 to vector<10x16x128xbf16>
    %c0_11 = arith.constant 0 : index
    %c0_12 = arith.constant 0 : index
    %c0_13 = arith.constant 0 : index
    %19 = vector.load %arg10[%c0_11, %c0_12, %c0_13] : memref<10x16x128xbf16, #tpu.memory_space<vmem>>, vector<10x16x128xbf16>
    tpu.vector_store %arg10[%c0_11, %c0_12, %c0_13], %18 {strides = array<i32>} : memref<10x16x128xbf16, #tpu.memory_space<vmem>>, vector<10x16x128xbf16>,
    %cst_14 = arith.constant 0.000000e+00 : f32
    %20 = vector.broadcast %cst_14 : f32 to vector<3x128x128xf32>
    %c0_15 = arith.constant 0 : index
    %c0_16 = arith.constant 0 : index
    %c0_17 = arith.constant 0 : index
    %21 = vector.load %arg11[%c0_15, %c0_16, %c0_17] : memref<3x128x128xf32, #tpu.memory_space<vmem>>, vector<3x128x128xf32>
    tpu.vector_store %arg11[%c0_15, %c0_16, %c0_17], %20 {strides = array<i32>} : memref<3x128x128xf32, #tpu.memory_space<vmem>>, vector<3x128x128xf32>,
    %c0_18 = arith.constant 0 : index
    %c0_19 = arith.constant 0 : index
    %22 = vector.load %arg1[%c0_18, %c0_19] : memref<64x128xbf16, #tpu.memory_space<vmem>>, vector<64x128xbf16>
    %23 = arith.extf %22 : vector<64x128xbf16> to vector<64x128xf32>
    %24 = vector.broadcast %14 : vector<1x128xf32> to vector<64x128xf32>
    %25 = arith.mulf %23, %24 : vector<64x128xf32>
    %26 = vector.broadcast %17 : vector<1x128xf32> to vector<64x128xf32>
    %27 = arith.addf %25, %26 : vector<64x128xf32>
    %cst_20 = arith.constant 0.000000e+00 : f32
    %28 = vector.broadcast %cst_20 : f32 to vector<64x128xf32>
    %29 = arith.maximumf %27, %28 : vector<64x128xf32>
    %30 = vector.shape_cast %29 : vector<64x128xf32> to vector<8x8x128xf32>
    %31 = arith.truncf %30 : vector<8x8x128xf32> to vector<8x8x128xbf16>
    %c1 = arith.constant 1 : index
    %c1_21 = arith.constant 1 : index
    %c0_22 = arith.constant 0 : index
    %32 = vector.load %arg10[%c1, %c1_21, %c0_22] : memref<10x16x128xbf16, #tpu.memory_space<vmem>>, vector<8x8x128xbf16>
    tpu.vector_store %arg10[%c1, %c1_21, %c0_22], %31 {strides = array<i32>} : memref<10x16x128xbf16, #tpu.memory_space<vmem>>, vector<8x8x128xbf16>,
    %c0_23 = arith.constant 0 : index
    %c0_24 = arith.constant 0 : index
    %c0_25 = arith.constant 0 : index
    %33 = vector.load %arg10[%c0_23, %c0_24, %c0_25] : memref<10x16x128xbf16, #tpu.memory_space<vmem>>, vector<8x16x128xbf16>
    %34 = vector.shape_cast %33 : vector<8x16x128xbf16> to vector<128x128xbf16>
    %c0_26 = arith.constant 0 : index
    %c0_27 = arith.constant 0 : index
    %c0_28 = arith.constant 0 : index
    %35 = vector.load %arg11[%c0_26, %c0_27, %c0_28] : memref<3x128x128xf32, #tpu.memory_space<vmem>>, vector<1x128x128xf32>
    %36 = vector.shape_cast %35 : vector<1x128x128xf32> to vector<128x128xf32>
    %c0_29 = arith.constant 0 : index
    %c0_30 = arith.constant 0 : index
    %c0_31 = arith.constant 0 : index
    %37 = vector.load %arg6[%c0_29, %c0_30, %c0_31] : memref<9x128x128xbf16, #tpu.memory_space<vmem>>, vector<1x128x128xbf16>
    %38 = vector.shape_cast %37 : vector<1x128x128xbf16> to vector<128x128xbf16>
    %cst_32 = arith.constant dense<0.000000e+00> : vector<128x128xf32>
    %39 = tpu.matmul %34, %38, %cst_32 {dimension_numbers = #tpu.dot_dimension_numbers<[1], [0], [0], [1], [0, 0, 1, 1], [], []>} : vector<128x128xbf16>, vector<128x128xbf16>, vector<128x128xf32> -> vector<128x128xf32>
    %40 = arith.addf %36, %39 : vector<128x128xf32>
    %c0_33 = arith.constant 0 : index
    %c0_34 = arith.constant 0 : index
    %c0_35 = arith.constant 0 : index
    %41 = vector.load %arg11[%c0_33, %c0_34, %c0_35] : memref<3x128x128xf32, #tpu.memory_space<vmem>>, vector<1x128x128xf32>
    %42 = vector.shape_cast %41 : vector<1x128x128xf32> to vector<128x128xf32>
    %43 = vector.shape_cast %40 : vector<128x128xf32> to vector<1x128x128xf32>
    tpu.vector_store %arg11[%c0_33, %c0_34, %c0_35], %43 {strides = array<i32>} : memref<3x128x128xf32, #tpu.memory_space<vmem>>, vector<1x128x128xf32>,
    %c1_36 = arith.constant 1 : index
    %c0_37 = arith.constant 0 : index
    %c0_38 = arith.constant 0 : index
    %44 = vector.load %arg11[%c1_36, %c0_37, %c0_38] : memref<3x128x128xf32, #tpu.memory_space<vmem>>, vector<1x128x128xf32>
    %45 = vector.shape_cast %44 : vector<1x128x128xf32> to vector<128x128xf32>
    %c1_39 = arith.constant 1 : index
    %c0_40 = arith.constant 0 : index
    %c0_41 = arith.constant 0 : index
    %46 = vector.load %arg6[%c1_39, %c0_40, %c0_41] : memref<9x128x128xbf16, #tpu.memory_space<vmem>>, vector<1x128x128xbf16>
    %47 = vector.shape_cast %46 : vector<1x128x128xbf16> to vector<128x128xbf16>
    %cst_42 = arith.constant dense<0.000000e+00> : vector<128x128xf32>
    %48 = tpu.matmul %34, %47, %cst_42 {dimension_numbers = #tpu.dot_dimension_numbers<[1], [0], [0], [1], [0, 0, 1, 1], [], []>} : vector<128x128xbf16>, vector<128x128xbf16>, vector<128x128xf32> -> vector<128x128xf32>
    %49 = arith.addf %45, %48 : vector<128x128xf32>
    %c1_43 = arith.constant 1 : index
    %c0_44 = arith.constant 0 : index
    %c0_45 = arith.constant 0 : index
    %50 = vector.load %arg11[%c1_43, %c0_44, %c0_45] : memref<3x128x128xf32, #tpu.memory_space<vmem>>, vector<1x128x128xf32>
    %51 = vector.shape_cast %50 : vector<1x128x128xf32> to vector<128x128xf32>
    %52 = vector.shape_cast %49 : vector<128x128xf32> to vector<1x128x128xf32>
    tpu.vector_store %arg11[%c1_43, %c0_44, %c0_45], %52 {strides = array<i32>} : memref<3x128x128xf32, #tpu.memory_space<vmem>>, vector<1x128x128xf32>,
    %c2 = arith.constant 2 : index
    %c0_46 = arith.constant 0 : index
    %c0_47 = arith.constant 0 : index
    %53 = vector.load %arg11[%c2, %c0_46, %c0_47] : memref<3x128x128xf32, #tpu.memory_space<vmem>>, vector<1x128x128xf32>
    %54 = vector.shape_cast %53 : vector<1x128x128xf32> to vector<128x128xf32>
    %c2_48 = arith.constant 2 : index
    %c0_49 = arith.constant 0 : index
    %c0_50 = arith.constant 0 : index
    %55 = vector.load %arg6[%c2_48, %c0_49, %c0_50] : memref<9x128x128xbf16, #tpu.memory_space<vmem>>, vector<1x128x128xbf16>
    %56 = vector.shape_cast %55 : vector<1x128x128xbf16> to vector<128x128xbf16>
    %cst_51 = arith.constant dense<0.000000e+00> : vector<128x128xf32>
    %57 = tpu.matmul %34, %56, %cst_51 {dimension_numbers = #tpu.dot_dimension_numbers<[1], [0], [0], [1], [0, 0, 1, 1], [], []>} : vector<128x128xbf16>, vector<128x128xbf16>, vector<128x128xf32> -> vector<128x128xf32>
    %58 = arith.addf %54, %57 : vector<128x128xf32>
    %c2_52 = arith.constant 2 : index
    %c0_53 = arith.constant 0 : index
    %c0_54 = arith.constant 0 : index
    %59 = vector.load %arg11[%c2_52, %c0_53, %c0_54] : memref<3x128x128xf32, #tpu.memory_space<vmem>>, vector<1x128x128xf32>
    %60 = vector.shape_cast %59 : vector<1x128x128xf32> to vector<128x128xf32>
    %61 = vector.shape_cast %58 : vector<128x128xf32> to vector<1x128x128xf32>
    tpu.vector_store %arg11[%c2_52, %c0_53, %c0_54], %61 {strides = array<i32>} : memref<3x128x128xf32, #tpu.memory_space<vmem>>, vector<1x128x128xf32>,
    %c1_55 = arith.constant 1 : index
    %c0_56 = arith.constant 0 : index
    %c0_57 = arith.constant 0 : index
    %62 = vector.load %arg10[%c1_55, %c0_56, %c0_57] : memref<10x16x128xbf16, #tpu.memory_space<vmem>>, vector<8x16x128xbf16>
    %63 = vector.shape_cast %62 : vector<8x16x128xbf16> to vector<128x128xbf16>
    %c0_58 = arith.constant 0 : index
    %c0_59 = arith.constant 0 : index
    %c0_60 = arith.constant 0 : index
    %64 = vector.load %arg11[%c0_58, %c0_59, %c0_60] : memref<3x128x128xf32, #tpu.memory_space<vmem>>, vector<1x128x128xf32>
    %65 = vector.shape_cast %64 : vector<1x128x128xf32> to vector<128x128xf32>
    %c3 = arith.constant 3 : index
    %c0_61 = arith.constant 0 : index
    %c0_62 = arith.constant 0 : index
    %66 = vector.load %arg6[%c3, %c0_61, %c0_62] : memref<9x128x128xbf16, #tpu.memory_space<vmem>>, vector<1x128x128xbf16>
    %67 = vector.shape_cast %66 : vector<1x128x128xbf16> to vector<128x128xbf16>
    %cst_63 = arith.constant dense<0.000000e+00> : vector<128x128xf32>
    %68 = tpu.matmul %63, %67, %cst_63 {dimension_numbers = #tpu.dot_dimension_numbers<[1], [0], [0], [1], [0, 0, 1, 1], [], []>} : vector<128x128xbf16>, vector<128x128xbf16>, vector<128x128xf32> -> vector<128x128xf32>
    %69 = arith.addf %65, %68 : vector<128x128xf32>
    %c0_64 = arith.constant 0 : index
    %c0_65 = arith.constant 0 : index
    %c0_66 = arith.constant 0 : index
    %70 = vector.load %arg11[%c0_64, %c0_65, %c0_66] : memref<3x128x128xf32, #tpu.memory_space<vmem>>, vector<1x128x128xf32>
    %71 = vector.shape_cast %70 : vector<1x128x128xf32> to vector<128x128xf32>
    %72 = vector.shape_cast %69 : vector<128x128xf32> to vector<1x128x128xf32>
    tpu.vector_store %arg11[%c0_64, %c0_65, %c0_66], %72 {strides = array<i32>} : memref<3x128x128xf32, #tpu.memory_space<vmem>>, vector<1x128x128xf32>,
    %c1_67 = arith.constant 1 : index
    %c0_68 = arith.constant 0 : index
    %c0_69 = arith.constant 0 : index
    %73 = vector.load %arg11[%c1_67, %c0_68, %c0_69] : memref<3x128x128xf32, #tpu.memory_space<vmem>>, vector<1x128x128xf32>
    %74 = vector.shape_cast %73 : vector<1x128x128xf32> to vector<128x128xf32>
    %c4 = arith.constant 4 : index
    %c0_70 = arith.constant 0 : index
    %c0_71 = arith.constant 0 : index
    %75 = vector.load %arg6[%c4, %c0_70, %c0_71] : memref<9x128x128xbf16, #tpu.memory_space<vmem>>, vector<1x128x128xbf16>
    %76 = vector.shape_cast %75 : vector<1x128x128xbf16> to vector<128x128xbf16>
    %cst_72 = arith.constant dense<0.000000e+00> : vector<128x128xf32>
    %77 = tpu.matmul %63, %76, %cst_72 {dimension_numbers = #tpu.dot_dimension_numbers<[1], [0], [0], [1], [0, 0, 1, 1], [], []>} : vector<128x128xbf16>, vector<128x128xbf16>, vector<128x128xf32> -> vector<128x128xf32>
    %78 = arith.addf %74, %77 : vector<128x128xf32>
    %c1_73 = arith.constant 1 : index
    %c0_74 = arith.constant 0 : index
    %c0_75 = arith.constant 0 : index
    %79 = vector.load %arg11[%c1_73, %c0_74, %c0_75] : memref<3x128x128xf32, #tpu.memory_space<vmem>>, vector<1x128x128xf32>
    %80 = vector.shape_cast %79 : vector<1x128x128xf32> to vector<128x128xf32>
    %81 = vector.shape_cast %78 : vector<128x128xf32> to vector<1x128x128xf32>
    tpu.vector_store %arg11[%c1_73, %c0_74, %c0_75], %81 {strides = array<i32>} : memref<3x128x128xf32, #tpu.memory_space<vmem>>, vector<1x128x128xf32>,
    %c2_76 = arith.constant 2 : index
    %c0_77 = arith.constant 0 : index
    %c0_78 = arith.constant 0 : index
    %82 = vector.load %arg11[%c2_76, %c0_77, %c0_78] : memref<3x128x128xf32, #tpu.memory_space<vmem>>, vector<1x128x128xf32>
    %83 = vector.shape_cast %82 : vector<1x128x128xf32> to vector<128x128xf32>
    %c5 = arith.constant 5 : index
    %c0_79 = arith.constant 0 : index
    %c0_80 = arith.constant 0 : index
    %84 = vector.load %arg6[%c5, %c0_79, %c0_80] : memref<9x128x128xbf16, #tpu.memory_space<vmem>>, vector<1x128x128xbf16>
    %85 = vector.shape_cast %84 : vector<1x128x128xbf16> to vector<128x128xbf16>
    %cst_81 = arith.constant dense<0.000000e+00> : vector<128x128xf32>
    %86 = tpu.matmul %63, %85, %cst_81 {dimension_numbers = #tpu.dot_dimension_numbers<[1], [0], [0], [1], [0, 0, 1, 1], [], []>} : vector<128x128xbf16>, vector<128x128xbf16>, vector<128x128xf32> -> vector<128x128xf32>
    %87 = arith.addf %83, %86 : vector<128x128xf32>
    %c2_82 = arith.constant 2 : index
    %c0_83 = arith.constant 0 : index
    %c0_84 = arith.constant 0 : index
    %88 = vector.load %arg11[%c2_82, %c0_83, %c0_84] : memref<3x128x128xf32, #tpu.memory_space<vmem>>, vector<1x128x128xf32>
    %89 = vector.shape_cast %88 : vector<1x128x128xf32> to vector<128x128xf32>
    %90 = vector.shape_cast %87 : vector<128x128xf32> to vector<1x128x128xf32>
    tpu.vector_store %arg11[%c2_82, %c0_83, %c0_84], %90 {strides = array<i32>} : memref<3x128x128xf32, #tpu.memory_space<vmem>>, vector<1x128x128xf32>,
    %c2_85 = arith.constant 2 : index
    %c0_86 = arith.constant 0 : index
    %c0_87 = arith.constant 0 : index
    %91 = vector.load %arg10[%c2_85, %c0_86, %c0_87] : memref<10x16x128xbf16, #tpu.memory_space<vmem>>, vector<8x16x128xbf16>
    %92 = vector.shape_cast %91 : vector<8x16x128xbf16> to vector<128x128xbf16>
    %c0_88 = arith.constant 0 : index
    %c0_89 = arith.constant 0 : index
    %c0_90 = arith.constant 0 : index
    %93 = vector.load %arg11[%c0_88, %c0_89, %c0_90] : memref<3x128x128xf32, #tpu.memory_space<vmem>>, vector<1x128x128xf32>
    %94 = vector.shape_cast %93 : vector<1x128x128xf32> to vector<128x128xf32>
    %c6 = arith.constant 6 : index
    %c0_91 = arith.constant 0 : index
    %c0_92 = arith.constant 0 : index
    %95 = vector.load %arg6[%c6, %c0_91, %c0_92] : memref<9x128x128xbf16, #tpu.memory_space<vmem>>, vector<1x128x128xbf16>
    %96 = vector.shape_cast %95 : vector<1x128x128xbf16> to vector<128x128xbf16>
    %cst_93 = arith.constant dense<0.000000e+00> : vector<128x128xf32>
    %97 = tpu.matmul %92, %96, %cst_93 {dimension_numbers = #tpu.dot_dimension_numbers<[1], [0], [0], [1], [0, 0, 1, 1], [], []>} : vector<128x128xbf16>, vector<128x128xbf16>, vector<128x128xf32> -> vector<128x128xf32>
    %98 = arith.addf %94, %97 : vector<128x128xf32>
    %c0_94 = arith.constant 0 : index
    %c0_95 = arith.constant 0 : index
    %c0_96 = arith.constant 0 : index
    %99 = vector.load %arg11[%c0_94, %c0_95, %c0_96] : memref<3x128x128xf32, #tpu.memory_space<vmem>>, vector<1x128x128xf32>
    %100 = vector.shape_cast %99 : vector<1x128x128xf32> to vector<128x128xf32>
    %101 = vector.shape_cast %98 : vector<128x128xf32> to vector<1x128x128xf32>
    tpu.vector_store %arg11[%c0_94, %c0_95, %c0_96], %101 {strides = array<i32>} : memref<3x128x128xf32, #tpu.memory_space<vmem>>, vector<1x128x128xf32>,
    %c1_97 = arith.constant 1 : index
    %c0_98 = arith.constant 0 : index
    %c0_99 = arith.constant 0 : index
    %102 = vector.load %arg11[%c1_97, %c0_98, %c0_99] : memref<3x128x128xf32, #tpu.memory_space<vmem>>, vector<1x128x128xf32>
    %103 = vector.shape_cast %102 : vector<1x128x128xf32> to vector<128x128xf32>
    %c7 = arith.constant 7 : index
    %c0_100 = arith.constant 0 : index
    %c0_101 = arith.constant 0 : index
    %104 = vector.load %arg6[%c7, %c0_100, %c0_101] : memref<9x128x128xbf16, #tpu.memory_space<vmem>>, vector<1x128x128xbf16>
    %105 = vector.shape_cast %104 : vector<1x128x128xbf16> to vector<128x128xbf16>
    %cst_102 = arith.constant dense<0.000000e+00> : vector<128x128xf32>
    %106 = tpu.matmul %92, %105, %cst_102 {dimension_numbers = #tpu.dot_dimension_numbers<[1], [0], [0], [1], [0, 0, 1, 1], [], []>} : vector<128x128xbf16>, vector<128x128xbf16>, vector<128x128xf32> -> vector<128x128xf32>
    %107 = arith.addf %103, %106 : vector<128x128xf32>
    %c1_103 = arith.constant 1 : index
    %c0_104 = arith.constant 0 : index
    %c0_105 = arith.constant 0 : index
    %108 = vector.load %arg11[%c1_103, %c0_104, %c0_105] : memref<3x128x128xf32, #tpu.memory_space<vmem>>, vector<1x128x128xf32>
    %109 = vector.shape_cast %108 : vector<1x128x128xf32> to vector<128x128xf32>
    %110 = vector.shape_cast %107 : vector<128x128xf32> to vector<1x128x128xf32>
    tpu.vector_store %arg11[%c1_103, %c0_104, %c0_105], %110 {strides = array<i32>} : memref<3x128x128xf32, #tpu.memory_space<vmem>>, vector<1x128x128xf32>,
    %c2_106 = arith.constant 2 : index
    %c0_107 = arith.constant 0 : index
    %c0_108 = arith.constant 0 : index
    %111 = vector.load %arg11[%c2_106, %c0_107, %c0_108] : memref<3x128x128xf32, #tpu.memory_space<vmem>>, vector<1x128x128xf32>
    %112 = vector.shape_cast %111 : vector<1x128x128xf32> to vector<128x128xf32>
    %c8 = arith.constant 8 : index
    %c0_109 = arith.constant 0 : index
    %c0_110 = arith.constant 0 : index
    %113 = vector.load %arg6[%c8, %c0_109, %c0_110] : memref<9x128x128xbf16, #tpu.memory_space<vmem>>, vector<1x128x128xbf16>
    %114 = vector.shape_cast %113 : vector<1x128x128xbf16> to vector<128x128xbf16>
    %cst_111 = arith.constant dense<0.000000e+00> : vector<128x128xf32>
    %115 = tpu.matmul %92, %114, %cst_111 {dimension_numbers = #tpu.dot_dimension_numbers<[1], [0], [0], [1], [0, 0, 1, 1], [], []>} : vector<128x128xbf16>, vector<128x128xbf16>, vector<128x128xf32> -> vector<128x128xf32>
    %116 = arith.addf %112, %115 : vector<128x128xf32>
    %c2_112 = arith.constant 2 : index
    %c0_113 = arith.constant 0 : index
    %c0_114 = arith.constant 0 : index
    %117 = vector.load %arg11[%c2_112, %c0_113, %c0_114] : memref<3x128x128xf32, #tpu.memory_space<vmem>>, vector<1x128x128xf32>
    %118 = vector.shape_cast %117 : vector<1x128x128xf32> to vector<128x128xf32>
    %119 = vector.shape_cast %116 : vector<128x128xf32> to vector<1x128x128xf32>
    tpu.vector_store %arg11[%c2_112, %c0_113, %c0_114], %119 {strides = array<i32>} : memref<3x128x128xf32, #tpu.memory_space<vmem>>, vector<1x128x128xf32>,
    %c0_115 = arith.constant 0 : index
    %c0_116 = arith.constant 0 : index
    %c0_117 = arith.constant 0 : index
    %120 = vector.load %arg11[%c0_115, %c0_116, %c0_117] : memref<3x128x128xf32, #tpu.memory_space<vmem>>, vector<1x128x128xf32>
    %121 = vector.shape_cast %120 : vector<1x128x128xf32> to vector<128x128xf32>
    %122 = vector.shape_cast %121 : vector<128x128xf32> to vector<8x16x128xf32>
    %c1_118 = arith.constant 1 : index
    %c0_119 = arith.constant 0 : index
    %c0_120 = arith.constant 0 : index
    %123 = vector.load %arg11[%c1_118, %c0_119, %c0_120] : memref<3x128x128xf32, #tpu.memory_space<vmem>>, vector<1x128x128xf32>
    %124 = vector.shape_cast %123 : vector<1x128x128xf32> to vector<128x128xf32>
    %125 = vector.shape_cast %124 : vector<128x128xf32> to vector<8x16x128xf32>
    %c2_121 = arith.constant 2 : index
    %c0_122 = arith.constant 0 : index
    %c0_123 = arith.constant 0 : index
    %126 = vector.load %arg11[%c2_121, %c0_122, %c0_123] : memref<3x128x128xf32, #tpu.memory_space<vmem>>, vector<1x128x128xf32>
    %127 = vector.shape_cast %126 : vector<1x128x128xf32> to vector<128x128xf32>
    %128 = vector.shape_cast %127 : vector<128x128xf32> to vector<8x16x128xf32>
    %129 = vector.extract_strided_slice %122 {offsets = [0, 0, 0], sizes = [8, 8, 128], strides = [1, 1, 1]} : vector<8x16x128xf32> to vector<8x8x128xf32>
    %130 = vector.extract_strided_slice %125 {offsets = [0, 1, 0], sizes = [8, 8, 128], strides = [1, 1, 1]} : vector<8x16x128xf32> to vector<8x8x128xf32>
    %131 = arith.addf %129, %130 : vector<8x8x128xf32>
    %132 = vector.extract_strided_slice %128 {offsets = [0, 2, 0], sizes = [8, 8, 128], strides = [1, 1, 1]} : vector<8x16x128xf32> to vector<8x8x128xf32>
    %133 = arith.addf %131, %132 : vector<8x8x128xf32>
    %134 = vector.shape_cast %133 : vector<8x8x128xf32> to vector<64x128xf32>
    %135 = arith.truncf %134 : vector<64x128xf32> to vector<64x128xbf16>
    %c0_124 = arith.constant 0 : index
    %c0_125 = arith.constant 0 : index
    %136 = vector.load %arg7[%c0_124, %c0_125] : memref<64x128xbf16, #tpu.memory_space<vmem>>, vector<64x128xbf16>
    tpu.vector_store %arg7[%c0_124, %c0_125], %135 {strides = array<i32>} : memref<64x128xbf16, #tpu.memory_space<vmem>>, vector<64x128xbf16>,
    %cst_126 = arith.constant dense<0.000000e+00> : vector<128xf32>
    %137 = vector.multi_reduction <add>, %134, %cst_126 [0] : vector<64x128xf32> to vector<128xf32>
    %138 = vector.shape_cast %137 : vector<128xf32> to vector<1x128xf32>
    %139 = vector.shape_cast %138 : vector<1x128xf32> to vector<1x1x128xf32>
    %c0_127 = arith.constant 0 : index
    %c0_128 = arith.constant 0 : index
    %c0_129 = arith.constant 0 : index
    %140 = vector.load %arg8[%c0_127, %c0_128, %c0_129] : memref<1x1x128xf32, #tpu.memory_space<vmem>>, vector<1x1x128xf32>
    tpu.vector_store %arg8[%c0_127, %c0_128, %c0_129], %139 {strides = array<i32>} : memref<1x1x128xf32, #tpu.memory_space<vmem>>, vector<1x1x128xf32>,
    %141 = arith.mulf %134, %134 : vector<64x128xf32>
    %cst_130 = arith.constant dense<0.000000e+00> : vector<128xf32>
    %142 = vector.multi_reduction <add>, %141, %cst_130 [0] : vector<64x128xf32> to vector<128xf32>
    %143 = vector.shape_cast %142 : vector<128xf32> to vector<1x128xf32>
    %144 = vector.shape_cast %143 : vector<1x128xf32> to vector<1x1x128xf32>
    %c0_131 = arith.constant 0 : index
    %c0_132 = arith.constant 0 : index
    %c0_133 = arith.constant 0 : index
    %145 = vector.load %arg9[%c0_131, %c0_132, %c0_133] : memref<1x1x128xf32, #tpu.memory_space<vmem>>, vector<1x1x128xf32>
    tpu.vector_store %arg9[%c0_131, %c0_132, %c0_133], %144 {strides = array<i32>} : memref<1x1x128xf32, #tpu.memory_space<vmem>>, vector<1x1x128xf32>,
    return
  }
  func.func @transform_0(%arg0: i32) -> (i32, i32) {
    %c0_i32 = arith.constant 0 : i32
    %c0_i32_0 = arith.constant 0 : i32
    return %arg0, %c0_i32 : i32, i32
  }
  func.func @transform_1(%arg0: i32) -> (i32, i32) {
    %c0_i32 = arith.constant 0 : i32
    %c0_i32_0 = arith.constant 0 : i32
    %c0_i32_1 = arith.constant 0 : i32
    return %c0_i32, %c0_i32_0 : i32, i32
  }
  func.func @transform_2(%arg0: i32) -> (i32, i32) {
    %c0_i32 = arith.constant 0 : i32
    %c0_i32_0 = arith.constant 0 : i32
    %c0_i32_1 = arith.constant 0 : i32
    return %c0_i32, %c0_i32_0 : i32, i32
  }
  func.func @transform_3(%arg0: i32) -> (i32, i32) {
    %c0_i32 = arith.constant 0 : i32
    %c0_i32_0 = arith.constant 0 : i32
    %c0_i32_1 = arith.constant 0 : i32
    return %c0_i32, %c0_i32_0 : i32, i32
  }
  func.func @transform_4(%arg0: i32) -> (i32, i32) {
    %c0_i32 = arith.constant 0 : i32
    %c0_i32_0 = arith.constant 0 : i32
    %c0_i32_1 = arith.constant 0 : i32
    return %c0_i32, %c0_i32_0 : i32, i32
  }
  func.func @transform_5(%arg0: i32) -> (i32, i32, i32) {
    %c0_i32 = arith.constant 0 : i32
    %c0_i32_0 = arith.constant 0 : i32
    %c0_i32_1 = arith.constant 0 : i32
    %c0_i32_2 = arith.constant 0 : i32
    return %c0_i32, %c0_i32_0, %c0_i32_1 : i32, i32, i32
  }
  func.func @transform_6(%arg0: i32) -> (i32, i32) {
    %c0_i32 = arith.constant 0 : i32
    %c0_i32_0 = arith.constant 0 : i32
    return %arg0, %c0_i32 : i32, i32
  }
  func.func @transform_7(%arg0: i32) -> (i32, i32, i32) {
    %c0_i32 = arith.constant 0 : i32
    %c0_i32_0 = arith.constant 0 : i32
    %c0_i32_1 = arith.constant 0 : i32
    return %arg0, %c0_i32, %c0_i32_0 : i32, i32, i32
  }
  func.func @transform_8(%arg0: i32) -> (i32, i32, i32) {
    %c0_i32 = arith.constant 0 : i32
    %c0_i32_0 = arith.constant 0 : i32
    %c0_i32_1 = arith.constant 0 : i32
    return %arg0, %c0_i32, %c0_i32_0 : i32, i32, i32
  }
}

module attributes {stable_mosaic.version = 11 : i64} {
  func.func @_bn_add_relu_kernel(%arg0: i32, %arg1: memref<128x128xbf16, #tpu.memory_space<vmem>>, %arg2: memref<1x128xf32, #tpu.memory_space<vmem>>, %arg3: memref<1x128xf32, #tpu.memory_space<vmem>>, %arg4: memref<1x128xf32, #tpu.memory_space<vmem>>, %arg5: memref<1x128xf32, #tpu.memory_space<vmem>>, %arg6: memref<128x128xbf16, #tpu.memory_space<vmem>>, %arg7: memref<128x128xf32, #tpu.memory_space<vmem>>) attributes {dimension_semantics = [#tpu.dimension_semantics<parallel>], iteration_bounds = array<i64: 1>, scalar_prefetch = 0 : i64, scratch_operands = 0 : i64, tpu.core_type = #tpu.core_type<tc>, window_params = [{transform_indices = @transform_0, window_bounds = array<i64: 128, 128>}, {pipeline_mode = #tpu.pipeline_mode<synchronous>, transform_indices = @transform_1, window_bounds = array<i64: 1, 128>}, {pipeline_mode = #tpu.pipeline_mode<synchronous>, transform_indices = @transform_2, window_bounds = array<i64: 1, 128>}, {pipeline_mode = #tpu.pipeline_mode<synchronous>, transform_indices = @transform_3, window_bounds = array<i64: 1, 128>}, {pipeline_mode = #tpu.pipeline_mode<synchronous>, transform_indices = @transform_4, window_bounds = array<i64: 1, 128>}, {transform_indices = @transform_5, window_bounds = array<i64: 128, 128>}, {transform_indices = @transform_6, window_bounds = array<i64: 128, 128>}]} {
    %c0 = arith.constant 0 : index
    %c0_0 = arith.constant 0 : index
    %0 = vector.load %arg2[%c0, %c0_0] : memref<1x128xf32, #tpu.memory_space<vmem>>, vector<1x128xf32>
    %cst = arith.constant 7.812500e-03 : f32
    %1 = vector.broadcast %cst : f32 to vector<1x128xf32>
    %2 = arith.mulf %0, %1 : vector<1x128xf32>
    %c0_1 = arith.constant 0 : index
    %c0_2 = arith.constant 0 : index
    %3 = vector.load %arg3[%c0_1, %c0_2] : memref<1x128xf32, #tpu.memory_space<vmem>>, vector<1x128xf32>
    %cst_3 = arith.constant 7.812500e-03 : f32
    %4 = vector.broadcast %cst_3 : f32 to vector<1x128xf32>
    %5 = arith.mulf %3, %4 : vector<1x128xf32>
    %6 = arith.mulf %2, %2 : vector<1x128xf32>
    %7 = arith.subf %5, %6 : vector<1x128xf32>
    %cst_4 = arith.constant 0.000000e+00 : f32
    %8 = vector.broadcast %cst_4 : f32 to vector<1x128xf32>
    %9 = arith.maximumf %7, %8 : vector<1x128xf32>
    %cst_5 = arith.constant 9.99999974E-6 : f32
    %10 = vector.broadcast %cst_5 : f32 to vector<1x128xf32>
    %11 = arith.addf %9, %10 : vector<1x128xf32>
    %12 = math.rsqrt %11 : vector<1x128xf32>
    %c0_6 = arith.constant 0 : index
    %c0_7 = arith.constant 0 : index
    %13 = vector.load %arg4[%c0_6, %c0_7] : memref<1x128xf32, #tpu.memory_space<vmem>>, vector<1x128xf32>
    %14 = arith.mulf %12, %13 : vector<1x128xf32>
    %c0_8 = arith.constant 0 : index
    %c0_9 = arith.constant 0 : index
    %15 = vector.load %arg5[%c0_8, %c0_9] : memref<1x128xf32, #tpu.memory_space<vmem>>, vector<1x128xf32>
    %16 = arith.mulf %2, %14 : vector<1x128xf32>
    %17 = arith.subf %15, %16 : vector<1x128xf32>
    %c0_10 = arith.constant 0 : index
    %c0_11 = arith.constant 0 : index
    %18 = vector.load %arg1[%c0_10, %c0_11] : memref<128x128xbf16, #tpu.memory_space<vmem>>, vector<128x128xbf16>
    %19 = arith.extf %18 : vector<128x128xbf16> to vector<128x128xf32>
    %20 = vector.broadcast %14 : vector<1x128xf32> to vector<128x128xf32>
    %21 = arith.mulf %19, %20 : vector<128x128xf32>
    %22 = vector.broadcast %17 : vector<1x128xf32> to vector<128x128xf32>
    %23 = arith.addf %21, %22 : vector<128x128xf32>
    %c0_12 = arith.constant 0 : index
    %c0_13 = arith.constant 0 : index
    %24 = vector.load %arg6[%c0_12, %c0_13] : memref<128x128xbf16, #tpu.memory_space<vmem>>, vector<128x128xbf16>
    %25 = arith.extf %24 : vector<128x128xbf16> to vector<128x128xf32>
    %26 = arith.addf %23, %25 : vector<128x128xf32>
    %cst_14 = arith.constant 0.000000e+00 : f32
    %27 = vector.broadcast %cst_14 : f32 to vector<128x128xf32>
    %28 = arith.maximumf %26, %27 : vector<128x128xf32>
    %c0_15 = arith.constant 0 : index
    %c0_16 = arith.constant 0 : index
    %29 = vector.load %arg7[%c0_15, %c0_16] : memref<128x128xf32, #tpu.memory_space<vmem>>, vector<128x128xf32>
    tpu.vector_store %arg7[%c0_15, %c0_16], %28 {strides = array<i32>} : memref<128x128xf32, #tpu.memory_space<vmem>>, vector<128x128xf32>,
    return
  }
  func.func @transform_0(%arg0: i32) -> (i32, i32) {
    %c0_i32 = arith.constant 0 : i32
    %c0_i32_0 = arith.constant 0 : i32
    return %arg0, %c0_i32 : i32, i32
  }
  func.func @transform_1(%arg0: i32) -> (i32, i32) {
    %c0_i32 = arith.constant 0 : i32
    %c0_i32_0 = arith.constant 0 : i32
    %c0_i32_1 = arith.constant 0 : i32
    return %c0_i32, %c0_i32_0 : i32, i32
  }
  func.func @transform_2(%arg0: i32) -> (i32, i32) {
    %c0_i32 = arith.constant 0 : i32
    %c0_i32_0 = arith.constant 0 : i32
    %c0_i32_1 = arith.constant 0 : i32
    return %c0_i32, %c0_i32_0 : i32, i32
  }
  func.func @transform_3(%arg0: i32) -> (i32, i32) {
    %c0_i32 = arith.constant 0 : i32
    %c0_i32_0 = arith.constant 0 : i32
    %c0_i32_1 = arith.constant 0 : i32
    return %c0_i32, %c0_i32_0 : i32, i32
  }
  func.func @transform_4(%arg0: i32) -> (i32, i32) {
    %c0_i32 = arith.constant 0 : i32
    %c0_i32_0 = arith.constant 0 : i32
    %c0_i32_1 = arith.constant 0 : i32
    return %c0_i32, %c0_i32_0 : i32, i32
  }
  func.func @transform_5(%arg0: i32) -> (i32, i32) {
    %c0_i32 = arith.constant 0 : i32
    %c0_i32_0 = arith.constant 0 : i32
    return %arg0, %c0_i32 : i32, i32
  }
  func.func @transform_6(%arg0: i32) -> (i32, i32) {
    %c0_i32 = arith.constant 0 : i32
    %c0_i32_0 = arith.constant 0 : i32
    return %arg0, %c0_i32 : i32, i32
  }
}

module attributes {stable_mosaic.version = 11 : i64} {
  func.func @_bn_relu_conv1x1_stats_kernel(%arg0: i32, %arg1: memref<128x128xbf16, #tpu.memory_space<vmem>>, %arg2: memref<1x128xf32, #tpu.memory_space<vmem>>, %arg3: memref<1x128xf32, #tpu.memory_space<vmem>>, %arg4: memref<1x128xf32, #tpu.memory_space<vmem>>, %arg5: memref<1x128xf32, #tpu.memory_space<vmem>>, %arg6: memref<128x128xbf16, #tpu.memory_space<vmem>>, %arg7: memref<128x128xbf16, #tpu.memory_space<vmem>>, %arg8: memref<1x1x128xf32, #tpu.memory_space<vmem>>, %arg9: memref<1x1x128xf32, #tpu.memory_space<vmem>>) attributes {dimension_semantics = [#tpu.dimension_semantics<parallel>], iteration_bounds = array<i64: 1>, scalar_prefetch = 0 : i64, scratch_operands = 0 : i64, tpu.core_type = #tpu.core_type<tc>, window_params = [{transform_indices = @transform_0, window_bounds = array<i64: 128, 128>}, {pipeline_mode = #tpu.pipeline_mode<synchronous>, transform_indices = @transform_1, window_bounds = array<i64: 1, 128>}, {pipeline_mode = #tpu.pipeline_mode<synchronous>, transform_indices = @transform_2, window_bounds = array<i64: 1, 128>}, {pipeline_mode = #tpu.pipeline_mode<synchronous>, transform_indices = @transform_3, window_bounds = array<i64: 1, 128>}, {pipeline_mode = #tpu.pipeline_mode<synchronous>, transform_indices = @transform_4, window_bounds = array<i64: 1, 128>}, {pipeline_mode = #tpu.pipeline_mode<synchronous>, transform_indices = @transform_5, window_bounds = array<i64: 128, 128>}, {transform_indices = @transform_6, window_bounds = array<i64: 128, 128>}, {transform_indices = @transform_7, window_bounds = array<i64: 1, 1, 128>}, {transform_indices = @transform_8, window_bounds = array<i64: 1, 1, 128>}]} {
    %c0 = arith.constant 0 : index
    %c0_0 = arith.constant 0 : index
    %0 = vector.load %arg2[%c0, %c0_0] : memref<1x128xf32, #tpu.memory_space<vmem>>, vector<1x128xf32>
    %cst = arith.constant 7.812500e-03 : f32
    %1 = vector.broadcast %cst : f32 to vector<1x128xf32>
    %2 = arith.mulf %0, %1 : vector<1x128xf32>
    %c0_1 = arith.constant 0 : index
    %c0_2 = arith.constant 0 : index
    %3 = vector.load %arg3[%c0_1, %c0_2] : memref<1x128xf32, #tpu.memory_space<vmem>>, vector<1x128xf32>
    %cst_3 = arith.constant 7.812500e-03 : f32
    %4 = vector.broadcast %cst_3 : f32 to vector<1x128xf32>
    %5 = arith.mulf %3, %4 : vector<1x128xf32>
    %6 = arith.mulf %2, %2 : vector<1x128xf32>
    %7 = arith.subf %5, %6 : vector<1x128xf32>
    %cst_4 = arith.constant 0.000000e+00 : f32
    %8 = vector.broadcast %cst_4 : f32 to vector<1x128xf32>
    %9 = arith.maximumf %7, %8 : vector<1x128xf32>
    %cst_5 = arith.constant 9.99999974E-6 : f32
    %10 = vector.broadcast %cst_5 : f32 to vector<1x128xf32>
    %11 = arith.addf %9, %10 : vector<1x128xf32>
    %12 = math.rsqrt %11 : vector<1x128xf32>
    %c0_6 = arith.constant 0 : index
    %c0_7 = arith.constant 0 : index
    %13 = vector.load %arg4[%c0_6, %c0_7] : memref<1x128xf32, #tpu.memory_space<vmem>>, vector<1x128xf32>
    %14 = arith.mulf %12, %13 : vector<1x128xf32>
    %c0_8 = arith.constant 0 : index
    %c0_9 = arith.constant 0 : index
    %15 = vector.load %arg5[%c0_8, %c0_9] : memref<1x128xf32, #tpu.memory_space<vmem>>, vector<1x128xf32>
    %16 = arith.mulf %2, %14 : vector<1x128xf32>
    %17 = arith.subf %15, %16 : vector<1x128xf32>
    %c0_10 = arith.constant 0 : index
    %c0_11 = arith.constant 0 : index
    %18 = vector.load %arg1[%c0_10, %c0_11] : memref<128x128xbf16, #tpu.memory_space<vmem>>, vector<128x128xbf16>
    %19 = arith.extf %18 : vector<128x128xbf16> to vector<128x128xf32>
    %20 = vector.broadcast %14 : vector<1x128xf32> to vector<128x128xf32>
    %21 = arith.mulf %19, %20 : vector<128x128xf32>
    %22 = vector.broadcast %17 : vector<1x128xf32> to vector<128x128xf32>
    %23 = arith.addf %21, %22 : vector<128x128xf32>
    %cst_12 = arith.constant 0.000000e+00 : f32
    %24 = vector.broadcast %cst_12 : f32 to vector<128x128xf32>
    %25 = arith.maximumf %23, %24 : vector<128x128xf32>
    %26 = arith.truncf %25 : vector<128x128xf32> to vector<128x128xbf16>
    %c0_13 = arith.constant 0 : index
    %c0_14 = arith.constant 0 : index
    %27 = vector.load %arg6[%c0_13, %c0_14] : memref<128x128xbf16, #tpu.memory_space<vmem>>, vector<128x128xbf16>
    %cst_15 = arith.constant dense<0.000000e+00> : vector<128x128xf32>
    %28 = tpu.matmul %26, %27, %cst_15 {dimension_numbers = #tpu.dot_dimension_numbers<[1], [0], [0], [1], [0, 0, 1, 1], [], []>} : vector<128x128xbf16>, vector<128x128xbf16>, vector<128x128xf32> -> vector<128x128xf32>
    %29 = arith.truncf %28 : vector<128x128xf32> to vector<128x128xbf16>
    %c0_16 = arith.constant 0 : index
    %c0_17 = arith.constant 0 : index
    %30 = vector.load %arg7[%c0_16, %c0_17] : memref<128x128xbf16, #tpu.memory_space<vmem>>, vector<128x128xbf16>
    tpu.vector_store %arg7[%c0_16, %c0_17], %29 {strides = array<i32>} : memref<128x128xbf16, #tpu.memory_space<vmem>>, vector<128x128xbf16>,
    %c1_i32 = arith.constant 1 : i32
    %31 = arith.addi %arg0, %c1_i32 : i32
    %c128_i32 = arith.constant 128 : i32
    %32 = arith.muli %31, %c128_i32 : i32
    %c128_i32_18 = arith.constant 128 : i32
    %33 = arith.cmpi sle, %32, %c128_i32_18 : i32
    %34 = arith.extui %33 : i1 to i32
    %c0_i32 = arith.constant 0 : i32
    %35 = arith.cmpi ne, %34, %c0_i32 : i32
    scf.if %35 {
      %cst_20 = arith.constant dense<0.000000e+00> : vector<128xf32>
      %39 = vector.multi_reduction <add>, %28, %cst_20 [0] : vector<128x128xf32> to vector<128xf32>
      %40 = vector.shape_cast %39 : vector<128xf32> to vector<1x128xf32>
      %41 = vector.shape_cast %40 : vector<1x128xf32> to vector<1x1x128xf32>
      %c0_21 = arith.constant 0 : index
      %c0_22 = arith.constant 0 : index
      %c0_23 = arith.constant 0 : index
      %42 = vector.load %arg8[%c0_21, %c0_22, %c0_23] : memref<1x1x128xf32, #tpu.memory_space<vmem>>, vector<1x1x128xf32>
      tpu.vector_store %arg8[%c0_21, %c0_22, %c0_23], %41 {strides = array<i32>} : memref<1x1x128xf32, #tpu.memory_space<vmem>>, vector<1x1x128xf32>,
      %43 = arith.mulf %28, %28 : vector<128x128xf32>
      %cst_24 = arith.constant dense<0.000000e+00> : vector<128xf32>
      %44 = vector.multi_reduction <add>, %43, %cst_24 [0] : vector<128x128xf32> to vector<128xf32>
      %45 = vector.shape_cast %44 : vector<128xf32> to vector<1x128xf32>
      %46 = vector.shape_cast %45 : vector<1x128xf32> to vector<1x1x128xf32>
      %c0_25 = arith.constant 0 : index
      %c0_26 = arith.constant 0 : index
      %c0_27 = arith.constant 0 : index
      %47 = vector.load %arg9[%c0_25, %c0_26, %c0_27] : memref<1x1x128xf32, #tpu.memory_space<vmem>>, vector<1x1x128xf32>
      tpu.vector_store %arg9[%c0_25, %c0_26, %c0_27], %46 {strides = array<i32>} : memref<1x1x128xf32, #tpu.memory_space<vmem>>, vector<1x1x128xf32>,
    } else {
    }
    %true = arith.constant true
    %36 = arith.xori %33, %true : i1
    %37 = arith.extui %36 : i1 to i32
    %c0_i32_19 = arith.constant 0 : i32
    %38 = arith.cmpi ne, %37, %c0_i32_19 : i32
    scf.if %38 {
      %39 = tpu.iota {dimensions = array<i32: 0>} : vector<128x128xi32>
      %c128_i32_20 = arith.constant 128 : i32
      %40 = arith.muli %arg0, %c128_i32_20 : i32
      %c128_i32_21 = arith.constant 128 : i32
      %41 = arith.subi %c128_i32_21, %40 : i32
      %42 = vector.broadcast %41 : i32 to vector<128x128xi32>
      %43 = arith.cmpi slt, %39, %42 : vector<128x128xi32>
      %cst_22 = arith.constant 0.000000e+00 : f32
      %44 = vector.broadcast %cst_22 : f32 to vector<128x128xf32>
      %45 = arith.select %43, %28, %44 : vector<128x128xi1>, vector<128x128xf32>
      %cst_23 = arith.constant dense<0.000000e+00> : vector<128xf32>
      %46 = vector.multi_reduction <add>, %45, %cst_23 [0] : vector<128x128xf32> to vector<128xf32>
      %47 = vector.shape_cast %46 : vector<128xf32> to vector<1x128xf32>
      %48 = vector.shape_cast %47 : vector<1x128xf32> to vector<1x1x128xf32>
      %c0_24 = arith.constant 0 : index
      %c0_25 = arith.constant 0 : index
      %c0_26 = arith.constant 0 : index
      %49 = vector.load %arg8[%c0_24, %c0_25, %c0_26] : memref<1x1x128xf32, #tpu.memory_space<vmem>>, vector<1x1x128xf32>
      tpu.vector_store %arg8[%c0_24, %c0_25, %c0_26], %48 {strides = array<i32>} : memref<1x1x128xf32, #tpu.memory_space<vmem>>, vector<1x1x128xf32>,
      %50 = arith.mulf %45, %45 : vector<128x128xf32>
      %cst_27 = arith.constant dense<0.000000e+00> : vector<128xf32>
      %51 = vector.multi_reduction <add>, %50, %cst_27 [0] : vector<128x128xf32> to vector<128xf32>
      %52 = vector.shape_cast %51 : vector<128xf32> to vector<1x128xf32>
      %53 = vector.shape_cast %52 : vector<1x128xf32> to vector<1x1x128xf32>
      %c0_28 = arith.constant 0 : index
      %c0_29 = arith.constant 0 : index
      %c0_30 = arith.constant 0 : index
      %54 = vector.load %arg9[%c0_28, %c0_29, %c0_30] : memref<1x1x128xf32, #tpu.memory_space<vmem>>, vector<1x1x128xf32>
      tpu.vector_store %arg9[%c0_28, %c0_29, %c0_30], %53 {strides = array<i32>} : memref<1x1x128xf32, #tpu.memory_space<vmem>>, vector<1x1x128xf32>,
    } else {
    }
    return
  }
  func.func @transform_0(%arg0: i32) -> (i32, i32) {
    %c0_i32 = arith.constant 0 : i32
    %c0_i32_0 = arith.constant 0 : i32
    return %arg0, %c0_i32 : i32, i32
  }
  func.func @transform_1(%arg0: i32) -> (i32, i32) {
    %c0_i32 = arith.constant 0 : i32
    %c0_i32_0 = arith.constant 0 : i32
    %c0_i32_1 = arith.constant 0 : i32
    return %c0_i32, %c0_i32_0 : i32, i32
  }
  func.func @transform_2(%arg0: i32) -> (i32, i32) {
    %c0_i32 = arith.constant 0 : i32
    %c0_i32_0 = arith.constant 0 : i32
    %c0_i32_1 = arith.constant 0 : i32
    return %c0_i32, %c0_i32_0 : i32, i32
  }
  func.func @transform_3(%arg0: i32) -> (i32, i32) {
    %c0_i32 = arith.constant 0 : i32
    %c0_i32_0 = arith.constant 0 : i32
    %c0_i32_1 = arith.constant 0 : i32
    return %c0_i32, %c0_i32_0 : i32, i32
  }
  func.func @transform_4(%arg0: i32) -> (i32, i32) {
    %c0_i32 = arith.constant 0 : i32
    %c0_i32_0 = arith.constant 0 : i32
    %c0_i32_1 = arith.constant 0 : i32
    return %c0_i32, %c0_i32_0 : i32, i32
  }
  func.func @transform_5(%arg0: i32) -> (i32, i32) {
    %c0_i32 = arith.constant 0 : i32
    %c0_i32_0 = arith.constant 0 : i32
    %c0_i32_1 = arith.constant 0 : i32
    return %c0_i32, %c0_i32_0 : i32, i32
  }
  func.func @transform_6(%arg0: i32) -> (i32, i32) {
    %c0_i32 = arith.constant 0 : i32
    %c0_i32_0 = arith.constant 0 : i32
    return %arg0, %c0_i32 : i32, i32
  }
  func.func @transform_7(%arg0: i32) -> (i32, i32, i32) {
    %c0_i32 = arith.constant 0 : i32
    %c0_i32_0 = arith.constant 0 : i32
    %c0_i32_1 = arith.constant 0 : i32
    return %arg0, %c0_i32, %c0_i32_0 : i32, i32, i32
  }
  func.func @transform_8(%arg0: i32) -> (i32, i32, i32) {
    %c0_i32 = arith.constant 0 : i32
    %c0_i32_0 = arith.constant 0 : i32
    %c0_i32_1 = arith.constant 0 : i32
    return %arg0, %c0_i32, %c0_i32_0 : i32, i32, i32
  }
}

</mosaic_0001>

<llo_original>
// kernel: bottleneck_forward.7
$region0: #{bottleneck_forward.7}
  #allocation0 [shape = 'u32[]', space=smem, size = 0x4, offset = 0x4, fixed_abs, tag = 'smem constant byte address 0x4 - core index']
  #allocation1 [shape = 'u32[72,128]{1,0:T(1,128)}', space=vmem, size = 0x9000, scoped, tag = 'internal scratch']
  %s0 = inlined_call_operand.vmem [shape: bf16[128,128], index: 0, kind: input, shape index: {}]
  %s1 = inlined_call_operand.vmem [shape: f32[1,128], index: 1, kind: input, shape index: {}]
  %s2 = inlined_call_operand.vmem [shape: f32[1,128], index: 2, kind: input, shape index: {}]
  %s3 = inlined_call_operand.vmem [shape: f32[1,128], index: 3, kind: input, shape index: {}]
  %s4 = inlined_call_operand.vmem [shape: f32[1,128], index: 4, kind: input, shape index: {}]
  %s5 = inlined_call_operand.vmem [shape: bf16[128,128], index: 5, kind: input, shape index: {}]
  %s6 = inlined_call_operand.hbm [shape: f32[128,128], index: 6, kind: output, shape index: {}]
  %s7 = sld [smem:[#allocation0]]
  $region34: #{bottleneck_forward.7} parent=0
    _
  %s9 = ssub.s32 1, %s7
  %s10 = scalar_select 0, %s9, %s7
  $region1: #{bottleneck_forward.7} parent=0
    #allocation2 [shape = 'u8[65536]{0}', space=vmem, size = 0x10000, scoped, tag = 'output window, operand 0, single buffered']
    #allocation3 [shape = 's32[1]{0}', space=sflag, size = 0x4, scoped, tag = 'scoped memory for bottleneck_forward.7']
    %11 = vsyncpa [#allocation3], 0
    // Predicated region
    $region2: #{bottleneck_forward.7} parent=1 // pred_check
      _
    $region3: #{bottleneck_forward.7} parent=1 // pred_check_branch
      %13 = sbr.rel (0) target = $region5
    $region4: #{bottleneck_forward.7} parent=1 // pred_region
      _
    $region5: #{bottleneck_forward.7} parent=1 // pred_fallthru
      _
    // Predicated region
    $region6: #{bottleneck_forward.7} parent=1 // pred_check
      _
    $region7: #{bottleneck_forward.7} parent=1 // pred_check_branch
      %15 = sbr.rel (0) target = $region9
    $region8: #{bottleneck_forward.7} parent=1 // pred_region
      _
    $region9: #{bottleneck_forward.7} parent=1 // pred_fallthru
      _
    // Predicated region
    $region10: #{bottleneck_forward.7} parent=1 // pred_check
      _
    $region11: #{bottleneck_forward.7} parent=1 // pred_check_branch
      %17 = sbr.rel (0) target = $region13
    $region12: #{bottleneck_forward.7} parent=1 // pred_region
      _
    $region13: #{bottleneck_forward.7} parent=1 // pred_fallthru
      _
    // Predicated region
    $region14: #{bottleneck_forward.7} parent=1 // pred_check
      _
    $region15: #{bottleneck_forward.7} parent=1 // pred_check_branch
      %19 = sbr.rel (0) target = $region17
    $region16: #{bottleneck_forward.7} parent=1 // pred_region
      _
    $region17: #{bottleneck_forward.7} parent=1 // pred_fallthru
      _
    // Predicated region
    $region18: #{bottleneck_forward.7} parent=1 // pred_check
      _
    $region19: #{bottleneck_forward.7} parent=1 // pred_check_branch
      %21 = sbr.rel (0) target = $region21
    $region20: #{bottleneck_forward.7} parent=1 // pred_region
      _
    $region21: #{bottleneck_forward.7} parent=1 // pred_fallthru
      _
    // Predicated region
    $region22: #{bottleneck_forward.7} parent=1 // pred_check
      _
    $region23: #{bottleneck_forward.7} parent=1 // pred_check_branch
      %23 = sbr.rel (0) target = $region25
    $region24: #{bottleneck_forward.7} parent=1 // pred_region
      _
    $region25: #{bottleneck_forward.7} parent=1 // pred_fallthru
      _
    %v24 = vld [vmem:[%s1] sm:$0x1]
    %v25 = vmul.f32 %v24, 0.0078125
    %v26 = vld [vmem:[%s2] sm:$0x1]
    %v27 = vmul.f32 %v26, 0.0078125
    %v28 = vmul.f32 %v25, %v25
    %v29 = vsub.f32 %v27, %v28
    %v30 = vmax.f32 %v29, 0.0
    %v31 = vadd.f32 %v30, 1e-05
    %v32 = vrsqrt.pop %v31
    %v33 = vmul.f32 %v32, %v31
    %v34 = vmul.f32 %v33, %v32
    %v35 = vmul.f32 0.5, %v34
    %v36 = vsub.f32 1.5, %v35
    %v37 = vmul.f32 %v32, %v36
    %vm38 = vweird.f32 %v31
    %vm39 = vweird.f32 %v32
    %vm40 = vmor %vm38, %vm39
    %v41 = vsel %vm40, %v32, %v37
    %v42 = vld [vmem:[%s3] sm:$0x1]
    %v43 = vmul.f32 %v41, %v42
    %v44 = vld [vmem:[%s4] sm:$0x1]
    %v45 = vmul.f32 %v25, %v43
    %v46 = vsub.f32 %v44, %v45
    %v47 = vld [vmem:[%s0] sm:$0xf]
    %v48 = vld [vmem:[%s0 + $0x4] sm:$0xf]
    %v49 = vld [vmem:[%s0 + $0x8] sm:$0xf]
    %v50 = vld [vmem:[%s0 + $0xc] sm:$0xf]
    %v51 = vld [vmem:[%s0 + $0x10] sm:$0xf]
    %v52 = vld [vmem:[%s0 + $0x14] sm:$0xf]
    %v53 = vld [vmem:[%s0 + $0x18] sm:$0xf]
    %v54 = vld [vmem:[%s0 + $0x1c] sm:$0xf]
    %v55 = vld [vmem:[%s0 + $0x20] sm:$0xf]
    %v56 = vld [vmem:[%s0 + $0x24] sm:$0xf]
    %v57 = vld [vmem:[%s0 + $0x28] sm:$0xf]
    %v58 = vld [vmem:[%s0 + $0x2c] sm:$0xf]
    %v59 = vld [vmem:[%s0 + $0x30] sm:$0xf]
    %v60 = vld [vmem:[%s0 + $0x34] sm:$0xf]
    %v61 = vld [vmem:[%s0 + $0x38] sm:$0xf]
    %v62 = vld [vmem:[%s0 + $0x3c] sm:$0xf]
    %v63 = vunpack.c.l.bf16 %v47
    %v64 = vunpack.c.l.bf16 %v48
    %v65 = vunpack.c.l.bf16 %v49
    %v66 = vunpack.c.l.bf16 %v50
    %v67 = vunpack.c.l.bf16 %v51
    %v68 = vunpack.c.l.bf16 %v52
    %v69 = vunpack.c.l.bf16 %v53
    %v70 = vunpack.c.l.bf16 %v54
    %v71 = vunpack.c.l.bf16 %v55
    %v72 = vunpack.c.l.bf16 %v56
    %v73 = vunpack.c.l.bf16 %v57
    %v74 = vunpack.c.l.bf16 %v58
    %v75 = vunpack.c.l.bf16 %v59
    %v76 = vunpack.c.l.bf16 %v60
    %v77 = vunpack.c.l.bf16 %v61
    %v78 = vunpack.c.l.bf16 %v62
    %v80 = vperm.slane %v43, 0
    %v82 = vmul.f32 %v63, %v80
    %v83 = vmul.f32 %v64, %v80
    %v84 = vmul.f32 %v65, %v80
    %v85 = vmul.f32 %v66, %v80
    %v86 = vmul.f32 %v67, %v80
    %v87 = vmul.f32 %v68, %v80
    %v88 = vmul.f32 %v69, %v80
    %v89 = vmul.f32 %v70, %v80
    %v90 = vmul.f32 %v71, %v80
    %v91 = vmul.f32 %v72, %v80
    %v92 = vmul.f32 %v73, %v80
    %v93 = vmul.f32 %v74, %v80
    %v94 = vmul.f32 %v75, %v80
    %v95 = vmul.f32 %v76, %v80
    %v96 = vmul.f32 %v77, %v80
    %v97 = vmul.f32 %v78, %v80
    %v99 = vperm.slane %v46, 0
    %v101 = vadd.f32 %v82, %v99
    %v102 = vadd.f32 %v83, %v99
    %v103 = vadd.f32 %v84, %v99
    %v104 = vadd.f32 %v85, %v99
    %v105 = vadd.f32 %v86, %v99
    %v106 = vadd.f32 %v87, %v99
    %v107 = vadd.f32 %v88, %v99
    %v108 = vadd.f32 %v89, %v99
    %v109 = vadd.f32 %v90, %v99
    %v110 = vadd.f32 %v91, %v99
    %v111 = vadd.f32 %v92, %v99
    %v112 = vadd.f32 %v93, %v99
    %v113 = vadd.f32 %v94, %v99
    %v114 = vadd.f32 %v95, %v99
    %v115 = vadd.f32 %v96, %v99
    %v116 = vadd.f32 %v97, %v99
    %v117 = vld [vmem:[%s5] sm:$0xf]
    %v118 = vld [vmem:[%s5 + $0x4] sm:$0xf]
    %v119 = vld [vmem:[%s5 + $0x8] sm:$0xf]
    %v120 = vld [vmem:[%s5 + $0xc] sm:$0xf]
    %v121 = vld [vmem:[%s5 + $0x10] sm:$0xf]
    %v122 = vld [vmem:[%s5 + $0x14] sm:$0xf]
    %v123 = vld [vmem:[%s5 + $0x18] sm:$0xf]
    %v124 = vld [vmem:[%s5 + $0x1c] sm:$0xf]
    %v125 = vld [vmem:[%s5 + $0x20] sm:$0xf]
    %v126 = vld [vmem:[%s5 + $0x24] sm:$0xf]
    %v127 = vld [vmem:[%s5 + $0x28] sm:$0xf]
    %v128 = vld [vmem:[%s5 + $0x2c] sm:$0xf]
    %v129 = vld [vmem:[%s5 + $0x30] sm:$0xf]
    %v130 = vld [vmem:[%s5 + $0x34] sm:$0xf]
    %v131 = vld [vmem:[%s5 + $0x38] sm:$0xf]
    %v132 = vld [vmem:[%s5 + $0x3c] sm:$0xf]
    %v133 = vunpack.c.l.bf16 %v117
    %v134 = vunpack.c.l.bf16 %v118
    %v135 = vunpack.c.l.bf16 %v119
    %v136 = vunpack.c.l.bf16 %v120
    %v137 = vunpack.c.l.bf16 %v121
    %v138 = vunpack.c.l.bf16 %v122
    %v139 = vunpack.c.l.bf16 %v123
    %v140 = vunpack.c.l.bf16 %v124
    %v141 = vunpack.c.l.bf16 %v125
    %v142 = vunpack.c.l.bf16 %v126
    %v143 = vunpack.c.l.bf16 %v127
    %v144 = vunpack.c.l.bf16 %v128
    %v145 = vunpack.c.l.bf16 %v129
    %v146 = vunpack.c.l.bf16 %v130
    %v147 = vunpack.c.l.bf16 %v131
    %v148 = vunpack.c.l.bf16 %v132
    %v149 = vadd.f32 %v101, %v133
    %v150 = vadd.f32 %v102, %v134
    %v151 = vadd.f32 %v103, %v135
    %v152 = vadd.f32 %v104, %v136
    %v153 = vadd.f32 %v105, %v137
    %v154 = vadd.f32 %v106, %v138
    %v155 = vadd.f32 %v107, %v139
    %v156 = vadd.f32 %v108, %v140
    %v157 = vadd.f32 %v109, %v141
    %v158 = vadd.f32 %v110, %v142
    %v159 = vadd.f32 %v111, %v143
    %v160 = vadd.f32 %v112, %v144
    %v161 = vadd.f32 %v113, %v145
    %v162 = vadd.f32 %v114, %v146
    %v163 = vadd.f32 %v115, %v147
    %v164 = vadd.f32 %v116, %v148
    %v165 = vmax.f32 %v149, 0.0
    %v166 = vmax.f32 %v150, 0.0
    %v167 = vmax.f32 %v151, 0.0
    %v168 = vmax.f32 %v152, 0.0
    %v169 = vmax.f32 %v153, 0.0
    %v170 = vmax.f32 %v154, 0.0
    %v171 = vmax.f32 %v155, 0.0
    %v172 = vmax.f32 %v156, 0.0
    %v173 = vmax.f32 %v157, 0.0
    %v174 = vmax.f32 %v158, 0.0
    %v175 = vmax.f32 %v159, 0.0
    %v176 = vmax.f32 %v160, 0.0
    %v177 = vmax.f32 %v161, 0.0
    %v178 = vmax.f32 %v162, 0.0
    %v179 = vmax.f32 %v163, 0.0
    %v180 = vmax.f32 %v164, 0.0
    %181 = vst [vmem:[#allocation2] sm:$0xff] %v165
    %182 = vst [vmem:[#allocation2 + $0x8] sm:$0xff] %v166
    %183 = vst [vmem:[#allocation2 + $0x10] sm:$0xff] %v167
    %184 = vst [vmem:[#allocation2 + $0x18] sm:$0xff] %v168
    %185 = vst [vmem:[#allocation2 + $0x20] sm:$0xff] %v169
    %186 = vst [vmem:[#allocation2 + $0x28] sm:$0xff] %v170
    %187 = vst [vmem:[#allocation2 + $0x30] sm:$0xff] %v171
    %188 = vst [vmem:[#allocation2 + $0x38] sm:$0xff] %v172
    %189 = vst [vmem:[#allocation2 + $0x40] sm:$0xff] %v173
    %190 = vst [vmem:[#allocation2 + $0x48] sm:$0xff] %v174
    %191 = vst [vmem:[#allocation2 + $0x50] sm:$0xff] %v175
    %192 = vst [vmem:[#allocation2 + $0x58] sm:$0xff] %v176
    %193 = vst [vmem:[#allocation2 + $0x60] sm:$0xff] %v177
    %194 = vst [vmem:[#allocation2 + $0x68] sm:$0xff] %v178
    %195 = vst [vmem:[#allocation2 + $0x70] sm:$0xff] %v179
    %196 = vst [vmem:[#allocation2 + $0x78] sm:$0xff] %v180
    // Predicated region
    $region26: #{bottleneck_forward.7} parent=1 // pred_check
      _
    $region27: #{bottleneck_forward.7} parent=1 // pred_check_branch
      %198 = sbr.rel (0) target = $region29
    $region28: #{bottleneck_forward.7} parent=1 // pred_region
      %200 = vsyncadd [#allocation3], 0
      %s201 = sshll.u32 [#allocation2], 4
      %s202 = int_to_ptr.vmem [resolvable:$true] %s201
      %s203 = sshll.u32 %s6, 4
      %s204 = int_to_ptr.hbm [resolvable:$true] %s203
      %209 = dma.vmem_to_hbm [thread:$0]  %s202, 2048, %s204, [#allocation3], 128, 128, 8
    $region29: #{bottleneck_forward.7} parent=1 // pred_fallthru
      _
    // Predicated region
    $region30: #{bottleneck_forward.7} parent=1 // pred_check
      _
    $region31: #{bottleneck_forward.7} parent=1 // pred_check_branch
      %211 = sbr.rel (0) target = $region33
    $region32: #{bottleneck_forward.7} parent=1 // pred_region
      %213 = dma.done [#allocation3], 2048
    $region33: #{bottleneck_forward.7} parent=1 // pred_fallthru
      _
    %214 = vsyncpa [#allocation3], 1

// kernel: bottleneck_forward.4
$region0: #{bottleneck_forward.4}
  #allocation0 [shape = 'u32[]', space=smem, size = 0x4, offset = 0x4, fixed_abs, tag = 'smem constant byte address 0x4 - core index']
  #allocation1 [shape = 'u32[72,128]{1,0:T(1,128)}', space=vmem, size = 0x9000, scoped, tag = 'internal scratch']
  %s0 = inlined_call_operand.vmem [shape: bf16[128,128], index: 0, kind: input, shape index: {}]
  %s1 = inlined_call_operand.vmem [shape: bf16[128,128], index: 1, kind: input, shape index: {}]
  %s2 = inlined_call_operand.vmem [shape: bf16[128,128], index: 2, kind: output, shape index: {0}]
  %s3 = inlined_call_operand.vmem [shape: f32[1,1,128], index: 3, kind: output, shape index: {1}]
  %s4 = inlined_call_operand.vmem [shape: f32[1,1,128], index: 4, kind: output, shape index: {2}]
  %5 = xla_tuple %s2, %s3, %s4
  %s6 = sld [smem:[#allocation0]]
  $region42: #{bottleneck_forward.4} parent=0
    _
  %s8 = ssub.s32 1, %s6
  %s9 = scalar_select 0, %s8, %s6
  // Predicated region
  $region2: #{bottleneck_forward.4} parent=0 // pred_check
    _
  $region3: #{bottleneck_forward.4} parent=0 // pred_check_branch
    %11 = sbr.rel (0) target = $region5
  $region4: #{bottleneck_forward.4} parent=0 // pred_region
    _
  $region5: #{bottleneck_forward.4} parent=0 // pred_fallthru
    _
  // Predicated region
  $region6: #{bottleneck_forward.4} parent=0 // pred_check
    _
  $region7: #{bottleneck_forward.4} parent=0 // pred_check_branch
    %13 = sbr.rel (0) target = $region9
  $region8: #{bottleneck_forward.4} parent=0 // pred_region
    _
  $region9: #{bottleneck_forward.4} parent=0 // pred_fallthru
    _
  %v14 = vld [vmem:[%s0] sm:$0xf]
  %v15 = vld [vmem:[%s0 + $0x4] sm:$0xf]
  %v16 = vld [vmem:[%s0 + $0x8] sm:$0xf]
  %v17 = vld [vmem:[%s0 + $0xc] sm:$0xf]
  %v18 = vld [vmem:[%s0 + $0x10] sm:$0xf]
  %v19 = vld [vmem:[%s0 + $0x14] sm:$0xf]
  %v20 = vld [vmem:[%s0 + $0x18] sm:$0xf]
  %v21 = vld [vmem:[%s0 + $0x1c] sm:$0xf]
  %v22 = vld [vmem:[%s0 + $0x20] sm:$0xf]
  %v23 = vld [vmem:[%s0 + $0x24] sm:$0xf]
  %v24 = vld [vmem:[%s0 + $0x28] sm:$0xf]
  %v25 = vld [vmem:[%s0 + $0x2c] sm:$0xf]
  %v26 = vld [vmem:[%s0 + $0x30] sm:$0xf]
  %v27 = vld [vmem:[%s0 + $0x34] sm:$0xf]
  %v28 = vld [vmem:[%s0 + $0x38] sm:$0xf]
  %v29 = vld [vmem:[%s0 + $0x3c] sm:$0xf]
  %v30 = vld [vmem:[%s1] sm:$0xf]
  %v31 = vld [vmem:[%s1 + $0x4] sm:$0xf]
  %v32 = vld [vmem:[%s1 + $0x8] sm:$0xf]
  %v33 = vld [vmem:[%s1 + $0xc] sm:$0xf]
  %v34 = vld [vmem:[%s1 + $0x10] sm:$0xf]
  %v35 = vld [vmem:[%s1 + $0x14] sm:$0xf]
  %v36 = vld [vmem:[%s1 + $0x18] sm:$0xf]
  %v37 = vld [vmem:[%s1 + $0x1c] sm:$0xf]
  %v38 = vld [vmem:[%s1 + $0x20] sm:$0xf]
  %v39 = vld [vmem:[%s1 + $0x24] sm:$0xf]
  %v40 = vld [vmem:[%s1 + $0x28] sm:$0xf]
  %v41 = vld [vmem:[%s1 + $0x2c] sm:$0xf]
  %v42 = vld [vmem:[%s1 + $0x30] sm:$0xf]
  %v43 = vld [vmem:[%s1 + $0x34] sm:$0xf]
  %v44 = vld [vmem:[%s1 + $0x38] sm:$0xf]
  %v45 = vld [vmem:[%s1 + $0x3c] sm:$0xf]
  %v62 = vunpack.c.l.b16 %v14
  %v63 = vunpack.c.l.b16 %v15
  %v64 = vunpack.c.l.b16 %v16
  %v65 = vunpack.c.l.b16 %v17
  %v66 = vunpack.c.l.b16 %v18
  %v67 = vunpack.c.l.b16 %v19
  %v68 = vunpack.c.l.b16 %v20
  %v69 = vunpack.c.l.b16 %v21
  %v70 = vunpack.c.l.b16 %v22
  %v71 = vunpack.c.l.b16 %v23
  %v72 = vunpack.c.l.b16 %v24
  %v73 = vunpack.c.l.b16 %v25
  %v74 = vunpack.c.l.b16 %v26
  %v75 = vunpack.c.l.b16 %v27
  %v76 = vunpack.c.l.b16 %v28
  %v77 = vunpack.c.l.b16 %v29
  %v78 = vpack.c.b16 %v63, %v62
  %v79 = vpack.c.b16 %v65, %v64
  %v80 = vpack.c.b16 %v67, %v66
  %v81 = vpack.c.b16 %v69, %v68
  %v82 = vpack.c.b16 %v71, %v70
  %v83 = vpack.c.b16 %v73, %v72
  %v84 = vpack.c.b16 %v75, %v74
  %v85 = vpack.c.b16 %v77, %v76
  %v110 = vunpack.c.l.b16 %v30
  %v111 = vunpack.c.l.b16 %v31
  %v112 = vunpack.c.l.b16 %v32
  %v113 = vunpack.c.l.b16 %v33
  %v114 = vunpack.c.l.b16 %v34
  %v115 = vunpack.c.l.b16 %v35
  %v116 = vunpack.c.l.b16 %v36
  %v117 = vunpack.c.l.b16 %v37
  %v118 = vunpack.c.l.b16 %v38
  %v119 = vunpack.c.l.b16 %v39
  %v120 = vunpack.c.l.b16 %v40
  %v121 = vunpack.c.l.b16 %v41
  %v122 = vunpack.c.l.b16 %v42
  %v123 = vunpack.c.l.b16 %v43
  %v124 = vunpack.c.l.b16 %v44
  %v125 = vunpack.c.l.b16 %v45
  %v126 = vpack.c.b16 %v111, %v110
  %v127 = vpack.c.b16 %v113, %v112
  %v128 = vpack.c.b16 %v115, %v114
  %v129 = vpack.c.b16 %v117, %v116
  %v130 = vpack.c.b16 %v119, %v118
  %v131 = vpack.c.b16 %v121, %v120
  %v132 = vpack.c.b16 %v123, %v122
  %v133 = vpack.c.b16 %v125, %v124
  %142 = vmatpush.bf16.msra.mxu0 %v133
  %143 = vmatpush.bf16.msra.mxu0 %v132
  %144 = vmatpush.bf16.msra.mxu0 %v131
  %145 = vmatpush.bf16.msra.mxu0 %v130
  %146 = vmatpush.bf16.msra.mxu0 %v129
  %147 = vmatpush.bf16.msra.mxu0 %v128
  %148 = vmatpush.bf16.msra.mxu0 %v127
  %149 = vmatpush.bf16.msra.mxu0 %v126
  %150 = vmatmul.bf16.gmra.mxu0 %v78
  %v151 = vpop.f32.mrf.mxu0
  %v152 = vadd.f32 0.0, %v151
  %v153 = vpop.f32.mrf.mxu0
  %v154 = vadd.f32 0.0, %v153
  %155 = vmatmul.bf16.gmra.mxu0 %v79
  %v156 = vpop.f32.mrf.mxu0
  %v157 = vadd.f32 0.0, %v156
  %v158 = vpop.f32.mrf.mxu0
  %v159 = vadd.f32 0.0, %v158
  %160 = vmatmul.bf16.gmra.mxu0 %v80
  %v161 = vpop.f32.mrf.mxu0
  %v162 = vadd.f32 0.0, %v161
  %v163 = vpop.f32.mrf.mxu0
  %v164 = vadd.f32 0.0, %v163
  %165 = vmatmul.bf16.gmra.mxu0 %v81
  %v166 = vpop.f32.mrf.mxu0
  %v167 = vadd.f32 0.0, %v166
  %v168 = vpop.f32.mrf.mxu0
  %v169 = vadd.f32 0.0, %v168
  %170 = vmatmul.bf16.gmra.mxu0 %v82
  %v171 = vpop.f32.mrf.mxu0
  %v172 = vadd.f32 0.0, %v171
  %v173 = vpop.f32.mrf.mxu0
  %v174 = vadd.f32 0.0, %v173
  %175 = vmatmul.bf16.gmra.mxu0 %v83
  %v176 = vpop.f32.mrf.mxu0
  %v177 = vadd.f32 0.0, %v176
  %v178 = vpop.f32.mrf.mxu0
  %v179 = vadd.f32 0.0, %v178
  %180 = vmatmul.bf16.gmra.mxu0 %v84
  %v181 = vpop.f32.mrf.mxu0
  %v182 = vadd.f32 0.0, %v181
  %v183 = vpop.f32.mrf.mxu0
  %v184 = vadd.f32 0.0, %v183
  %185 = vmatmul.bf16.gmra.mxu0 %v85
  %v186 = vpop.f32.mrf.mxu0
  %v187 = vadd.f32 0.0, %v186
  %v188 = vpop.f32.mrf.mxu0
  %v189 = vadd.f32 0.0, %v188
  %190 = vdwg.mxu0
  %v191 = vpack.c.bf16 %v152, %v152
  %v192 = vpack.c.bf16 %v154, %v154
  %v193 = vpack.c.bf16 %v157, %v157
  %v194 = vpack.c.bf16 %v159, %v159
  %v195 = vpack.c.bf16 %v162, %v162
  %v196 = vpack.c.bf16 %v164, %v164
  %v197 = vpack.c.bf16 %v167, %v167
  %v198 = vpack.c.bf16 %v169, %v169
  %v199 = vpack.c.bf16 %v172, %v172
  %v200 = vpack.c.bf16 %v174, %v174
  %v201 = vpack.c.bf16 %v177, %v177
  %v202 = vpack.c.bf16 %v179, %v179
  %v203 = vpack.c.bf16 %v182, %v182
  %v204 = vpack.c.bf16 %v184, %v184
  %v205 = vpack.c.bf16 %v187, %v187
  %v206 = vpack.c.bf16 %v189, %v189
  %207 = vst [vmem:[%s2] sm:$0xf] %v191
  %208 = vst [vmem:[%s2 + $0x4] sm:$0xf] %v192
  %209 = vst [vmem:[%s2 + $0x8] sm:$0xf] %v193
  %210 = vst [vmem:[%s2 + $0xc] sm:$0xf] %v194
  %211 = vst [vmem:[%s2 + $0x10] sm:$0xf] %v195
  %212 = vst [vmem:[%s2 + $0x14] sm:$0xf] %v196
  %213 = vst [vmem:[%s2 + $0x18] sm:$0xf] %v197
  %214 = vst [vmem:[%s2 + $0x1c] sm:$0xf] %v198
  %215 = vst [vmem:[%s2 + $0x20] sm:$0xf] %v199
  %216 = vst [vmem:[%s2 + $0x24] sm:$0xf] %v200
  %217 = vst [vmem:[%s2 + $0x28] sm:$0xf] %v201
  %218 = vst [vmem:[%s2 + $0x2c] sm:$0xf] %v202
  %219 = vst [vmem:[%s2 + $0x30] sm:$0xf] %v203
  %220 = vst [vmem:[%s2 + $0x34] sm:$0xf] %v204
  %221 = vst [vmem:[%s2 + $0x38] sm:$0xf] %v205
  %222 = vst [vmem:[%s2 + $0x3c] sm:$0xf] %v206
  %s223 = sadd.s32 0, 1
  %s224 = smul.u32 %s223, 128
  %p225 = scmp.le.s32.totalorder %s224, 128
  // Predicated region
  $region10: #{bottleneck_forward.4} parent=0 // pred_check
    %p226 = pneg %p225
  $region11: #{bottleneck_forward.4} parent=0 // pred_check_branch
    %228 = sbr.rel (%p226) target = $region13
  $region12: #{bottleneck_forward.4} parent=0 // pred_region
    %v229 = vadd.f32 %v152, %v154
    %v230 = vadd.f32 %v229, %v157
    %v231 = vadd.f32 %v230, %v159
    %v232 = vadd.f32 %v231, %v162
    %v233 = vadd.f32 %v232, %v164
    %v234 = vadd.f32 %v233, %v167
    %v235 = vadd.f32 %v234, %v169
    %v236 = vadd.f32 %v235, %v172
    %v237 = vadd.f32 %v236, %v174
    %v238 = vadd.f32 %v237, %v177
    %v239 = vadd.f32 %v238, %v179
    %v240 = vadd.f32 %v239, %v182
    %v241 = vadd.f32 %v240, %v184
    %v242 = vadd.f32 %v241, %v187
    %v243 = vadd.f32 %v242, %v189
    %v244 = vrot.slane %v243, 4
    %v245 = vadd.f32 %v243, %v244
    %v246 = vrot.slane %v245, 2
    %v247 = vadd.f32 %v245, %v246
    %v248 = vrot.slane %v247, 1
    %v249 = vadd.f32 %v247, %v248
    %250 = vst [vmem:[%s3] sm:$0x1] %v249
    %v251 = vmul.f32 %v152, %v152
    %v252 = vmul.f32 %v154, %v154
    %v253 = vmul.f32 %v157, %v157
    %v254 = vmul.f32 %v159, %v159
    %v255 = vmul.f32 %v162, %v162
    %v256 = vmul.f32 %v164, %v164
    %v257 = vmul.f32 %v167, %v167
    %v258 = vmul.f32 %v169, %v169
    %v259 = vmul.f32 %v172, %v172
    %v260 = vmul.f32 %v174, %v174
    %v261 = vmul.f32 %v177, %v177
    %v262 = vmul.f32 %v179, %v179
    %v263 = vmul.f32 %v182, %v182
    %v264 = vmul.f32 %v184, %v184
    %v265 = vmul.f32 %v187, %v187
    %v266 = vmul.f32 %v189, %v189
    %v267 = vadd.f32 %v251, %v252
    %v268 = vadd.f32 %v267, %v253
    %v269 = vadd.f32 %v268, %v254
    %v270 = vadd.f32 %v269, %v255
    %v271 = vadd.f32 %v270, %v256
    %v272 = vadd.f32 %v271, %v257
    %v273 = vadd.f32 %v272, %v258
    %v274 = vadd.f32 %v273, %v259
    %v275 = vadd.f32 %v274, %v260
    %v276 = vadd.f32 %v275, %v261
    %v277 = vadd.f32 %v276, %v262
    %v278 = vadd.f32 %v277, %v263
    %v279 = vadd.f32 %v278, %v264
    %v280 = vadd.f32 %v279, %v265
    %v281 = vadd.f32 %v280, %v266
    %v282 = vrot.slane %v281, 4
    %v283 = vadd.f32 %v281, %v282
    %v284 = vrot.slane %v283, 2
    %v285 = vadd.f32 %v283, %v284
    %v286 = vrot.slane %v285, 1
    %v287 = vadd.f32 %v285, %v286
    %288 = vst [vmem:[%s4] sm:$0x1] %v287
  $region13: #{bottleneck_forward.4} parent=0 // pred_fallthru
    _
  %p289 = scmp.gt.s32.totalorder %s224, 128
  // Predicated region
  $region14: #{bottleneck_forward.4} parent=0 // pred_check
    %p290 = pneg %p289
  $region15: #{bottleneck_forward.4} parent=0 // pred_check_branch
    %292 = sbr.rel (%p290) target = $region17
  $region16: #{bottleneck_forward.4} parent=0 // pred_region
    %v293 = vlaneseq
    %v294 = vshrl.u32 %v293, 7
    %v295 = vadd.s32 %v294, 8
    %v296 = vadd.s32 %v294, 16
    %v297 = vadd.s32 %v294, 24
    %v298 = vadd.s32 %v294, 32
    %v299 = vadd.s32 %v294, 40
    %v300 = vadd.s32 %v294, 48
    %v301 = vadd.s32 %v294, 56
    %v302 = vadd.s32 %v294, 64
    %v303 = vadd.s32 %v294, 72
    %v304 = vadd.s32 %v294, 80
    %v305 = vadd.s32 %v294, 88
    %v306 = vadd.s32 %v294, 96
    %v307 = vadd.s32 %v294, 104
    %v308 = vadd.s32 %v294, 112
    %v309 = vadd.s32 %v294, 120
    %s310 = smul.u32 0, 128
    %s311 = ssub.s32 128, %s310
    %v312 = vstv %s311
    %vm313 = vcmp.lt.s32.totalorder %v294, %v312
    %vm314 = vcmp.lt.s32.totalorder %v295, %v312
    %vm315 = vcmp.lt.s32.totalorder %v296, %v312
    %vm316 = vcmp.lt.s32.totalorder %v297, %v312
    %vm317 = vcmp.lt.s32.totalorder %v298, %v312
    %vm318 = vcmp.lt.s32.totalorder %v299, %v312
    %vm319 = vcmp.lt.s32.totalorder %v300, %v312
    %vm320 = vcmp.lt.s32.totalorder %v301, %v312
    %vm321 = vcmp.lt.s32.totalorder %v302, %v312
    %vm322 = vcmp.lt.s32.totalorder %v303, %v312
    %vm323 = vcmp.lt.s32.totalorder %v304, %v312
    %vm324 = vcmp.lt.s32.totalorder %v305, %v312
    %vm325 = vcmp.lt.s32.totalorder %v306, %v312
    %vm326 = vcmp.lt.s32.totalorder %v307, %v312
    %vm327 = vcmp.lt.s32.totalorder %v308, %v312
    %vm328 = vcmp.lt.s32.totalorder %v309, %v312
    %v329 = vsel %vm313, %v152, 0.0
    %v330 = vsel %vm314, %v154, 0.0
    %v331 = vsel %vm315, %v157, 0.0
    %v332 = vsel %vm316, %v159, 0.0
    %v333 = vsel %vm317, %v162, 0.0
    %v334 = vsel %vm318, %v164, 0.0
    %v335 = vsel %vm319, %v167, 0.0
    %v336 = vsel %vm320, %v169, 0.0
    %v337 = vsel %vm321, %v172, 0.0
    %v338 = vsel %vm322, %v174, 0.0
    %v339 = vsel %vm323, %v177, 0.0
    %v340 = vsel %vm324, %v179, 0.0
    %v341 = vsel %vm325, %v182, 0.0
    %v342 = vsel %vm326, %v184, 0.0
    %v343 = vsel %vm327, %v187, 0.0
    %v344 = vsel %vm328, %v189, 0.0
    %v345 = vadd.f32 %v329, %v330
    %v346 = vadd.f32 %v345, %v331
    %v347 = vadd.f32 %v346, %v332
    %v348 = vadd.f32 %v347, %v333
    %v349 = vadd.f32 %v348, %v334
    %v350 = vadd.f32 %v349, %v335
    %v351 = vadd.f32 %v350, %v336
    %v352 = vadd.f32 %v351, %v337
    %v353 = vadd.f32 %v352, %v338
    %v354 = vadd.f32 %v353, %v339
    %v355 = vadd.f32 %v354, %v340
    %v356 = vadd.f32 %v355, %v341
    %v357 = vadd.f32 %v356, %v342
    %v358 = vadd.f32 %v357, %v343
    %v359 = vadd.f32 %v358, %v344
    %v360 = vrot.slane %v359, 4
    %v361 = vadd.f32 %v359, %v360
    %v362 = vrot.slane %v361, 2
    %v363 = vadd.f32 %v361, %v362
    %v364 = vrot.slane %v363, 1
    %v365 = vadd.f32 %v363, %v364
    %366 = vst [vmem:[%s3] sm:$0x1] %v365
    %v367 = vmul.f32 %v329, %v329
    %v368 = vmul.f32 %v330, %v330
    %v369 = vmul.f32 %v331, %v331
    %v370 = vmul.f32 %v332, %v332
    %v371 = vmul.f32 %v333, %v333
    %v372 = vmul.f32 %v334, %v334
    %v373 = vmul.f32 %v335, %v335
    %v374 = vmul.f32 %v336, %v336
    %v375 = vmul.f32 %v337, %v337
    %v376 = vmul.f32 %v338, %v338
    %v377 = vmul.f32 %v339, %v339
    %v378 = vmul.f32 %v340, %v340
    %v379 = vmul.f32 %v341, %v341
    %v380 = vmul.f32 %v342, %v342
    %v381 = vmul.f32 %v343, %v343
    %v382 = vmul.f32 %v344, %v344
    %v383 = vadd.f32 %v367, %v368
    %v384 = vadd.f32 %v383, %v369
    %v385 = vadd.f32 %v384, %v370
    %v386 = vadd.f32 %v385, %v371
    %v387 = vadd.f32 %v386, %v372
    %v388 = vadd.f32 %v387, %v373
    %v389 = vadd.f32 %v388, %v374
    %v390 = vadd.f32 %v389, %v375
    %v391 = vadd.f32 %v390, %v376
    %v392 = vadd.f32 %v391, %v377
    %v393 = vadd.f32 %v392, %v378
    %v394 = vadd.f32 %v393, %v379
    %v395 = vadd.f32 %v394, %v380
    %v396 = vadd.f32 %v395, %v381
    %v397 = vadd.f32 %v396, %v382
    %v398 = vrot.slane %v397, 4
    %v399 = vadd.f32 %v397, %v398
    %v400 = vrot.slane %v399, 2
    %v401 = vadd.f32 %v399, %v400
    %v402 = vrot.slane %v401, 1
    %v403 = vadd.f32 %v401, %v402
    %404 = vst [vmem:[%s4] sm:$0x1] %v403
  $region17: #{bottleneck_forward.4} parent=0 // pred_fallthru
    _
  // Predicated region
  $region18: #{bottleneck_forward.4} parent=0 // pred_check
    _
  $region19: #{bottleneck_forward.4} parent=0 // pred_check_branch
    %406 = sbr.rel (0) target = $region21
  $region20: #{bottleneck_forward.4} parent=0 // pred_region
    _
  $region21: #{bottleneck_forward.4} parent=0 // pred_fallthru
    _
  // Predicated region
  $region22: #{bottleneck_forward.4} parent=0 // pred_check
    _
  $region23: #{bottleneck_forward.4} parent=0 // pred_check_branch
    %408 = sbr.rel (0) target = $region25
  $region24: #{bottleneck_forward.4} parent=0 // pred_region
    _
  $region25: #{bottleneck_forward.4} parent=0 // pred_fallthru
    _
  // Predicated region
  $region26: #{bottleneck_forward.4} parent=0 // pred_check
    _
  $region27: #{bottleneck_forward.4} parent=0 // pred_check_branch
    %410 = sbr.rel (0) target = $region29
  $region28: #{bottleneck_forward.4} parent=0 // pred_region
    _
  $region29: #{bottleneck_forward.4} parent=0 // pred_fallthru
    _
  // Predicated region
  $region30: #{bottleneck_forward.4} parent=0 // pred_check
    _
  $region31: #{bottleneck_forward.4} parent=0 // pred_check_branch
    %412 = sbr.rel (0) target = $region33
  $region32: #{bottleneck_forward.4} parent=0 // pred_region
    _
  $region33: #{bottleneck_forward.4} parent=0 // pred_fallthru
    _
  // Predicated region
  $region34: #{bottleneck_forward.4} parent=0 // pred_check
    _
  $region35: #{bottleneck_forward.4} parent=0 // pred_check_branch
    %414 = sbr.rel (0) target = $region37
  $region36: #{bottleneck_forward.4} parent=0 // pred_region
    _
  $region37: #{bottleneck_forward.4} parent=0 // pred_fallthru
    _
  // Predicated region
  $region38: #{bottleneck_forward.4} parent=0 // pred_check
    _
  $region39: #{bottleneck_forward.4} parent=0 // pred_check_branch
    %416 = sbr.rel (0) target = $region41
  $region40: #{bottleneck_forward.4} parent=0 // pred_region
    _
  $region41: #{bottleneck_forward.4} parent=0 // pred_fallthru
    _

// kernel: bottleneck_forward.6
$region0: #{bottleneck_forward.6}
  #allocation0 [shape = 'u32[]', space=smem, size = 0x4, offset = 0x4, fixed_abs, tag = 'smem constant byte address 0x4 - core index']
  #allocation1 [shape = 'u32[72,128]{1,0:T(1,128)}', space=vmem, size = 0x9000, scoped, tag = 'internal scratch']
  %s0 = inlined_call_operand.vmem [shape: bf16[128,128], index: 0, kind: input, shape index: {}]
  %s1 = inlined_call_operand.vmem [shape: f32[1,128], index: 1, kind: input, shape index: {}]
  %s2 = inlined_call_operand.vmem [shape: f32[1,128], index: 2, kind: input, shape index: {}]
  %s3 = inlined_call_operand.vmem [shape: f32[1,128], index: 3, kind: input, shape index: {}]
  %s4 = inlined_call_operand.vmem [shape: f32[1,128], index: 4, kind: input, shape index: {}]
  %s5 = inlined_call_operand.vmem [shape: bf16[128,128], index: 5, kind: input, shape index: {}]
  %s6 = inlined_call_operand.vmem [shape: bf16[128,128], index: 6, kind: output, shape index: {0}]
  %s7 = inlined_call_operand.vmem [shape: f32[1,1,128], index: 7, kind: output, shape index: {1}]
  %s8 = inlined_call_operand.vmem [shape: f32[1,1,128], index: 8, kind: output, shape index: {2}]
  %9 = xla_tuple %s6, %s7, %s8
  %s10 = sld [smem:[#allocation0]]
  $region58: #{bottleneck_forward.6} parent=0
    _
  %s12 = ssub.s32 1, %s10
  %s13 = scalar_select 0, %s12, %s10
  // Predicated region
  $region2: #{bottleneck_forward.6} parent=0 // pred_check
    _
  $region3: #{bottleneck_forward.6} parent=0 // pred_check_branch
    %15 = sbr.rel (0) target = $region5
  $region4: #{bottleneck_forward.6} parent=0 // pred_region
    _
  $region5: #{bottleneck_forward.6} parent=0 // pred_fallthru
    _
  // Predicated region
  $region6: #{bottleneck_forward.6} parent=0 // pred_check
    _
  $region7: #{bottleneck_forward.6} parent=0 // pred_check_branch
    %17 = sbr.rel (0) target = $region9
  $region8: #{bottleneck_forward.6} parent=0 // pred_region
    _
  $region9: #{bottleneck_forward.6} parent=0 // pred_fallthru
    _
  // Predicated region
  $region10: #{bottleneck_forward.6} parent=0 // pred_check
    _
  $region11: #{bottleneck_forward.6} parent=0 // pred_check_branch
    %19 = sbr.rel (0) target = $region13
  $region12: #{bottleneck_forward.6} parent=0 // pred_region
    _
  $region13: #{bottleneck_forward.6} parent=0 // pred_fallthru
    _
  // Predicated region
  $region14: #{bottleneck_forward.6} parent=0 // pred_check
    _
  $region15: #{bottleneck_forward.6} parent=0 // pred_check_branch
    %21 = sbr.rel (0) target = $region17
  $region16: #{bottleneck_forward.6} parent=0 // pred_region
    _
  $region17: #{bottleneck_forward.6} parent=0 // pred_fallthru
    _
  // Predicated region
  $region18: #{bottleneck_forward.6} parent=0 // pred_check
    _
  $region19: #{bottleneck_forward.6} parent=0 // pred_check_branch
    %23 = sbr.rel (0) target = $region21
  $region20: #{bottleneck_forward.6} parent=0 // pred_region
    _
  $region21: #{bottleneck_forward.6} parent=0 // pred_fallthru
    _
  // Predicated region
  $region22: #{bottleneck_forward.6} parent=0 // pred_check
    _
  $region23: #{bottleneck_forward.6} parent=0 // pred_check_branch
    %25 = sbr.rel (0) target = $region25
  $region24: #{bottleneck_forward.6} parent=0 // pred_region
    _
  $region25: #{bottleneck_forward.6} parent=0 // pred_fallthru
    _
  %v26 = vld [vmem:[%s1] sm:$0x1]
  %v27 = vmul.f32 %v26, 0.0078125
  %v28 = vld [vmem:[%s2] sm:$0x1]
  %v29 = vmul.f32 %v28, 0.0078125
  %v30 = vmul.f32 %v27, %v27
  %v31 = vsub.f32 %v29, %v30
  %v32 = vmax.f32 %v31, 0.0
  %v33 = vadd.f32 %v32, 1e-05
  %v34 = vrsqrt.pop %v33
  %v35 = vmul.f32 %v34, %v33
  %v36 = vmul.f32 %v35, %v34
  %v37 = vmul.f32 0.5, %v36
  %v38 = vsub.f32 1.5, %v37
  %v39 = vmul.f32 %v34, %v38
  %vm40 = vweird.f32 %v33
  %vm41 = vweird.f32 %v34
  %vm42 = vmor %vm40, %vm41
  %v43 = vsel %vm42, %v34, %v39
  %v44 = vld [vmem:[%s3] sm:$0x1]
  %v45 = vmul.f32 %v43, %v44
  %v46 = vld [vmem:[%s4] sm:$0x1]
  %v47 = vmul.f32 %v27, %v45
  %v48 = vsub.f32 %v46, %v47
  %v49 = vld [vmem:[%s0] sm:$0xf]
  %v50 = vld [vmem:[%s0 + $0x4] sm:$0xf]
  %v51 = vld [vmem:[%s0 + $0x8] sm:$0xf]
  %v52 = vld [vmem:[%s0 + $0xc] sm:$0xf]
  %v53 = vld [vmem:[%s0 + $0x10] sm:$0xf]
  %v54 = vld [vmem:[%s0 + $0x14] sm:$0xf]
  %v55 = vld [vmem:[%s0 + $0x18] sm:$0xf]
  %v56 = vld [vmem:[%s0 + $0x1c] sm:$0xf]
  %v57 = vld [vmem:[%s0 + $0x20] sm:$0xf]
  %v58 = vld [vmem:[%s0 + $0x24] sm:$0xf]
  %v59 = vld [vmem:[%s0 + $0x28] sm:$0xf]
  %v60 = vld [vmem:[%s0 + $0x2c] sm:$0xf]
  %v61 = vld [vmem:[%s0 + $0x30] sm:$0xf]
  %v62 = vld [vmem:[%s0 + $0x34] sm:$0xf]
  %v63 = vld [vmem:[%s0 + $0x38] sm:$0xf]
  %v64 = vld [vmem:[%s0 + $0x3c] sm:$0xf]
  %v65 = vunpack.c.l.bf16 %v49
  %v66 = vunpack.c.l.bf16 %v50
  %v67 = vunpack.c.l.bf16 %v51
  %v68 = vunpack.c.l.bf16 %v52
  %v69 = vunpack.c.l.bf16 %v53
  %v70 = vunpack.c.l.bf16 %v54
  %v71 = vunpack.c.l.bf16 %v55
  %v72 = vunpack.c.l.bf16 %v56
  %v73 = vunpack.c.l.bf16 %v57
  %v74 = vunpack.c.l.bf16 %v58
  %v75 = vunpack.c.l.bf16 %v59
  %v76 = vunpack.c.l.bf16 %v60
  %v77 = vunpack.c.l.bf16 %v61
  %v78 = vunpack.c.l.bf16 %v62
  %v79 = vunpack.c.l.bf16 %v63
  %v80 = vunpack.c.l.bf16 %v64
  %v82 = vperm.slane %v45, 0
  %v84 = vmul.f32 %v65, %v82
  %v85 = vmul.f32 %v66, %v82
  %v86 = vmul.f32 %v67, %v82
  %v87 = vmul.f32 %v68, %v82
  %v88 = vmul.f32 %v69, %v82
  %v89 = vmul.f32 %v70, %v82
  %v90 = vmul.f32 %v71, %v82
  %v91 = vmul.f32 %v72, %v82
  %v92 = vmul.f32 %v73, %v82
  %v93 = vmul.f32 %v74, %v82
  %v94 = vmul.f32 %v75, %v82
  %v95 = vmul.f32 %v76, %v82
  %v96 = vmul.f32 %v77, %v82
  %v97 = vmul.f32 %v78, %v82
  %v98 = vmul.f32 %v79, %v82
  %v99 = vmul.f32 %v80, %v82
  %v101 = vperm.slane %v48, 0
  %v103 = vadd.f32 %v84, %v101
  %v104 = vadd.f32 %v85, %v101
  %v105 = vadd.f32 %v86, %v101
  %v106 = vadd.f32 %v87, %v101
  %v107 = vadd.f32 %v88, %v101
  %v108 = vadd.f32 %v89, %v101
  %v109 = vadd.f32 %v90, %v101
  %v110 = vadd.f32 %v91, %v101
  %v111 = vadd.f32 %v92, %v101
  %v112 = vadd.f32 %v93, %v101
  %v113 = vadd.f32 %v94, %v101
  %v114 = vadd.f32 %v95, %v101
  %v115 = vadd.f32 %v96, %v101
  %v116 = vadd.f32 %v97, %v101
  %v117 = vadd.f32 %v98, %v101
  %v118 = vadd.f32 %v99, %v101
  %v119 = vmax.f32 %v103, 0.0
  %v120 = vmax.f32 %v104, 0.0
  %v121 = vmax.f32 %v105, 0.0
  %v122 = vmax.f32 %v106, 0.0
  %v123 = vmax.f32 %v107, 0.0
  %v124 = vmax.f32 %v108, 0.0
  %v125 = vmax.f32 %v109, 0.0
  %v126 = vmax.f32 %v110, 0.0
  %v127 = vmax.f32 %v111, 0.0
  %v128 = vmax.f32 %v112, 0.0
  %v129 = vmax.f32 %v113, 0.0
  %v130 = vmax.f32 %v114, 0.0
  %v131 = vmax.f32 %v115, 0.0
  %v132 = vmax.f32 %v116, 0.0
  %v133 = vmax.f32 %v117, 0.0
  %v134 = vmax.f32 %v118, 0.0
  %v135 = vpack.c.bf16 %v120, %v119
  %v136 = vpack.c.bf16 %v122, %v121
  %v137 = vpack.c.bf16 %v124, %v123
  %v138 = vpack.c.bf16 %v126, %v125
  %v139 = vpack.c.bf16 %v128, %v127
  %v140 = vpack.c.bf16 %v130, %v129
  %v141 = vpack.c.bf16 %v132, %v131
  %v142 = vpack.c.bf16 %v134, %v133
  %v143 = vld [vmem:[%s5] sm:$0xf]
  %v144 = vld [vmem:[%s5 + $0x4] sm:$0xf]
  %v145 = vld [vmem:[%s5 + $0x8] sm:$0xf]
  %v146 = vld [vmem:[%s5 + $0xc] sm:$0xf]
  %v147 = vld [vmem:[%s5 + $0x10] sm:$0xf]
  %v148 = vld [vmem:[%s5 + $0x14] sm:$0xf]
  %v149 = vld [vmem:[%s5 + $0x18] sm:$0xf]
  %v150 = vld [vmem:[%s5 + $0x1c] sm:$0xf]
  %v151 = vld [vmem:[%s5 + $0x20] sm:$0xf]
  %v152 = vld [vmem:[%s5 + $0x24] sm:$0xf]
  %v153 = vld [vmem:[%s5 + $0x28] sm:$0xf]
  %v154 = vld [vmem:[%s5 + $0x2c] sm:$0xf]
  %v155 = vld [vmem:[%s5 + $0x30] sm:$0xf]
  %v156 = vld [vmem:[%s5 + $0x34] sm:$0xf]
  %v157 = vld [vmem:[%s5 + $0x38] sm:$0xf]
  %v158 = vld [vmem:[%s5 + $0x3c] sm:$0xf]
  %v175 = vunpack.c.l.b16 %v143
  %v176 = vunpack.c.l.b16 %v144
  %v177 = vunpack.c.l.b16 %v145
  %v178 = vunpack.c.l.b16 %v146
  %v179 = vunpack.c.l.b16 %v147
  %v180 = vunpack.c.l.b16 %v148
  %v181 = vunpack.c.l.b16 %v149
  %v182 = vunpack.c.l.b16 %v150
  %v183 = vunpack.c.l.b16 %v151
  %v184 = vunpack.c.l.b16 %v152
  %v185 = vunpack.c.l.b16 %v153
  %v186 = vunpack.c.l.b16 %v154
  %v187 = vunpack.c.l.b16 %v155
  %v188 = vunpack.c.l.b16 %v156
  %v189 = vunpack.c.l.b16 %v157
  %v190 = vunpack.c.l.b16 %v158
  %v191 = vpack.c.b16 %v176, %v175
  %v192 = vpack.c.b16 %v178, %v177
  %v193 = vpack.c.b16 %v180, %v179
  %v194 = vpack.c.b16 %v182, %v181
  %v195 = vpack.c.b16 %v184, %v183
  %v196 = vpack.c.b16 %v186, %v185
  %v197 = vpack.c.b16 %v188, %v187
  %v198 = vpack.c.b16 %v190, %v189
  %207 = vmatpush.bf16.msra.mxu0 %v198
  %208 = vmatpush.bf16.msra.mxu0 %v197
  %209 = vmatpush.bf16.msra.mxu0 %v196
  %210 = vmatpush.bf16.msra.mxu0 %v195
  %211 = vmatpush.bf16.msra.mxu0 %v194
  %212 = vmatpush.bf16.msra.mxu0 %v193
  %213 = vmatpush.bf16.msra.mxu0 %v192
  %214 = vmatpush.bf16.msra.mxu0 %v191
  %215 = vmatmul.bf16.gmra.mxu0 %v135
  %v216 = vpop.f32.mrf.mxu0
  %v217 = vadd.f32 0.0, %v216
  %v218 = vpop.f32.mrf.mxu0
  %v219 = vadd.f32 0.0, %v218
  %220 = vmatmul.bf16.gmra.mxu0 %v136
  %v221 = vpop.f32.mrf.mxu0
  %v222 = vadd.f32 0.0, %v221
  %v223 = vpop.f32.mrf.mxu0
  %v224 = vadd.f32 0.0, %v223
  %225 = vmatmul.bf16.gmra.mxu0 %v137
  %v226 = vpop.f32.mrf.mxu0
  %v227 = vadd.f32 0.0, %v226
  %v228 = vpop.f32.mrf.mxu0
  %v229 = vadd.f32 0.0, %v228
  %230 = vmatmul.bf16.gmra.mxu0 %v138
  %v231 = vpop.f32.mrf.mxu0
  %v232 = vadd.f32 0.0, %v231
  %v233 = vpop.f32.mrf.mxu0
  %v234 = vadd.f32 0.0, %v233
  %235 = vmatmul.bf16.gmra.mxu0 %v139
  %v236 = vpop.f32.mrf.mxu0
  %v237 = vadd.f32 0.0, %v236
  %v238 = vpop.f32.mrf.mxu0
  %v239 = vadd.f32 0.0, %v238
  %240 = vmatmul.bf16.gmra.mxu0 %v140
  %v241 = vpop.f32.mrf.mxu0
  %v242 = vadd.f32 0.0, %v241
  %v243 = vpop.f32.mrf.mxu0
  %v244 = vadd.f32 0.0, %v243
  %245 = vmatmul.bf16.gmra.mxu0 %v141
  %v246 = vpop.f32.mrf.mxu0
  %v247 = vadd.f32 0.0, %v246
  %v248 = vpop.f32.mrf.mxu0
  %v249 = vadd.f32 0.0, %v248
  %250 = vmatmul.bf16.gmra.mxu0 %v142
  %v251 = vpop.f32.mrf.mxu0
  %v252 = vadd.f32 0.0, %v251
  %v253 = vpop.f32.mrf.mxu0
  %v254 = vadd.f32 0.0, %v253
  %255 = vdwg.mxu0
  %v256 = vpack.c.bf16 %v217, %v217
  %v257 = vpack.c.bf16 %v219, %v219
  %v258 = vpack.c.bf16 %v222, %v222
  %v259 = vpack.c.bf16 %v224, %v224
  %v260 = vpack.c.bf16 %v227, %v227
  %v261 = vpack.c.bf16 %v229, %v229
  %v262 = vpack.c.bf16 %v232, %v232
  %v263 = vpack.c.bf16 %v234, %v234
  %v264 = vpack.c.bf16 %v237, %v237
  %v265 = vpack.c.bf16 %v239, %v239
  %v266 = vpack.c.bf16 %v242, %v242
  %v267 = vpack.c.bf16 %v244, %v244
  %v268 = vpack.c.bf16 %v247, %v247
  %v269 = vpack.c.bf16 %v249, %v249
  %v270 = vpack.c.bf16 %v252, %v252
  %v271 = vpack.c.bf16 %v254, %v254
  %272 = vst [vmem:[%s6] sm:$0xf] %v256
  %273 = vst [vmem:[%s6 + $0x4] sm:$0xf] %v257
  %274 = vst [vmem:[%s6 + $0x8] sm:$0xf] %v258
  %275 = vst [vmem:[%s6 + $0xc] sm:$0xf] %v259
  %276 = vst [vmem:[%s6 + $0x10] sm:$0xf] %v260
  %277 = vst [vmem:[%s6 + $0x14] sm:$0xf] %v261
  %278 = vst [vmem:[%s6 + $0x18] sm:$0xf] %v262
  %279 = vst [vmem:[%s6 + $0x1c] sm:$0xf] %v263
  %280 = vst [vmem:[%s6 + $0x20] sm:$0xf] %v264
  %281 = vst [vmem:[%s6 + $0x24] sm:$0xf] %v265
  %282 = vst [vmem:[%s6 + $0x28] sm:$0xf] %v266
  %283 = vst [vmem:[%s6 + $0x2c] sm:$0xf] %v267
  %284 = vst [vmem:[%s6 + $0x30] sm:$0xf] %v268
  %285 = vst [vmem:[%s6 + $0x34] sm:$0xf] %v269
  %286 = vst [vmem:[%s6 + $0x38] sm:$0xf] %v270
  %287 = vst [vmem:[%s6 + $0x3c] sm:$0xf] %v271
  %s288 = sadd.s32 0, 1
  %s289 = smul.u32 %s288, 128
  %p290 = scmp.le.s32.totalorder %s289, 128
  // Predicated region
  $region26: #{bottleneck_forward.6} parent=0 // pred_check
    %p291 = pneg %p290
  $region27: #{bottleneck_forward.6} parent=0 // pred_check_branch
    %293 = sbr.rel (%p291) target = $region29
  $region28: #{bottleneck_forward.6} parent=0 // pred_region
    %v294 = vadd.f32 %v217, %v219
    %v295 = vadd.f32 %v294, %v222
    %v296 = vadd.f32 %v295, %v224
    %v297 = vadd.f32 %v296, %v227
    %v298 = vadd.f32 %v297, %v229
    %v299 = vadd.f32 %v298, %v232
    %v300 = vadd.f32 %v299, %v234
    %v301 = vadd.f32 %v300, %v237
    %v302 = vadd.f32 %v301, %v239
    %v303 = vadd.f32 %v302, %v242
    %v304 = vadd.f32 %v303, %v244
    %v305 = vadd.f32 %v304, %v247
    %v306 = vadd.f32 %v305, %v249
    %v307 = vadd.f32 %v306, %v252
    %v308 = vadd.f32 %v307, %v254
    %v309 = vrot.slane %v308, 4
    %v310 = vadd.f32 %v308, %v309
    %v311 = vrot.slane %v310, 2
    %v312 = vadd.f32 %v310, %v311
    %v313 = vrot.slane %v312, 1
    %v314 = vadd.f32 %v312, %v313
    %315 = vst [vmem:[%s7] sm:$0x1] %v314
    %v316 = vmul.f32 %v217, %v217
    %v317 = vmul.f32 %v219, %v219
    %v318 = vmul.f32 %v222, %v222
    %v319 = vmul.f32 %v224, %v224
    %v320 = vmul.f32 %v227, %v227
    %v321 = vmul.f32 %v229, %v229
    %v322 = vmul.f32 %v232, %v232
    %v323 = vmul.f32 %v234, %v234
    %v324 = vmul.f32 %v237, %v237
    %v325 = vmul.f32 %v239, %v239
    %v326 = vmul.f32 %v242, %v242
    %v327 = vmul.f32 %v244, %v244
    %v328 = vmul.f32 %v247, %v247
    %v329 = vmul.f32 %v249, %v249
    %v330 = vmul.f32 %v252, %v252
    %v331 = vmul.f32 %v254, %v254
    %v332 = vadd.f32 %v316, %v317
    %v333 = vadd.f32 %v332, %v318
    %v334 = vadd.f32 %v333, %v319
    %v335 = vadd.f32 %v334, %v320
    %v336 = vadd.f32 %v335, %v321
    %v337 = vadd.f32 %v336, %v322
    %v338 = vadd.f32 %v337, %v323
    %v339 = vadd.f32 %v338, %v324
    %v340 = vadd.f32 %v339, %v325
    %v341 = vadd.f32 %v340, %v326
    %v342 = vadd.f32 %v341, %v327
    %v343 = vadd.f32 %v342, %v328
    %v344 = vadd.f32 %v343, %v329
    %v345 = vadd.f32 %v344, %v330
    %v346 = vadd.f32 %v345, %v331
    %v347 = vrot.slane %v346, 4
    %v348 = vadd.f32 %v346, %v347
    %v349 = vrot.slane %v348, 2
    %v350 = vadd.f32 %v348, %v349
    %v351 = vrot.slane %v350, 1
    %v352 = vadd.f32 %v350, %v351
    %353 = vst [vmem:[%s8] sm:$0x1] %v352
  $region29: #{bottleneck_forward.6} parent=0 // pred_fallthru
    _
  %p354 = scmp.gt.s32.totalorder %s289, 128
  // Predicated region
  $region30: #{bottleneck_forward.6} parent=0 // pred_check
    %p355 = pneg %p354
  $region31: #{bottleneck_forward.6} parent=0 // pred_check_branch
    %357 = sbr.rel (%p355) target = $region33
  $region32: #{bottleneck_forward.6} parent=0 // pred_region
    %v358 = vlaneseq
    %v359 = vshrl.u32 %v358, 7
    %v360 = vadd.s32 %v359, 8
    %v361 = vadd.s32 %v359, 16
    %v362 = vadd.s32 %v359, 24
    %v363 = vadd.s32 %v359, 32
    %v364 = vadd.s32 %v359, 40
    %v365 = vadd.s32 %v359, 48
    %v366 = vadd.s32 %v359, 56
    %v367 = vadd.s32 %v359, 64
    %v368 = vadd.s32 %v359, 72
    %v369 = vadd.s32 %v359, 80
    %v370 = vadd.s32 %v359, 88
    %v371 = vadd.s32 %v359, 96
    %v372 = vadd.s32 %v359, 104
    %v373 = vadd.s32 %v359, 112
    %v374 = vadd.s32 %v359, 120
    %s375 = smul.u32 0, 128
    %s376 = ssub.s32 128, %s375
    %v377 = vstv %s376
    %vm378 = vcmp.lt.s32.totalorder %v359, %v377
    %vm379 = vcmp.lt.s32.totalorder %v360, %v377
    %vm380 = vcmp.lt.s32.totalorder %v361, %v377
    %vm381 = vcmp.lt.s32.totalorder %v362, %v377
    %vm382 = vcmp.lt.s32.totalorder %v363, %v377
    %vm383 = vcmp.lt.s32.totalorder %v364, %v377
    %vm384 = vcmp.lt.s32.totalorder %v365, %v377
    %vm385 = vcmp.lt.s32.totalorder %v366, %v377
    %vm386 = vcmp.lt.s32.totalorder %v367, %v377
    %vm387 = vcmp.lt.s32.totalorder %v368, %v377
    %vm388 = vcmp.lt.s32.totalorder %v369, %v377
    %vm389 = vcmp.lt.s32.totalorder %v370, %v377
    %vm390 = vcmp.lt.s32.totalorder %v371, %v377
    %vm391 = vcmp.lt.s32.totalorder %v372, %v377
    %vm392 = vcmp.lt.s32.totalorder %v373, %v377
    %vm393 = vcmp.lt.s32.totalorder %v374, %v377
    %v394 = vsel %vm378, %v217, 0.0
    %v395 = vsel %vm379, %v219, 0.0
    %v396 = vsel %vm380, %v222, 0.0
    %v397 = vsel %vm381, %v224, 0.0
    %v398 = vsel %vm382, %v227, 0.0
    %v399 = vsel %vm383, %v229, 0.0
    %v400 = vsel %vm384, %v232, 0.0
    %v401 = vsel %vm385, %v234, 0.0
    %v402 = vsel %vm386, %v237, 0.0
    %v403 = vsel %vm387, %v239, 0.0
    %v404 = vsel %vm388, %v242, 0.0
    %v405 = vsel %vm389, %v244, 0.0
    %v406 = vsel %vm390, %v247, 0.0
    %v407 = vsel %vm391, %v249, 0.0
    %v408 = vsel %vm392, %v252, 0.0
    %v409 = vsel %vm393, %v254, 0.0
    %v410 = vadd.f32 %v394, %v395
    %v411 = vadd.f32 %v410, %v396
    %v412 = vadd.f32 %v411, %v397
    %v413 = vadd.f32 %v412, %v398
    %v414 = vadd.f32 %v413, %v399
    %v415 = vadd.f32 %v414, %v400
    %v416 = vadd.f32 %v415, %v401
    %v417 = vadd.f32 %v416, %v402
    %v418 = vadd.f32 %v417, %v403
    %v419 = vadd.f32 %v418, %v404
    %v420 = vadd.f32 %v419, %v405
    %v421 = vadd.f32 %v420, %v406
    %v422 = vadd.f32 %v421, %v407
    %v423 = vadd.f32 %v422, %v408
    %v424 = vadd.f32 %v423, %v409
    %v425 = vrot.slane %v424, 4
    %v426 = vadd.f32 %v424, %v425
    %v427 = vrot.slane %v426, 2
    %v428 = vadd.f32 %v426, %v427
    %v429 = vrot.slane %v428, 1
    %v430 = vadd.f32 %v428, %v429
    %431 = vst [vmem:[%s7] sm:$0x1] %v430
    %v432 = vmul.f32 %v394, %v394
    %v433 = vmul.f32 %v395, %v395
    %v434 = vmul.f32 %v396, %v396
    %v435 = vmul.f32 %v397, %v397
    %v436 = vmul.f32 %v398, %v398
    %v437 = vmul.f32 %v399, %v399
    %v438 = vmul.f32 %v400, %v400
    %v439 = vmul.f32 %v401, %v401
    %v440 = vmul.f32 %v402, %v402
    %v441 = vmul.f32 %v403, %v403
    %v442 = vmul.f32 %v404, %v404
    %v443 = vmul.f32 %v405, %v405
    %v444 = vmul.f32 %v406, %v406
    %v445 = vmul.f32 %v407, %v407
    %v446 = vmul.f32 %v408, %v408
    %v447 = vmul.f32 %v409, %v409
    %v448 = vadd.f32 %v432, %v433
    %v449 = vadd.f32 %v448, %v434
    %v450 = vadd.f32 %v449, %v435
    %v451 = vadd.f32 %v450, %v436
    %v452 = vadd.f32 %v451, %v437
    %v453 = vadd.f32 %v452, %v438
    %v454 = vadd.f32 %v453, %v439
    %v455 = vadd.f32 %v454, %v440
    %v456 = vadd.f32 %v455, %v441
    %v457 = vadd.f32 %v456, %v442
    %v458 = vadd.f32 %v457, %v443
    %v459 = vadd.f32 %v458, %v444
    %v460 = vadd.f32 %v459, %v445
    %v461 = vadd.f32 %v460, %v446
    %v462 = vadd.f32 %v461, %v447
    %v463 = vrot.slane %v462, 4
    %v464 = vadd.f32 %v462, %v463
    %v465 = vrot.slane %v464, 2
    %v466 = vadd.f32 %v464, %v465
    %v467 = vrot.slane %v466, 1
    %v468 = vadd.f32 %v466, %v467
    %469 = vst [vmem:[%s8] sm:$0x1] %v468
  $region33: #{bottleneck_forward.6} parent=0 // pred_fallthru
    _
  // Predicated region
  $region34: #{bottleneck_forward.6} parent=0 // pred_check
    _
  $region35: #{bottleneck_forward.6} parent=0 // pred_check_branch
    %471 = sbr.rel (0) target = $region37
  $region36: #{bottleneck_forward.6} parent=0 // pred_region
    _
  $region37: #{bottleneck_forward.6} parent=0 // pred_fallthru
    _
  // Predicated region
  $region38: #{bottleneck_forward.6} parent=0 // pred_check
    _
  $region39: #{bottleneck_forward.6} parent=0 // pred_check_branch
    %473 = sbr.rel (0) target = $region41
  $region40: #{bottleneck_forward.6} parent=0 // pred_region
    _
  $region41: #{bottleneck_forward.6} parent=0 // pred_fallthru
    _
  // Predicated region
  $region42: #{bottleneck_forward.6} parent=0 // pred_check
    _
  $region43: #{bottleneck_forward.6} parent=0 // pred_check_branch
    %475 = sbr.rel (0) target = $region45
  $region44: #{bottleneck_forward.6} parent=0 // pred_region
    _
  $region45: #{bottleneck_forward.6} parent=0 // pred_fallthru
    _
  // Predicated region
  $region46: #{bottleneck_forward.6} parent=0 // pred_check
    _
  $region47: #{bottleneck_forward.6} parent=0 // pred_check_branch
    %477 = sbr.rel (0) target = $region49
  $region48: #{bottleneck_forward.6} parent=0 // pred_region
    _
  $region49: #{bottleneck_forward.6} parent=0 // pred_fallthru
    _
  // Predicated region
  $region50: #{bottleneck_forward.6} parent=0 // pred_check
    _
  $region51: #{bottleneck_forward.6} parent=0 // pred_check_branch
    %479 = sbr.rel (0) target = $region53
  $region52: #{bottleneck_forward.6} parent=0 // pred_region
    _
  $region53: #{bottleneck_forward.6} parent=0 // pred_fallthru
    _
  // Predicated region
  $region54: #{bottleneck_forward.6} parent=0 // pred_check
    _
  $region55: #{bottleneck_forward.6} parent=0 // pred_check_branch
    %481 = sbr.rel (0) target = $region57
  $region56: #{bottleneck_forward.6} parent=0 // pred_region
    _
  $region57: #{bottleneck_forward.6} parent=0 // pred_fallthru
    _

// kernel: bottleneck_forward.5
$region0: #{bottleneck_forward.5}
  #allocation0 [shape = 'u32[]', space=smem, size = 0x4, offset = 0x4, fixed_abs, tag = 'smem constant byte address 0x4 - core index']
  #allocation1 [shape = 'u32[72,128]{1,0:T(1,128)}', space=vmem, size = 0x9000, scoped, tag = 'internal scratch']
  #allocation2 [shape = 'bf16[10,16,128]{2,1,0:T(8,128)(2,1)}', space=vmem, size = 0xa000, scoped, tag = 'scratch operand']
  #allocation3 [shape = 'f32[3,128,128]{2,1,0:T(8,128)}', space=vmem, size = 0x30000, scoped, tag = 'scratch operand']
  %s0 = inlined_call_operand.vmem [shape: bf16[128,128], index: 0, kind: input, shape index: {}]
  %s1 = inlined_call_operand.vmem [shape: f32[1,128], index: 1, kind: input, shape index: {}]
  %s2 = inlined_call_operand.vmem [shape: f32[1,128], index: 2, kind: input, shape index: {}]
  %s3 = inlined_call_operand.vmem [shape: f32[1,128], index: 3, kind: input, shape index: {}]
  %s4 = inlined_call_operand.vmem [shape: f32[1,128], index: 4, kind: input, shape index: {}]
  %s5 = inlined_call_operand.vmem [shape: bf16[9,128,128], index: 5, kind: input, shape index: {}]
  %s6 = inlined_call_operand.vmem [shape: bf16[128,128], index: 6, kind: output, shape index: {0}]
  %s7 = inlined_call_operand.vmem [shape: f32[2,1,128], index: 7, kind: output, shape index: {1}]
  %s8 = inlined_call_operand.vmem [shape: f32[2,1,128], index: 8, kind: output, shape index: {2}]
  %9 = xla_tuple %s6, %s7, %s8
  %s10 = sld [smem:[#allocation0]]
  $region73: #{bottleneck_forward.5} parent=0
    _
  %s12 = ssub.s32 1, %s10
  %s13 = scalar_select 0, %s12, %s10
  loop: start=0, step=1, limit=4
  $region2: #{bottleneck_forward.5} parent=0 // loop_pre_header
    _
  $region3: #{bottleneck_forward.5} parent=0 // loop_header
    %s15 = sphi 0, %s19
    %p16 = scmp.ge.s32.totalorder %s15, 4
    %s25 = sphi 0, %s27
    %s28 = sphi 0, %s25
    %s29 = sphi 0, %s28
    %s45 = sphi 0, %s29
    %s49 = sphi 0, %s49
    %s51 = sphi 0, %s49
    %s52 = sphi 0, %s51
    %s66 = sphi 0, %s52
    %s70 = sphi 0, %s70
    %s72 = sphi 0, %s70
    %s73 = sphi 0, %s72
    %s87 = sphi 0, %s73
    %s91 = sphi 0, %s91
    %s93 = sphi 0, %s91
    %s94 = sphi 0, %s93
    %s108 = sphi 0, %s94
    %s112 = sphi 0, %s112
    %s114 = sphi 0, %s112
    %s115 = sphi 0, %s114
    %s129 = sphi 0, %s115
    %s133 = sphi 0, %s133
    %s135 = sphi 0, %s133
    %s136 = sphi 0, %s135
    %s150 = sphi 0, %s136
    %s156 = sphi 0, %s158
    %s159 = sphi 0, %s156
    %s160 = sphi 0, %s159
    %s176 = sphi 0, %s160
    %s182 = sphi 0, %s184
    %s185 = sphi 0, %s182
    %s186 = sphi 0, %s185
    %s202 = sphi 0, %s186
    %s208 = sphi 0, %s210
    %s211 = sphi 0, %s208
    %s212 = sphi 0, %s211
    %s228 = sphi 0, %s212
  $region4: #{bottleneck_forward.5} parent=0 // loop_header_branch
    %18 = sbr.rel (%p16) target = $region8
  $region5: #{bottleneck_forward.5} parent=0 // loop_body
    %s20 = ssub.s32 %s15, 1
    %s21 = ssub.s32 %s15, 2
    %s22 = sadd.s32 %s15, 1
    %s23 = ssub.s32 %s15, %s22
    %p24 = scmp.eq.s32.totalorder %s23, 0
    %s26 = sadd.s32 %s25, 1
    %s27 = scalar_select %p24, %s25, %s26
    %p30 = pneg %p24
    %p31 = scmp.eq.s32.totalorder %s15, 1
    %p32 = por %p30, %p31
    %p33 = scmp.ne.s32.totalorder %s25, %s28
    %p34 = scmp.eq.s32.totalorder %s15, 0
    %p35 = por %p33, %p34
    %p36 = scmp.ne.s32.totalorder %s25, %s28
    %p37 = scmp.eq.s32.totalorder %s20, 1
    %p38 = por %p36, %p37
    %p39 = scmp.ne.s32.totalorder %s28, %s29
    %p40 = scmp.eq.s32.totalorder %s20, 0
    %p41 = por %p39, %p40
    %p42 = scmp.ne.s32.totalorder %s28, %s29
    %p43 = scmp.eq.s32.totalorder %s21, 1
    %p44 = por %p42, %p43
    %p46 = scmp.ne.s32.totalorder %s29, %s45
    %p47 = scmp.eq.s32.totalorder %s21, 0
    %p48 = por %p46, %p47
    %s50 = sadd.s32 %s49, 1
    %p53 = scmp.eq.s32.totalorder %s15, 1
    %p54 = scmp.ne.s32.totalorder %s49, %s51
    %p55 = scmp.eq.s32.totalorder %s15, 0
    %p56 = por %p54, %p55
    %p57 = scmp.ne.s32.totalorder %s49, %s51
    %p58 = scmp.eq.s32.totalorder %s20, 1
    %p59 = por %p57, %p58
    %p60 = scmp.ne.s32.totalorder %s51, %s52
    %p61 = scmp.eq.s32.totalorder %s20, 0
    %p62 = por %p60, %p61
    %p63 = scmp.ne.s32.totalorder %s51, %s52
    %p64 = scmp.eq.s32.totalorder %s21, 1
    %p65 = por %p63, %p64
    %p67 = scmp.ne.s32.totalorder %s52, %s66
    %p68 = scmp.eq.s32.totalorder %s21, 0
    %p69 = por %p67, %p68
    %s71 = sadd.s32 %s70, 1
    %p74 = scmp.eq.s32.totalorder %s15, 1
    %p75 = scmp.ne.s32.totalorder %s70, %s72
    %p76 = scmp.eq.s32.totalorder %s15, 0
    %p77 = por %p75, %p76
    %p78 = scmp.ne.s32.totalorder %s70, %s72
    %p79 = scmp.eq.s32.totalorder %s20, 1
    %p80 = por %p78, %p79
    %p81 = scmp.ne.s32.totalorder %s72, %s73
    %p82 = scmp.eq.s32.totalorder %s20, 0
    %p83 = por %p81, %p82
    %p84 = scmp.ne.s32.totalorder %s72, %s73
    %p85 = scmp.eq.s32.totalorder %s21, 1
    %p86 = por %p84, %p85
    %p88 = scmp.ne.s32.totalorder %s73, %s87
    %p89 = scmp.eq.s32.totalorder %s21, 0
    %p90 = por %p88, %p89
    %s92 = sadd.s32 %s91, 1
    %p95 = scmp.eq.s32.totalorder %s15, 1
    %p96 = scmp.ne.s32.totalorder %s91, %s93
    %p97 = scmp.eq.s32.totalorder %s15, 0
    %p98 = por %p96, %p97
    %p99 = scmp.ne.s32.totalorder %s91, %s93
    %p100 = scmp.eq.s32.totalorder %s20, 1
    %p101 = por %p99, %p100
    %p102 = scmp.ne.s32.totalorder %s93, %s94
    %p103 = scmp.eq.s32.totalorder %s20, 0
    %p104 = por %p102, %p103
    %p105 = scmp.ne.s32.totalorder %s93, %s94
    %p106 = scmp.eq.s32.totalorder %s21, 1
    %p107 = por %p105, %p106
    %p109 = scmp.ne.s32.totalorder %s94, %s108
    %p110 = scmp.eq.s32.totalorder %s21, 0
    %p111 = por %p109, %p110
    %s113 = sadd.s32 %s112, 1
    %p116 = scmp.eq.s32.totalorder %s15, 1
    %p117 = scmp.ne.s32.totalorder %s112, %s114
    %p118 = scmp.eq.s32.totalorder %s15, 0
    %p119 = por %p117, %p118
    %p120 = scmp.ne.s32.totalorder %s112, %s114
    %p121 = scmp.eq.s32.totalorder %s20, 1
    %p122 = por %p120, %p121
    %p123 = scmp.ne.s32.totalorder %s114, %s115
    %p124 = scmp.eq.s32.totalorder %s20, 0
    %p125 = por %p123, %p124
    %p126 = scmp.ne.s32.totalorder %s114, %s115
    %p127 = scmp.eq.s32.totalorder %s21, 1
    %p128 = por %p126, %p127
    %p130 = scmp.ne.s32.totalorder %s115, %s129
    %p131 = scmp.eq.s32.totalorder %s21, 0
    %p132 = por %p130, %p131
    %s134 = sadd.s32 %s133, 1
    %p137 = scmp.eq.s32.totalorder %s15, 1
    %p138 = scmp.ne.s32.totalorder %s133, %s135
    %p139 = scmp.eq.s32.totalorder %s15, 0
    %p140 = por %p138, %p139
    %p141 = scmp.ne.s32.totalorder %s133, %s135
    %p142 = scmp.eq.s32.totalorder %s20, 1
    %p143 = por %p141, %p142
    %p144 = scmp.ne.s32.totalorder %s135, %s136
    %p145 = scmp.eq.s32.totalorder %s20, 0
    %p146 = por %p144, %p145
    %p147 = scmp.ne.s32.totalorder %s135, %s136
    %p148 = scmp.eq.s32.totalorder %s21, 1
    %p149 = por %p147, %p148
    %p151 = scmp.ne.s32.totalorder %s136, %s150
    %p152 = scmp.eq.s32.totalorder %s21, 0
    %p153 = por %p151, %p152
    %s154 = ssub.s32 %s15, %s22
    %p155 = scmp.eq.s32.totalorder %s154, 0
    %s157 = sadd.s32 %s156, 1
    %s158 = scalar_select %p155, %s156, %s157
    %p161 = pneg %p155
    %p162 = scmp.eq.s32.totalorder %s15, 1
    %p163 = por %p161, %p162
    %p164 = scmp.ne.s32.totalorder %s156, %s159
    %p165 = scmp.eq.s32.totalorder %s15, 0
    %p166 = por %p164, %p165
    %p167 = scmp.ne.s32.totalorder %s156, %s159
    %p168 = scmp.eq.s32.totalorder %s20, 1
    %p169 = por %p167, %p168
    %p170 = scmp.ne.s32.totalorder %s159, %s160
    %p171 = scmp.eq.s32.totalorder %s20, 0
    %p172 = por %p170, %p171
    %p173 = scmp.ne.s32.totalorder %s159, %s160
    %p174 = scmp.eq.s32.totalorder %s21, 1
    %p175 = por %p173, %p174
    %p177 = scmp.ne.s32.totalorder %s160, %s176
    %p178 = scmp.eq.s32.totalorder %s21, 0
    %p179 = por %p177, %p178
    %s180 = ssub.s32 %s15, %s22
    %p181 = scmp.eq.s32.totalorder %s180, 0
    %s183 = sadd.s32 %s182, 1
    %s184 = scalar_select %p181, %s182, %s183
    %p187 = pneg %p181
    %p188 = scmp.eq.s32.totalorder %s15, 1
    %p189 = por %p187, %p188
    %p190 = scmp.ne.s32.totalorder %s182, %s185
    %p191 = scmp.eq.s32.totalorder %s15, 0
    %p192 = por %p190, %p191
    %p193 = scmp.ne.s32.totalorder %s182, %s185
    %p194 = scmp.eq.s32.totalorder %s20, 1
    %p195 = por %p193, %p194
    %p196 = scmp.ne.s32.totalorder %s185, %s186
    %p197 = scmp.eq.s32.totalorder %s20, 0
    %p198 = por %p196, %p197
    %p199 = scmp.ne.s32.totalorder %s185, %s186
    %p200 = scmp.eq.s32.totalorder %s21, 1
    %p201 = por %p199, %p200
    %p203 = scmp.ne.s32.totalorder %s186, %s202
    %p204 = scmp.eq.s32.totalorder %s21, 0
    %p205 = por %p203, %p204
    %s206 = ssub.s32 %s15, %s22
    %p207 = scmp.eq.s32.totalorder %s206, 0
    %s209 = sadd.s32 %s208, 1
    %s210 = scalar_select %p207, %s208, %s209
    %p213 = pneg %p207
    %p214 = scmp.eq.s32.totalorder %s15, 1
    %p215 = por %p213, %p214
    %p216 = scmp.ne.s32.totalorder %s208, %s211
    %p217 = scmp.eq.s32.totalorder %s15, 0
    %p218 = por %p216, %p217
    %p219 = scmp.ne.s32.totalorder %s208, %s211
    %p220 = scmp.eq.s32.totalorder %s20, 1
    %p221 = por %p219, %p220
    %p222 = scmp.ne.s32.totalorder %s211, %s212
    %p223 = scmp.eq.s32.totalorder %s20, 0
    %p224 = por %p222, %p223
    %p225 = scmp.ne.s32.totalorder %s211, %s212
    %p226 = scmp.eq.s32.totalorder %s21, 1
    %p227 = por %p225, %p226
    %p229 = scmp.ne.s32.totalorder %s212, %s228
    %p230 = scmp.eq.s32.totalorder %s21, 0
    %p231 = por %p229, %p230
    %p232 = scmp.le.s32.totalorder 1, %s15
    %p233 = scmp.lt.s32.totalorder %s15, 3
    %p234 = pnand %p232, %p233
    %p235 = pneg %p234
    // Predicated region
    $region9: #{bottleneck_forward.5} parent=5 // pred_check
      _
    $region10: #{bottleneck_forward.5} parent=5 // pred_check_branch
      %237 = sbr.rel (%p234) target = $region12
    $region11: #{bottleneck_forward.5} parent=5 // pred_region
      %s238 = ssub.s32 %s15, 1
      // Predicated region
      $region13: #{bottleneck_forward.5} parent=11 // pred_check
        %p239 = pneg %p62
      $region14: #{bottleneck_forward.5} parent=11 // pred_check_branch
        %241 = sbr.rel (%p239) target = $region16
      $region15: #{bottleneck_forward.5} parent=11 // pred_region
        _
      $region16: #{bottleneck_forward.5} parent=11 // pred_fallthru
        _
      // Predicated region
      $region17: #{bottleneck_forward.5} parent=11 // pred_check
        %p242 = pneg %p83
      $region18: #{bottleneck_forward.5} parent=11 // pred_check_branch
        %244 = sbr.rel (%p242) target = $region20
      $region19: #{bottleneck_forward.5} parent=11 // pred_region
        _
      $region20: #{bottleneck_forward.5} parent=11 // pred_fallthru
        _
      // Predicated region
      $region21: #{bottleneck_forward.5} parent=11 // pred_check
        %p245 = pneg %p104
      $region22: #{bottleneck_forward.5} parent=11 // pred_check_branch
        %247 = sbr.rel (%p245) target = $region24
      $region23: #{bottleneck_forward.5} parent=11 // pred_region
        _
      $region24: #{bottleneck_forward.5} parent=11 // pred_fallthru
        _
      // Predicated region
      $region25: #{bottleneck_forward.5} parent=11 // pred_check
        %p248 = pneg %p125
      $region26: #{bottleneck_forward.5} parent=11 // pred_check_branch
        %250 = sbr.rel (%p248) target = $region28
      $region27: #{bottleneck_forward.5} parent=11 // pred_region
        _
      $region28: #{bottleneck_forward.5} parent=11 // pred_fallthru
        _
      // Predicated region
      $region29: #{bottleneck_forward.5} parent=11 // pred_check
        %p251 = pneg %p146
      $region30: #{bottleneck_forward.5} parent=11 // pred_check_branch
        %253 = sbr.rel (%p251) target = $region32
      $region31: #{bottleneck_forward.5} parent=11 // pred_region
        _
      $region32: #{bottleneck_forward.5} parent=11 // pred_fallthru
        _
    $region12: #{bottleneck_forward.5} parent=5 // pred_fallthru
      _
    %p254 = scmp.lt.s32.totalorder %s15, 2
    // Predicated region
    $region33: #{bottleneck_forward.5} parent=5 // pred_check
      %p255 = pneg %p254
    $region34: #{bottleneck_forward.5} parent=5 // pred_check_branch
      %257 = sbr.rel (%p255) target = $region36
    $region35: #{bottleneck_forward.5} parent=5 // pred_region
      // Predicated region
      $region37: #{bottleneck_forward.5} parent=35 // pred_check
        %p258 = pneg %p35
      $region38: #{bottleneck_forward.5} parent=35 // pred_check_branch
        %260 = sbr.rel (%p258) target = $region40
      $region39: #{bottleneck_forward.5} parent=35 // pred_region
        %s261 = smul.u32 8, %s15
        %p262 = scmp.lt.s32.totalorder %s261, 15
        %s263 = scalar_select %p262, %s261, 15
        %s264 = smul.addr %s263, 4
        %s265 = scalar_lea.vmem %s0, %s264
        %s266 = smul.u32 8, %s15
      $region40: #{bottleneck_forward.5} parent=35 // pred_fallthru
        _
    $region36: #{bottleneck_forward.5} parent=5 // pred_fallthru
      _
    %p267 = scmp.le.s32.totalorder 1, %s15
    %p268 = scmp.lt.s32.totalorder %s15, 3
    %p269 = pnand %p267, %p268
    %p270 = pneg %p269
    // Predicated region
    $region41: #{bottleneck_forward.5} parent=5 // pred_check
      _
    $region42: #{bottleneck_forward.5} parent=5 // pred_check_branch
      %272 = sbr.rel (%p269) target = $region44
    $region43: #{bottleneck_forward.5} parent=5 // pred_region
      %s273 = ssub.s32 %s15, 1
      %s274 = smul.u32 8, %s20
      %p275 = scmp.lt.s32.totalorder %s274, 15
      %s276 = scalar_select %p275, %s274, 15
      %s277 = smul.addr %s276, 4
      %s278 = scalar_lea.vmem %s0, %s277
      %p279 = pneg %p41
      %p280 = pneg %p38
      %p281 = pneg %p62
      %p282 = pneg %p59
      %p283 = pneg %p83
      %p284 = pneg %p80
      %p285 = pneg %p104
      %p286 = pneg %p101
      %p287 = pneg %p125
      %p288 = pneg %p122
      %p289 = pneg %p146
      %p290 = pneg %p143
      %p291 = pneg %p172
      %p292 = pneg %p169
      %s293 = smul.u32 8, %s20
      %p294 = scmp.lt.s32.totalorder %s293, 15
      %s295 = scalar_select %p294, %s293, 15
      %s296 = smul.addr %s295, 4
      %s297 = scalar_lea.vmem %s6, %s296
      %p298 = pneg %p198
      %p299 = pneg %p195
      %p300 = scmp.lt.s32.totalorder %s20, 1
      %s301 = scalar_select %p300, %s20, 1
      %s302 = scalar_lea.vmem %s7, %s301
      %p303 = pneg %p224
      %p304 = pneg %p221
      %p305 = scmp.lt.s32.totalorder %s20, 1
      %s306 = scalar_select %p305, %s20, 1
      %s307 = scalar_lea.vmem %s8, %s306
      %s308 = smul.u32 8, %s20
      %p309 = scmp.lt.s32.totalorder %s308, 15
      %s310 = scalar_select %p309, %s308, 15
      %s311 = smul.addr %s310, 4
      %s312 = scalar_lea.vmem %s0, %s311
      %s313 = smul.u32 8, %s20
      %s314 = smul.u32 8, %s20
      %p315 = scmp.lt.s32.totalorder %s314, 15
      %s316 = scalar_select %p315, %s314, 15
      %s317 = smul.addr %s316, 4
      %s318 = scalar_lea.vmem %s6, %s317
      %s319 = smul.u32 8, %s20
      %p320 = scmp.lt.s32.totalorder %s20, 1
      %s321 = scalar_select %p320, %s20, 1
      %s322 = scalar_lea.vmem %s7, %s321
      %p323 = scmp.lt.s32.totalorder %s20, 1
      %s324 = scalar_select %p323, %s20, 1
      %s325 = scalar_lea.vmem %s8, %s324
      %v327 = vld [vmem:[%s1] sm:$0x1]
      %v328 = vmul.f32 %v327, 0.0078125
      %v329 = vld [vmem:[%s2] sm:$0x1]
      %v330 = vmul.f32 %v329, 0.0078125
      %v331 = vmul.f32 %v328, %v328
      %v332 = vsub.f32 %v330, %v331
      %v333 = vmax.f32 %v332, 0.0
      %v334 = vadd.f32 %v333, 1e-05
      %v335 = vrsqrt.pop %v334
      %v336 = vmul.f32 %v335, %v334
      %v337 = vmul.f32 %v336, %v335
      %v338 = vmul.f32 0.5, %v337
      %v339 = vsub.f32 1.5, %v338
      %v340 = vmul.f32 %v335, %v339
      %vm341 = vweird.f32 %v334
      %vm342 = vweird.f32 %v335
      %vm343 = vmor %vm341, %vm342
      %v344 = vsel %vm343, %v335, %v340
      %v345 = vld [vmem:[%s3] sm:$0x1]
      %v346 = vmul.f32 %v344, %v345
      %v347 = vld [vmem:[%s4] sm:$0x1]
      %v348 = vmul.f32 %v328, %v346
      %v349 = vsub.f32 %v347, %v348
      %350 = vst [vmem:[#allocation2] sm:$0xf] 0
      %351 = vst [vmem:[#allocation2 + $0x4] sm:$0xf] 0
      %352 = vst [vmem:[#allocation2 + $0x8] sm:$0xf] 0
      %353 = vst [vmem:[#allocation2 + $0xc] sm:$0xf] 0
      %354 = vst [vmem:[#allocation2 + $0x10] sm:$0xf] 0
      %355 = vst [vmem:[#allocation2 + $0x14] sm:$0xf] 0
      %356 = vst [vmem:[#allocation2 + $0x18] sm:$0xf] 0
      %357 = vst [vmem:[#allocation2 + $0x1c] sm:$0xf] 0
      %358 = vst [vmem:[#allocation2 + $0x20] sm:$0xf] 0
      %359 = vst [vmem:[#allocation2 + $0x24] sm:$0xf] 0
      %360 = vst [vmem:[#allocation2 + $0x28] sm:$0xf] 0
      %361 = vst [vmem:[#allocation2 + $0x2c] sm:$0xf] 0
      %362 = vst [vmem:[#allocation2 + $0x30] sm:$0xf] 0
      %363 = vst [vmem:[#allocation2 + $0x34] sm:$0xf] 0
      %364 = vst [vmem:[#allocation2 + $0x38] sm:$0xf] 0
      %365 = vst [vmem:[#allocation2 + $0x3c] sm:$0xf] 0
      %366 = vst [vmem:[#allocation2 + $0x40] sm:$0xf] 0
      %367 = vst [vmem:[#allocation2 + $0x44] sm:$0xf] 0
      %368 = vst [vmem:[#allocation2 + $0x48] sm:$0xf] 0
      %369 = vst [vmem:[#allocation2 + $0x4c] sm:$0xf] 0
      %370 = vst [vmem:[#allocation3] sm:$0xff] 0.0
      %371 = vst [vmem:[#allocation3 + $0x8] sm:$0xff] 0.0
      %372 = vst [vmem:[#allocation3 + $0x10] sm:$0xff] 0.0
      %373 = vst [vmem:[#allocation3 + $0x18] sm:$0xff] 0.0
      %374 = vst [vmem:[#allocation3 + $0x20] sm:$0xff] 0.0
      %375 = vst [vmem:[#allocation3 + $0x28] sm:$0xff] 0.0
      %376 = vst [vmem:[#allocation3 + $0x30] sm:$0xff] 0.0
      %377 = vst [vmem:[#allocation3 + $0x38] sm:$0xff] 0.0
      %378 = vst [vmem:[#allocation3 + $0x40] sm:$0xff] 0.0
      %379 = vst [vmem:[#allocation3 + $0x48] sm:$0xff] 0.0
      %380 = vst [vmem:[#allocation3 + $0x50] sm:$0xff] 0.0
      %381 = vst [vmem:[#allocation3 + $0x58] sm:$0xff] 0.0
      %382 = vst [vmem:[#allocation3 + $0x60] sm:$0xff] 0.0
      %383 = vst [vmem:[#allocation3 + $0x68] sm:$0xff] 0.0
      %384 = vst [vmem:[#allocation3 + $0x70] sm:$0xff] 0.0
      %385 = vst [vmem:[#allocation3 + $0x78] sm:$0xff] 0.0
      %386 = vst [vmem:[#allocation3 + $0x80] sm:$0xff] 0.0
      %387 = vst [vmem:[#allocation3 + $0x88] sm:$0xff] 0.0
      %388 = vst [vmem:[#allocation3 + $0x90] sm:$0xff] 0.0
      %389 = vst [vmem:[#allocation3 + $0x98] sm:$0xff] 0.0
      %390 = vst [vmem:[#allocation3 + $0xa0] sm:$0xff] 0.0
      %391 = vst [vmem:[#allocation3 + $0xa8] sm:$0xff] 0.0
      %392 = vst [vmem:[#allocation3 + $0xb0] sm:$0xff] 0.0
      %393 = vst [vmem:[#allocation3 + $0xb8] sm:$0xff] 0.0
      %394 = vst [vmem:[#allocation3 + $0xc0] sm:$0xff] 0.0
      %395 = vst [vmem:[#allocation3 + $0xc8] sm:$0xff] 0.0
      %396 = vst [vmem:[#allocation3 + $0xd0] sm:$0xff] 0.0
      %397 = vst [vmem:[#allocation3 + $0xd8] sm:$0xff] 0.0
      %398 = vst [vmem:[#allocation3 + $0xe0] sm:$0xff] 0.0
      %399 = vst [vmem:[#allocation3 + $0xe8] sm:$0xff] 0.0
      %400 = vst [vmem:[#allocation3 + $0xf0] sm:$0xff] 0.0
      %401 = vst [vmem:[#allocation3 + $0xf8] sm:$0xff] 0.0
      %402 = vst [vmem:[#allocation3 + $0x100] sm:$0xff] 0.0
      %403 = vst [vmem:[#allocation3 + $0x108] sm:$0xff] 0.0
      %404 = vst [vmem:[#allocation3 + $0x110] sm:$0xff] 0.0
      %405 = vst [vmem:[#allocation3 + $0x118] sm:$0xff] 0.0
      %406 = vst [vmem:[#allocation3 + $0x120] sm:$0xff] 0.0
      %407 = vst [vmem:[#allocation3 + $0x128] sm:$0xff] 0.0
      %408 = vst [vmem:[#allocation3 + $0x130] sm:$0xff] 0.0
      %409 = vst [vmem:[#allocation3 + $0x138] sm:$0xff] 0.0
      %410 = vst [vmem:[#allocation3 + $0x140] sm:$0xff] 0.0
      %411 = vst [vmem:[#allocation3 + $0x148] sm:$0xff] 0.0
      %412 = vst [vmem:[#allocation3 + $0x150] sm:$0xff] 0.0
      %413 = vst [vmem:[#allocation3 + $0x158] sm:$0xff] 0.0
      %414 = vst [vmem:[#allocation3 + $0x160] sm:$0xff] 0.0
      %415 = vst [vmem:[#allocation3 + $0x168] sm:$0xff] 0.0
      %416 = vst [vmem:[#allocation3 + $0x170] sm:$0xff] 0.0
      %417 = vst [vmem:[#allocation3 + $0x178] sm:$0xff] 0.0
      %v418 = vld [vmem:[%s312] sm:$0xf]
      %v419 = vld [vmem:[%s312 + $0x4] sm:$0xf]
      %v420 = vld [vmem:[%s312 + $0x8] sm:$0xf]
      %v421 = vld [vmem:[%s312 + $0xc] sm:$0xf]
      %v422 = vld [vmem:[%s312 + $0x10] sm:$0xf]
      %v423 = vld [vmem:[%s312 + $0x14] sm:$0xf]
      %v424 = vld [vmem:[%s312 + $0x18] sm:$0xf]
      %v425 = vld [vmem:[%s312 + $0x1c] sm:$0xf]
      %v426 = vunpack.c.l.bf16 %v418
      %v427 = vunpack.c.l.bf16 %v419
      %v428 = vunpack.c.l.bf16 %v420
      %v429 = vunpack.c.l.bf16 %v421
      %v430 = vunpack.c.l.bf16 %v422
      %v431 = vunpack.c.l.bf16 %v423
      %v432 = vunpack.c.l.bf16 %v424
      %v433 = vunpack.c.l.bf16 %v425
      %v435 = vperm.slane %v346, 0
      %v437 = vmul.f32 %v426, %v435
      %v438 = vmul.f32 %v427, %v435
      %v439 = vmul.f32 %v428, %v435
      %v440 = vmul.f32 %v429, %v435
      %v441 = vmul.f32 %v430, %v435
      %v442 = vmul.f32 %v431, %v435
      %v443 = vmul.f32 %v432, %v435
      %v444 = vmul.f32 %v433, %v435
      %v446 = vperm.slane %v349, 0
      %v448 = vadd.f32 %v437, %v446
      %v449 = vadd.f32 %v438, %v446
      %v450 = vadd.f32 %v439, %v446
      %v451 = vadd.f32 %v440, %v446
      %v452 = vadd.f32 %v441, %v446
      %v453 = vadd.f32 %v442, %v446
      %v454 = vadd.f32 %v443, %v446
      %v455 = vadd.f32 %v444, %v446
      %v456 = vmax.f32 %v448, 0.0
      %v457 = vmax.f32 %v449, 0.0
      %v458 = vmax.f32 %v450, 0.0
      %v459 = vmax.f32 %v451, 0.0
      %v460 = vmax.f32 %v452, 0.0
      %v461 = vmax.f32 %v453, 0.0
      %v462 = vmax.f32 %v454, 0.0
      %v463 = vmax.f32 %v455, 0.0
      %v464 = vpack.c.bf16 %v456, %v456
      %v465 = vpack.c.bf16 %v457, %v457
      %v466 = vpack.c.bf16 %v458, %v458
      %v467 = vpack.c.bf16 %v459, %v459
      %v468 = vpack.c.bf16 %v460, %v460
      %v469 = vpack.c.bf16 %v461, %v461
      %v470 = vpack.c.bf16 %v462, %v462
      %v471 = vpack.c.bf16 %v463, %v463
      %v473 = vshrl.u32 %v464, 16
      %v475 = vrot.slane %v473, 7
      %v476 = vshll.u32 %v464, 16
      %v478 = vor.u32 %v475, %v476
      %v479 = vrot.slane %v475, 4
      %v481 = vshrl.u32 %v465, 16
      %v483 = vrot.slane %v481, 7
      %v484 = vshll.u32 %v465, 16
      %v486 = vor.u32 %v483, %v484
      %v487 = vrot.slane %v483, 4
      %v489 = vshrl.u32 %v466, 16
      %v491 = vrot.slane %v489, 7
      %v492 = vshll.u32 %v466, 16
      %v494 = vor.u32 %v491, %v492
      %v495 = vrot.slane %v491, 4
      %v497 = vshrl.u32 %v467, 16
      %v499 = vrot.slane %v497, 7
      %v500 = vshll.u32 %v467, 16
      %v502 = vor.u32 %v499, %v500
      %v503 = vrot.slane %v499, 4
      %v505 = vshrl.u32 %v468, 16
      %v507 = vrot.slane %v505, 7
      %v508 = vshll.u32 %v468, 16
      %v510 = vor.u32 %v507, %v508
      %v511 = vrot.slane %v507, 4
      %v513 = vshrl.u32 %v469, 16
      %v515 = vrot.slane %v513, 7
      %v516 = vshll.u32 %v469, 16
      %v518 = vor.u32 %v515, %v516
      %v519 = vrot.slane %v515, 4
      %v521 = vshrl.u32 %v470, 16
      %v523 = vrot.slane %v521, 7
      %v524 = vshll.u32 %v470, 16
      %v526 = vor.u32 %v523, %v524
      %v527 = vrot.slane %v523, 4
      %v529 = vshrl.u32 %v471, 16
      %v531 = vrot.slane %v529, 7
      %v532 = vshll.u32 %v471, 16
      %v534 = vor.u32 %v531, %v532
      %v535 = vrot.slane %v531, 4
      %s552 = scalar_lea.vmem [#allocation2], 8
      %vm553 = vcmask 1043456
      %vm554 = vsmask.f32 7938
      %vm555 = vmand %vm553, %vm554
      %v556 = vld [vmem:[%s552] sm:$0xf]
      %v557 = vsel %vm555, %v478, %v556
      %558 = vst [vmem:[%s552] sm:$0xf] %v557
      %vm559 = vcmask 1040384
      %vm560 = vsmask.f32 256
      %vm561 = vmand %vm559, %vm560
      %v562 = vld [vmem:[%s552 + $0x4] sm:$0x1]
      %v563 = vsel %vm561, %v479, %v562
      %564 = vst [vmem:[%s552 + $0x4] sm:$0x1] %v563
      %v565 = vld [vmem:[%s552 + $0x8] sm:$0xf]
      %v566 = vsel %vm555, %v486, %v565
      %567 = vst [vmem:[%s552 + $0x8] sm:$0xf] %v566
      %v568 = vld [vmem:[%s552 + $0xc] sm:$0x1]
      %v569 = vsel %vm561, %v487, %v568
      %570 = vst [vmem:[%s552 + $0xc] sm:$0x1] %v569
      %v571 = vld [vmem:[%s552 + $0x10] sm:$0xf]
      %v572 = vsel %vm555, %v494, %v571
      %573 = vst [vmem:[%s552 + $0x10] sm:$0xf] %v572
      %v574 = vld [vmem:[%s552 + $0x14] sm:$0x1]
      %v575 = vsel %vm561, %v495, %v574
      %576 = vst [vmem:[%s552 + $0x14] sm:$0x1] %v575
      %v577 = vld [vmem:[%s552 + $0x18] sm:$0xf]
      %v578 = vsel %vm555, %v502, %v577
      %579 = vst [vmem:[%s552 + $0x18] sm:$0xf] %v578
      %v580 = vld [vmem:[%s552 + $0x1c] sm:$0x1]
      %v581 = vsel %vm561, %v503, %v580
      %582 = vst [vmem:[%s552 + $0x1c] sm:$0x1] %v581
      %v583 = vld [vmem:[%s552 + $0x20] sm:$0xf]
      %v584 = vsel %vm555, %v510, %v583
      %585 = vst [vmem:[%s552 + $0x20] sm:$0xf] %v584
      %v586 = vld [vmem:[%s552 + $0x24] sm:$0x1]
      %v587 = vsel %vm561, %v511, %v586
      %588 = vst [vmem:[%s552 + $0x24] sm:$0x1] %v587
      %v589 = vld [vmem:[%s552 + $0x28] sm:$0xf]
      %v590 = vsel %vm555, %v518, %v589
      %591 = vst [vmem:[%s552 + $0x28] sm:$0xf] %v590
      %v592 = vld [vmem:[%s552 + $0x2c] sm:$0x1]
      %v593 = vsel %vm561, %v519, %v592
      %594 = vst [vmem:[%s552 + $0x2c] sm:$0x1] %v593
      %v595 = vld [vmem:[%s552 + $0x30] sm:$0xf]
      %v596 = vsel %vm555, %v526, %v595
      %597 = vst [vmem:[%s552 + $0x30] sm:$0xf] %v596
      %v598 = vld [vmem:[%s552 + $0x34] sm:$0x1]
      %v599 = vsel %vm561, %v527, %v598
      %600 = vst [vmem:[%s552 + $0x34] sm:$0x1] %v599
      %v601 = vld [vmem:[%s552 + $0x38] sm:$0xf]
      %v602 = vsel %vm555, %v534, %v601
      %603 = vst [vmem:[%s552 + $0x38] sm:$0xf] %v602
      %v604 = vld [vmem:[%s552 + $0x3c] sm:$0x1]
      %v605 = vsel %vm561, %v535, %v604
      %606 = vst [vmem:[%s552 + $0x3c] sm:$0x1] %v605
      %v607 = vld [vmem:[#allocation2] sm:$0xf]
      %v608 = vld [vmem:[#allocation2 + $0x4] sm:$0xf]
      %v609 = vld [vmem:[#allocation2 + $0x8] sm:$0xf]
      %v610 = vld [vmem:[#allocation2 + $0xc] sm:$0xf]
      %v611 = vld [vmem:[#allocation2 + $0x10] sm:$0xf]
      %v612 = vld [vmem:[#allocation2 + $0x14] sm:$0xf]
      %v613 = vld [vmem:[#allocation2 + $0x18] sm:$0xf]
      %v614 = vld [vmem:[#allocation2 + $0x1c] sm:$0xf]
      %v615 = vld [vmem:[#allocation2 + $0x20] sm:$0xf]
      %v616 = vld [vmem:[#allocation2 + $0x24] sm:$0xf]
      %v617 = vld [vmem:[#allocation2 + $0x28] sm:$0xf]
      %v618 = vld [vmem:[#allocation2 + $0x2c] sm:$0xf]
      %v619 = vld [vmem:[#allocation2 + $0x30] sm:$0xf]
      %v620 = vld [vmem:[#allocation2 + $0x34] sm:$0xf]
      %v621 = vld [vmem:[#allocation2 + $0x38] sm:$0xf]
      %v622 = vld [vmem:[#allocation2 + $0x3c] sm:$0xf]
      %v623 = vld [vmem:[#allocation3] sm:$0xff]
      %v624 = vld [vmem:[#allocation3 + $0x8] sm:$0xff]
      %v625 = vld [vmem:[#allocation3 + $0x10] sm:$0xff]
      %v626 = vld [vmem:[#allocation3 + $0x18] sm:$0xff]
      %v627 = vld [vmem:[#allocation3 + $0x20] sm:$0xff]
      %v628 = vld [vmem:[#allocation3 + $0x28] sm:$0xff]
      %v629 = vld [vmem:[#allocation3 + $0x30] sm:$0xff]
      %v630 = vld [vmem:[#allocation3 + $0x38] sm:$0xff]
      %v631 = vld [vmem:[#allocation3 + $0x40] sm:$0xff]
      %v632 = vld [vmem:[#allocation3 + $0x48] sm:$0xff]
      %v633 = vld [vmem:[#allocation3 + $0x50] sm:$0xff]
      %v634 = vld [vmem:[#allocation3 + $0x58] sm:$0xff]
      %v635 = vld [vmem:[#allocation3 + $0x60] sm:$0xff]
      %v636 = vld [vmem:[#allocation3 + $0x68] sm:$0xff]
      %v637 = vld [vmem:[#allocation3 + $0x70] sm:$0xff]
      %v638 = vld [vmem:[#allocation3 + $0x78] sm:$0xff]
      %v639 = vld [vmem:[%s5] sm:$0xf]
      %v640 = vld [vmem:[%s5 + $0x4] sm:$0xf]
      %v641 = vld [vmem:[%s5 + $0x8] sm:$0xf]
      %v642 = vld [vmem:[%s5 + $0xc] sm:$0xf]
      %v643 = vld [vmem:[%s5 + $0x10] sm:$0xf]
      %v644 = vld [vmem:[%s5 + $0x14] sm:$0xf]
      %v645 = vld [vmem:[%s5 + $0x18] sm:$0xf]
      %v646 = vld [vmem:[%s5 + $0x1c] sm:$0xf]
      %v647 = vld [vmem:[%s5 + $0x20] sm:$0xf]
      %v648 = vld [vmem:[%s5 + $0x24] sm:$0xf]
      %v649 = vld [vmem:[%s5 + $0x28] sm:$0xf]
      %v650 = vld [vmem:[%s5 + $0x2c] sm:$0xf]
      %v651 = vld [vmem:[%s5 + $0x30] sm:$0xf]
      %v652 = vld [vmem:[%s5 + $0x34] sm:$0xf]
      %v653 = vld [vmem:[%s5 + $0x38] sm:$0xf]
      %v654 = vld [vmem:[%s5 + $0x3c] sm:$0xf]
      %v671 = vunpack.c.l.b16 %v607
      %v672 = vunpack.c.l.b16 %v608
      %v673 = vunpack.c.l.b16 %v609
      %v674 = vunpack.c.l.b16 %v610
      %v675 = vunpack.c.l.b16 %v611
      %v676 = vunpack.c.l.b16 %v612
      %v677 = vunpack.c.l.b16 %v613
      %v678 = vunpack.c.l.b16 %v614
      %v679 = vunpack.c.l.b16 %v615
      %v680 = vunpack.c.l.b16 %v616
      %v681 = vunpack.c.l.b16 %v617
      %v682 = vunpack.c.l.b16 %v618
      %v683 = vunpack.c.l.b16 %v619
      %v684 = vunpack.c.l.b16 %v620
      %v685 = vunpack.c.l.b16 %v621
      %v686 = vunpack.c.l.b16 %v622
      %v687 = vpack.c.b16 %v672, %v671
      %v688 = vpack.c.b16 %v674, %v673
      %v689 = vpack.c.b16 %v676, %v675
      %v690 = vpack.c.b16 %v678, %v677
      %v691 = vpack.c.b16 %v680, %v679
      %v692 = vpack.c.b16 %v682, %v681
      %v693 = vpack.c.b16 %v684, %v683
      %v694 = vpack.c.b16 %v686, %v685
      %v719 = vunpack.c.l.b16 %v639
      %v720 = vunpack.c.l.b16 %v640
      %v721 = vunpack.c.l.b16 %v641
      %v722 = vunpack.c.l.b16 %v642
      %v723 = vunpack.c.l.b16 %v643
      %v724 = vunpack.c.l.b16 %v644
      %v725 = vunpack.c.l.b16 %v645
      %v726 = vunpack.c.l.b16 %v646
      %v727 = vunpack.c.l.b16 %v647
      %v728 = vunpack.c.l.b16 %v648
      %v729 = vunpack.c.l.b16 %v649
      %v730 = vunpack.c.l.b16 %v650
      %v731 = vunpack.c.l.b16 %v651
      %v732 = vunpack.c.l.b16 %v652
      %v733 = vunpack.c.l.b16 %v653
      %v734 = vunpack.c.l.b16 %v654
      %v735 = vpack.c.b16 %v720, %v719
      %v736 = vpack.c.b16 %v722, %v721
      %v737 = vpack.c.b16 %v724, %v723
      %v738 = vpack.c.b16 %v726, %v725
      %v739 = vpack.c.b16 %v728, %v727
      %v740 = vpack.c.b16 %v730, %v729
      %v741 = vpack.c.b16 %v732, %v731
      %v742 = vpack.c.b16 %v734, %v733
      %751 = vmatpush.bf16.msra.mxu0 %v742
      %752 = vmatpush.bf16.msra.mxu0 %v741
      %753 = vmatpush.bf16.msra.mxu0 %v740
      %754 = vmatpush.bf16.msra.mxu0 %v739
      %755 = vmatpush.bf16.msra.mxu0 %v738
      %756 = vmatpush.bf16.msra.mxu0 %v737
      %757 = vmatpush.bf16.msra.mxu0 %v736
      %758 = vmatpush.bf16.msra.mxu0 %v735
      %759 = vmatmul.bf16.gmra.mxu0 %v687
      %v760 = vpop.f32.mrf.mxu0
      %v761 = vadd.f32 0.0, %v760
      %v762 = vpop.f32.mrf.mxu0
      %v763 = vadd.f32 0.0, %v762
      %764 = vmatmul.bf16.gmra.mxu0 %v688
      %v765 = vpop.f32.mrf.mxu0
      %v766 = vadd.f32 0.0, %v765
      %v767 = vpop.f32.mrf.mxu0
      %v768 = vadd.f32 0.0, %v767
      %769 = vmatmul.bf16.gmra.mxu0 %v689
      %v770 = vpop.f32.mrf.mxu0
      %v771 = vadd.f32 0.0, %v770
      %v772 = vpop.f32.mrf.mxu0
      %v773 = vadd.f32 0.0, %v772
      %774 = vmatmul.bf16.gmra.mxu0 %v690
      %v775 = vpop.f32.mrf.mxu0
      %v776 = vadd.f32 0.0, %v775
      %v777 = vpop.f32.mrf.mxu0
      %v778 = vadd.f32 0.0, %v777
      %779 = vmatmul.bf16.gmra.mxu0 %v691
      %v780 = vpop.f32.mrf.mxu0
      %v781 = vadd.f32 0.0, %v780
      %v782 = vpop.f32.mrf.mxu0
      %v783 = vadd.f32 0.0, %v782
      %784 = vmatmul.bf16.gmra.mxu0 %v692
      %v785 = vpop.f32.mrf.mxu0
      %v786 = vadd.f32 0.0, %v785
      %v787 = vpop.f32.mrf.mxu0
      %v788 = vadd.f32 0.0, %v787
      %789 = vmatmul.bf16.gmra.mxu0 %v693
      %v790 = vpop.f32.mrf.mxu0
      %v791 = vadd.f32 0.0, %v790
      %v792 = vpop.f32.mrf.mxu0
      %v793 = vadd.f32 0.0, %v792
      %794 = vmatmul.bf16.gmra.mxu0 %v694
      %v795 = vpop.f32.mrf.mxu0
      %v796 = vadd.f32 0.0, %v795
      %v797 = vpop.f32.mrf.mxu0
      %v798 = vadd.f32 0.0, %v797
      %799 = vdwg.mxu0
      %v800 = vadd.f32 %v623, %v761
      %v801 = vadd.f32 %v624, %v763
      %v802 = vadd.f32 %v625, %v766
      %v803 = vadd.f32 %v626, %v768
      %v804 = vadd.f32 %v627, %v771
      %v805 = vadd.f32 %v628, %v773
      %v806 = vadd.f32 %v629, %v776
      %v807 = vadd.f32 %v630, %v778
      %v808 = vadd.f32 %v631, %v781
      %v809 = vadd.f32 %v632, %v783
      %v810 = vadd.f32 %v633, %v786
      %v811 = vadd.f32 %v634, %v788
      %v812 = vadd.f32 %v635, %v791
      %v813 = vadd.f32 %v636, %v793
      %v814 = vadd.f32 %v637, %v796
      %v815 = vadd.f32 %v638, %v798
      %816 = vst [vmem:[#allocation3] sm:$0xff] %v800
      %817 = vst [vmem:[#allocation3 + $0x8] sm:$0xff] %v801
      %818 = vst [vmem:[#allocation3 + $0x10] sm:$0xff] %v802
      %819 = vst [vmem:[#allocation3 + $0x18] sm:$0xff] %v803
      %820 = vst [vmem:[#allocation3 + $0x20] sm:$0xff] %v804
      %821 = vst [vmem:[#allocation3 + $0x28] sm:$0xff] %v805
      %822 = vst [vmem:[#allocation3 + $0x30] sm:$0xff] %v806
      %823 = vst [vmem:[#allocation3 + $0x38] sm:$0xff] %v807
      %824 = vst [vmem:[#allocation3 + $0x40] sm:$0xff] %v808
      %825 = vst [vmem:[#allocation3 + $0x48] sm:$0xff] %v809
      %826 = vst [vmem:[#allocation3 + $0x50] sm:$0xff] %v810
      %827 = vst [vmem:[#allocation3 + $0x58] sm:$0xff] %v811
      %828 = vst [vmem:[#allocation3 + $0x60] sm:$0xff] %v812
      %829 = vst [vmem:[#allocation3 + $0x68] sm:$0xff] %v813
      %830 = vst [vmem:[#allocation3 + $0x70] sm:$0xff] %v814
      %831 = vst [vmem:[#allocation3 + $0x78] sm:$0xff] %v815
      %s832 = scalar_lea.vmem [#allocation3], 128
      %v833 = vld [vmem:[%s832] sm:$0xff]
      %v834 = vld [vmem:[%s832 + $0x8] sm:$0xff]
      %v835 = vld [vmem:[%s832 + $0x10] sm:$0xff]
      %v836 = vld [vmem:[%s832 + $0x18] sm:$0xff]
      %v837 = vld [vmem:[%s832 + $0x20] sm:$0xff]
      %v838 = vld [vmem:[%s832 + $0x28] sm:$0xff]
      %v839 = vld [vmem:[%s832 + $0x30] sm:$0xff]
      %v840 = vld [vmem:[%s832 + $0x38] sm:$0xff]
      %v841 = vld [vmem:[%s832 + $0x40] sm:$0xff]
      %v842 = vld [vmem:[%s832 + $0x48] sm:$0xff]
      %v843 = vld [vmem:[%s832 + $0x50] sm:$0xff]
      %v844 = vld [vmem:[%s832 + $0x58] sm:$0xff]
      %v845 = vld [vmem:[%s832 + $0x60] sm:$0xff]
      %v846 = vld [vmem:[%s832 + $0x68] sm:$0xff]
      %v847 = vld [vmem:[%s832 + $0x70] sm:$0xff]
      %v848 = vld [vmem:[%s832 + $0x78] sm:$0xff]
      %s849 = scalar_lea.vmem %s5, 64
      %v850 = vld [vmem:[%s849] sm:$0xf]
      %v851 = vld [vmem:[%s849 + $0x4] sm:$0xf]
      %v852 = vld [vmem:[%s849 + $0x8] sm:$0xf]
      %v853 = vld [vmem:[%s849 + $0xc] sm:$0xf]
      %v854 = vld [vmem:[%s849 + $0x10] sm:$0xf]
      %v855 = vld [vmem:[%s849 + $0x14] sm:$0xf]
      %v856 = vld [vmem:[%s849 + $0x18] sm:$0xf]
      %v857 = vld [vmem:[%s849 + $0x1c] sm:$0xf]
      %v858 = vld [vmem:[%s849 + $0x20] sm:$0xf]
      %v859 = vld [vmem:[%s849 + $0x24] sm:$0xf]
      %v860 = vld [vmem:[%s849 + $0x28] sm:$0xf]
      %v861 = vld [vmem:[%s849 + $0x2c] sm:$0xf]
      %v862 = vld [vmem:[%s849 + $0x30] sm:$0xf]
      %v863 = vld [vmem:[%s849 + $0x34] sm:$0xf]
      %v864 = vld [vmem:[%s849 + $0x38] sm:$0xf]
      %v865 = vld [vmem:[%s849 + $0x3c] sm:$0xf]
      %v882 = vunpack.c.l.b16 %v850
      %v883 = vunpack.c.l.b16 %v851
      %v884 = vunpack.c.l.b16 %v852
      %v885 = vunpack.c.l.b16 %v853
      %v886 = vunpack.c.l.b16 %v854
      %v887 = vunpack.c.l.b16 %v855
      %v888 = vunpack.c.l.b16 %v856
      %v889 = vunpack.c.l.b16 %v857
      %v890 = vunpack.c.l.b16 %v858
      %v891 = vunpack.c.l.b16 %v859
      %v892 = vunpack.c.l.b16 %v860
      %v893 = vunpack.c.l.b16 %v861
      %v894 = vunpack.c.l.b16 %v862
      %v895 = vunpack.c.l.b16 %v863
      %v896 = vunpack.c.l.b16 %v864
      %v897 = vunpack.c.l.b16 %v865
      %v898 = vpack.c.b16 %v883, %v882
      %v899 = vpack.c.b16 %v885, %v884
      %v900 = vpack.c.b16 %v887, %v886
      %v901 = vpack.c.b16 %v889, %v888
      %v902 = vpack.c.b16 %v891, %v890
      %v903 = vpack.c.b16 %v893, %v892
      %v904 = vpack.c.b16 %v895, %v894
      %v905 = vpack.c.b16 %v897, %v896
      %914 = vmatpush.bf16.msra.mxu0 %v905
      %915 = vmatpush.bf16.msra.mxu0 %v904
      %916 = vmatpush.bf16.msra.mxu0 %v903
      %917 = vmatpush.bf16.msra.mxu0 %v902
      %918 = vmatpush.bf16.msra.mxu0 %v901
      %919 = vmatpush.bf16.msra.mxu0 %v900
      %920 = vmatpush.bf16.msra.mxu0 %v899
      %921 = vmatpush.bf16.msra.mxu0 %v898
      %922 = vmatmul.bf16.gmra.mxu0 %v687
      %v923 = vpop.f32.mrf.mxu0
      %v924 = vadd.f32 0.0, %v923
      %v925 = vpop.f32.mrf.mxu0
      %v926 = vadd.f32 0.0, %v925
      %927 = vmatmul.bf16.gmra.mxu0 %v688
      %v928 = vpop.f32.mrf.mxu0
      %v929 = vadd.f32 0.0, %v928
      %v930 = vpop.f32.mrf.mxu0
      %v931 = vadd.f32 0.0, %v930
      %932 = vmatmul.bf16.gmra.mxu0 %v689
      %v933 = vpop.f32.mrf.mxu0
      %v934 = vadd.f32 0.0, %v933
      %v935 = vpop.f32.mrf.mxu0
      %v936 = vadd.f32 0.0, %v935
      %937 = vmatmul.bf16.gmra.mxu0 %v690
      %v938 = vpop.f32.mrf.mxu0
      %v939 = vadd.f32 0.0, %v938
      %v940 = vpop.f32.mrf.mxu0
      %v941 = vadd.f32 0.0, %v940
      %942 = vmatmul.bf16.gmra.mxu0 %v691
      %v943 = vpop.f32.mrf.mxu0
      %v944 = vadd.f32 0.0, %v943
      %v945 = vpop.f32.mrf.mxu0
      %v946 = vadd.f32 0.0, %v945
      %947 = vmatmul.bf16.gmra.mxu0 %v692
      %v948 = vpop.f32.mrf.mxu0
      %v949 = vadd.f32 0.0, %v948
      %v950 = vpop.f32.mrf.mxu0
      %v951 = vadd.f32 0.0, %v950
      %952 = vmatmul.bf16.gmra.mxu0 %v693
      %v953 = vpop.f32.mrf.mxu0
      %v954 = vadd.f32 0.0, %v953
      %v955 = vpop.f32.mrf.mxu0
      %v956 = vadd.f32 0.0, %v955
      %957 = vmatmul.bf16.gmra.mxu0 %v694
      %v958 = vpop.f32.mrf.mxu0
      %v959 = vadd.f32 0.0, %v958
      %v960 = vpop.f32.mrf.mxu0
      %v961 = vadd.f32 0.0, %v960
      %962 = vdwg.mxu0
      %v963 = vadd.f32 %v833, %v924
      %v964 = vadd.f32 %v834, %v926
      %v965 = vadd.f32 %v835, %v929
      %v966 = vadd.f32 %v836, %v931
      %v967 = vadd.f32 %v837, %v934
      %v968 = vadd.f32 %v838, %v936
      %v969 = vadd.f32 %v839, %v939
      %v970 = vadd.f32 %v840, %v941
      %v971 = vadd.f32 %v841, %v944
      %v972 = vadd.f32 %v842, %v946
      %v973 = vadd.f32 %v843, %v949
      %v974 = vadd.f32 %v844, %v951
      %v975 = vadd.f32 %v845, %v954
      %v976 = vadd.f32 %v846, %v956
      %v977 = vadd.f32 %v847, %v959
      %v978 = vadd.f32 %v848, %v961
      %979 = vst [vmem:[%s832] sm:$0xff] %v963
      %980 = vst [vmem:[%s832 + $0x8] sm:$0xff] %v964
      %981 = vst [vmem:[%s832 + $0x10] sm:$0xff] %v965
      %982 = vst [vmem:[%s832 + $0x18] sm:$0xff] %v966
      %983 = vst [vmem:[%s832 + $0x20] sm:$0xff] %v967
      %984 = vst [vmem:[%s832 + $0x28] sm:$0xff] %v968
      %985 = vst [vmem:[%s832 + $0x30] sm:$0xff] %v969
      %986 = vst [vmem:[%s832 + $0x38] sm:$0xff] %v970
      %987 = vst [vmem:[%s832 + $0x40] sm:$0xff] %v971
      %988 = vst [vmem:[%s832 + $0x48] sm:$0xff] %v972
      %989 = vst [vmem:[%s832 + $0x50] sm:$0xff] %v973
      %990 = vst [vmem:[%s832 + $0x58] sm:$0xff] %v974
      %991 = vst [vmem:[%s832 + $0x60] sm:$0xff] %v975
      %992 = vst [vmem:[%s832 + $0x68] sm:$0xff] %v976
      %993 = vst [vmem:[%s832 + $0x70] sm:$0xff] %v977
      %994 = vst [vmem:[%s832 + $0x78] sm:$0xff] %v978
      %s995 = scalar_lea.vmem [#allocation3], 256
      %v996 = vld [vmem:[%s995] sm:$0xff]
      %v997 = vld [vmem:[%s995 + $0x8] sm:$0xff]
      %v998 = vld [vmem:[%s995 + $0x10] sm:$0xff]
      %v999 = vld [vmem:[%s995 + $0x18] sm:$0xff]
      %v1000 = vld [vmem:[%s995 + $0x20] sm:$0xff]
      %v1001 = vld [vmem:[%s995 + $0x28] sm:$0xff]
      %v1002 = vld [vmem:[%s995 + $0x30] sm:$0xff]
      %v1003 = vld [vmem:[%s995 + $0x38] sm:$0xff]
      %v1004 = vld [vmem:[%s995 + $0x40] sm:$0xff]
      %v1005 = vld [vmem:[%s995 + $0x48] sm:$0xff]
      %v1006 = vld [vmem:[%s995 + $0x50] sm:$0xff]
      %v1007 = vld [vmem:[%s995 + $0x58] sm:$0xff]
      %v1008 = vld [vmem:[%s995 + $0x60] sm:$0xff]
      %v1009 = vld [vmem:[%s995 + $0x68] sm:$0xff]
      %v1010 = vld [vmem:[%s995 + $0x70] sm:$0xff]
      %v1011 = vld [vmem:[%s995 + $0x78] sm:$0xff]
      %s1012 = scalar_lea.vmem %s5, 128
      %v1013 = vld [vmem:[%s1012] sm:$0xf]
      %v1014 = vld [vmem:[%s1012 + $0x4] sm:$0xf]
      %v1015 = vld [vmem:[%s1012 + $0x8] sm:$0xf]
      %v1016 = vld [vmem:[%s1012 + $0xc] sm:$0xf]
      %v1017 = vld [vmem:[%s1012 + $0x10] sm:$0xf]
      %v1018 = vld [vmem:[%s1012 + $0x14] sm:$0xf]
      %v1019 = vld [vmem:[%s1012 + $0x18] sm:$0xf]
      %v1020 = vld [vmem:[%s1012 + $0x1c] sm:$0xf]
      %v1021 = vld [vmem:[%s1012 + $0x20] sm:$0xf]
      %v1022 = vld [vmem:[%s1012 + $0x24] sm:$0xf]
      %v1023 = vld [vmem:[%s1012 + $0x28] sm:$0xf]
      %v1024 = vld [vmem:[%s1012 + $0x2c] sm:$0xf]
      %v1025 = vld [vmem:[%s1012 + $0x30] sm:$0xf]
      %v1026 = vld [vmem:[%s1012 + $0x34] sm:$0xf]
      %v1027 = vld [vmem:[%s1012 + $0x38] sm:$0xf]
      %v1028 = vld [vmem:[%s1012 + $0x3c] sm:$0xf]
      %v1045 = vunpack.c.l.b16 %v1013
      %v1046 = vunpack.c.l.b16 %v1014
      %v1047 = vunpack.c.l.b16 %v1015
      %v1048 = vunpack.c.l.b16 %v1016
      %v1049 = vunpack.c.l.b16 %v1017
      %v1050 = vunpack.c.l.b16 %v1018
      %v1051 = vunpack.c.l.b16 %v1019
      %v1052 = vunpack.c.l.b16 %v1020
      %v1053 = vunpack.c.l.b16 %v1021
      %v1054 = vunpack.c.l.b16 %v1022
      %v1055 = vunpack.c.l.b16 %v1023
      %v1056 = vunpack.c.l.b16 %v1024
      %v1057 = vunpack.c.l.b16 %v1025
      %v1058 = vunpack.c.l.b16 %v1026
      %v1059 = vunpack.c.l.b16 %v1027
      %v1060 = vunpack.c.l.b16 %v1028
      %v1061 = vpack.c.b16 %v1046, %v1045
      %v1062 = vpack.c.b16 %v1048, %v1047
      %v1063 = vpack.c.b16 %v1050, %v1049
      %v1064 = vpack.c.b16 %v1052, %v1051
      %v1065 = vpack.c.b16 %v1054, %v1053
      %v1066 = vpack.c.b16 %v1056, %v1055
      %v1067 = vpack.c.b16 %v1058, %v1057
      %v1068 = vpack.c.b16 %v1060, %v1059
      %1077 = vmatpush.bf16.msra.mxu0 %v1068
      %1078 = vmatpush.bf16.msra.mxu0 %v1067
      %1079 = vmatpush.bf16.msra.mxu0 %v1066
      %1080 = vmatpush.bf16.msra.mxu0 %v1065
      %1081 = vmatpush.bf16.msra.mxu0 %v1064
      %1082 = vmatpush.bf16.msra.mxu0 %v1063
      %1083 = vmatpush.bf16.msra.mxu0 %v1062
      %1084 = vmatpush.bf16.msra.mxu0 %v1061
      %1085 = vmatmul.bf16.gmra.mxu0 %v687
      %v1086 = vpop.f32.mrf.mxu0
      %v1087 = vadd.f32 0.0, %v1086
      %v1088 = vpop.f32.mrf.mxu0
      %v1089 = vadd.f32 0.0, %v1088
      %1090 = vmatmul.bf16.gmra.mxu0 %v688
      %v1091 = vpop.f32.mrf.mxu0
      %v1092 = vadd.f32 0.0, %v1091
      %v1093 = vpop.f32.mrf.mxu0
      %v1094 = vadd.f32 0.0, %v1093
      %1095 = vmatmul.bf16.gmra.mxu0 %v689
      %v1096 = vpop.f32.mrf.mxu0
      %v1097 = vadd.f32 0.0, %v1096
      %v1098 = vpop.f32.mrf.mxu0
      %v1099 = vadd.f32 0.0, %v1098
      %1100 = vmatmul.bf16.gmra.mxu0 %v690
      %v1101 = vpop.f32.mrf.mxu0
      %v1102 = vadd.f32 0.0, %v1101
      %v1103 = vpop.f32.mrf.mxu0
      %v1104 = vadd.f32 0.0, %v1103
      %1105 = vmatmul.bf16.gmra.mxu0 %v691
      %v1106 = vpop.f32.mrf.mxu0
      %v1107 = vadd.f32 0.0, %v1106
      %v1108 = vpop.f32.mrf.mxu0
      %v1109 = vadd.f32 0.0, %v1108
      %1110 = vmatmul.bf16.gmra.mxu0 %v692
      %v1111 = vpop.f32.mrf.mxu0
      %v1112 = vadd.f32 0.0, %v1111
      %v1113 = vpop.f32.mrf.mxu0
      %v1114 = vadd.f32 0.0, %v1113
      %1115 = vmatmul.bf16.gmra.mxu0 %v693
      %v1116 = vpop.f32.mrf.mxu0
      %v1117 = vadd.f32 0.0, %v1116
      %v1118 = vpop.f32.mrf.mxu0
      %v1119 = vadd.f32 0.0, %v1118
      %1120 = vmatmul.bf16.gmra.mxu0 %v694
      %v1121 = vpop.f32.mrf.mxu0
      %v1122 = vadd.f32 0.0, %v1121
      %v1123 = vpop.f32.mrf.mxu0
      %v1124 = vadd.f32 0.0, %v1123
      %1125 = vdwg.mxu0
      %v1126 = vadd.f32 %v996, %v1087
      %v1127 = vadd.f32 %v997, %v1089
      %v1128 = vadd.f32 %v998, %v1092
      %v1129 = vadd.f32 %v999, %v1094
      %v1130 = vadd.f32 %v1000, %v1097
      %v1131 = vadd.f32 %v1001, %v1099
      %v1132 = vadd.f32 %v1002, %v1102
      %v1133 = vadd.f32 %v1003, %v1104
      %v1134 = vadd.f32 %v1004, %v1107
      %v1135 = vadd.f32 %v1005, %v1109
      %v1136 = vadd.f32 %v1006, %v1112
      %v1137 = vadd.f32 %v1007, %v1114
      %v1138 = vadd.f32 %v1008, %v1117
      %v1139 = vadd.f32 %v1009, %v1119
      %v1140 = vadd.f32 %v1010, %v1122
      %v1141 = vadd.f32 %v1011, %v1124
      %1142 = vst [vmem:[%s995] sm:$0xff] %v1126
      %1143 = vst [vmem:[%s995 + $0x8] sm:$0xff] %v1127
      %1144 = vst [vmem:[%s995 + $0x10] sm:$0xff] %v1128
      %1145 = vst [vmem:[%s995 + $0x18] sm:$0xff] %v1129
      %1146 = vst [vmem:[%s995 + $0x20] sm:$0xff] %v1130
      %1147 = vst [vmem:[%s995 + $0x28] sm:$0xff] %v1131
      %1148 = vst [vmem:[%s995 + $0x30] sm:$0xff] %v1132
      %1149 = vst [vmem:[%s995 + $0x38] sm:$0xff] %v1133
      %1150 = vst [vmem:[%s995 + $0x40] sm:$0xff] %v1134
      %1151 = vst [vmem:[%s995 + $0x48] sm:$0xff] %v1135
      %1152 = vst [vmem:[%s995 + $0x50] sm:$0xff] %v1136
      %1153 = vst [vmem:[%s995 + $0x58] sm:$0xff] %v1137
      %1154 = vst [vmem:[%s995 + $0x60] sm:$0xff] %v1138
      %1155 = vst [vmem:[%s995 + $0x68] sm:$0xff] %v1139
      %1156 = vst [vmem:[%s995 + $0x70] sm:$0xff] %v1140
      %1157 = vst [vmem:[%s995 + $0x78] sm:$0xff] %v1141
      %v1158 = vld [vmem:[%s552] sm:$0xf]
      %v1159 = vld [vmem:[%s552 + $0x4] sm:$0xf]
      %v1160 = vld [vmem:[%s552 + $0x8] sm:$0xf]
      %v1161 = vld [vmem:[%s552 + $0xc] sm:$0xf]
      %v1162 = vld [vmem:[%s552 + $0x10] sm:$0xf]
      %v1163 = vld [vmem:[%s552 + $0x14] sm:$0xf]
      %v1164 = vld [vmem:[%s552 + $0x18] sm:$0xf]
      %v1165 = vld [vmem:[%s552 + $0x1c] sm:$0xf]
      %v1166 = vld [vmem:[%s552 + $0x20] sm:$0xf]
      %v1167 = vld [vmem:[%s552 + $0x24] sm:$0xf]
      %v1168 = vld [vmem:[%s552 + $0x28] sm:$0xf]
      %v1169 = vld [vmem:[%s552 + $0x2c] sm:$0xf]
      %v1170 = vld [vmem:[%s552 + $0x30] sm:$0xf]
      %v1171 = vld [vmem:[%s552 + $0x34] sm:$0xf]
      %v1172 = vld [vmem:[%s552 + $0x38] sm:$0xf]
      %v1173 = vld [vmem:[%s552 + $0x3c] sm:$0xf]
      %v1174 = vld [vmem:[#allocation3] sm:$0xff]
      %v1175 = vld [vmem:[#allocation3 + $0x8] sm:$0xff]
      %v1176 = vld [vmem:[#allocation3 + $0x10] sm:$0xff]
      %v1177 = vld [vmem:[#allocation3 + $0x18] sm:$0xff]
      %v1178 = vld [vmem:[#allocation3 + $0x20] sm:$0xff]
      %v1179 = vld [vmem:[#allocation3 + $0x28] sm:$0xff]
      %v1180 = vld [vmem:[#allocation3 + $0x30] sm:$0xff]
      %v1181 = vld [vmem:[#allocation3 + $0x38] sm:$0xff]
      %v1182 = vld [vmem:[#allocation3 + $0x40] sm:$0xff]
      %v1183 = vld [vmem:[#allocation3 + $0x48] sm:$0xff]
      %v1184 = vld [vmem:[#allocation3 + $0x50] sm:$0xff]
      %v1185 = vld [vmem:[#allocation3 + $0x58] sm:$0xff]
      %v1186 = vld [vmem:[#allocation3 + $0x60] sm:$0xff]
      %v1187 = vld [vmem:[#allocation3 + $0x68] sm:$0xff]
      %v1188 = vld [vmem:[#allocation3 + $0x70] sm:$0xff]
      %v1189 = vld [vmem:[#allocation3 + $0x78] sm:$0xff]
      %s1190 = scalar_lea.vmem %s5, 192
      %v1191 = vld [vmem:[%s1190] sm:$0xf]
      %v1192 = vld [vmem:[%s1190 + $0x4] sm:$0xf]
      %v1193 = vld [vmem:[%s1190 + $0x8] sm:$0xf]
      %v1194 = vld [vmem:[%s1190 + $0xc] sm:$0xf]
      %v1195 = vld [vmem:[%s1190 + $0x10] sm:$0xf]
      %v1196 = vld [vmem:[%s1190 + $0x14] sm:$0xf]
      %v1197 = vld [vmem:[%s1190 + $0x18] sm:$0xf]
      %v1198 = vld [vmem:[%s1190 + $0x1c] sm:$0xf]
      %v1199 = vld [vmem:[%s1190 + $0x20] sm:$0xf]
      %v1200 = vld [vmem:[%s1190 + $0x24] sm:$0xf]
      %v1201 = vld [vmem:[%s1190 + $0x28] sm:$0xf]
      %v1202 = vld [vmem:[%s1190 + $0x2c] sm:$0xf]
      %v1203 = vld [vmem:[%s1190 + $0x30] sm:$0xf]
      %v1204 = vld [vmem:[%s1190 + $0x34] sm:$0xf]
      %v1205 = vld [vmem:[%s1190 + $0x38] sm:$0xf]
      %v1206 = vld [vmem:[%s1190 + $0x3c] sm:$0xf]
      %v1223 = vunpack.c.l.b16 %v1158
      %v1224 = vunpack.c.l.b16 %v1159
      %v1225 = vunpack.c.l.b16 %v1160
      %v1226 = vunpack.c.l.b16 %v1161
      %v1227 = vunpack.c.l.b16 %v1162
      %v1228 = vunpack.c.l.b16 %v1163
      %v1229 = vunpack.c.l.b16 %v1164
      %v1230 = vunpack.c.l.b16 %v1165
      %v1231 = vunpack.c.l.b16 %v1166
      %v1232 = vunpack.c.l.b16 %v1167
      %v1233 = vunpack.c.l.b16 %v1168
      %v1234 = vunpack.c.l.b16 %v1169
      %v1235 = vunpack.c.l.b16 %v1170
      %v1236 = vunpack.c.l.b16 %v1171
      %v1237 = vunpack.c.l.b16 %v1172
      %v1238 = vunpack.c.l.b16 %v1173
      %v1239 = vpack.c.b16 %v1224, %v1223
      %v1240 = vpack.c.b16 %v1226, %v1225
      %v1241 = vpack.c.b16 %v1228, %v1227
      %v1242 = vpack.c.b16 %v1230, %v1229
      %v1243 = vpack.c.b16 %v1232, %v1231
      %v1244 = vpack.c.b16 %v1234, %v1233
      %v1245 = vpack.c.b16 %v1236, %v1235
      %v1246 = vpack.c.b16 %v1238, %v1237
      %v1271 = vunpack.c.l.b16 %v1191
      %v1272 = vunpack.c.l.b16 %v1192
      %v1273 = vunpack.c.l.b16 %v1193
      %v1274 = vunpack.c.l.b16 %v1194
      %v1275 = vunpack.c.l.b16 %v1195
      %v1276 = vunpack.c.l.b16 %v1196
      %v1277 = vunpack.c.l.b16 %v1197
      %v1278 = vunpack.c.l.b16 %v1198
      %v1279 = vunpack.c.l.b16 %v1199
      %v1280 = vunpack.c.l.b16 %v1200
      %v1281 = vunpack.c.l.b16 %v1201
      %v1282 = vunpack.c.l.b16 %v1202
      %v1283 = vunpack.c.l.b16 %v1203
      %v1284 = vunpack.c.l.b16 %v1204
      %v1285 = vunpack.c.l.b16 %v1205
      %v1286 = vunpack.c.l.b16 %v1206
      %v1287 = vpack.c.b16 %v1272, %v1271
      %v1288 = vpack.c.b16 %v1274, %v1273
      %v1289 = vpack.c.b16 %v1276, %v1275
      %v1290 = vpack.c.b16 %v1278, %v1277
      %v1291 = vpack.c.b16 %v1280, %v1279
      %v1292 = vpack.c.b16 %v1282, %v1281
      %v1293 = vpack.c.b16 %v1284, %v1283
      %v1294 = vpack.c.b16 %v1286, %v1285
      %1303 = vmatpush.bf16.msra.mxu0 %v1294
      %1304 = vmatpush.bf16.msra.mxu0 %v1293
      %1305 = vmatpush.bf16.msra.mxu0 %v1292
      %1306 = vmatpush.bf16.msra.mxu0 %v1291
      %1307 = vmatpush.bf16.msra.mxu0 %v1290
      %1308 = vmatpush.bf16.msra.mxu0 %v1289
      %1309 = vmatpush.bf16.msra.mxu0 %v1288
      %1310 = vmatpush.bf16.msra.mxu0 %v1287
      %1311 = vmatmul.bf16.gmra.mxu0 %v1239
      %v1312 = vpop.f32.mrf.mxu0
      %v1313 = vadd.f32 0.0, %v1312
      %v1314 = vpop.f32.mrf.mxu0
      %v1315 = vadd.f32 0.0, %v1314
      %1316 = vmatmul.bf16.gmra.mxu0 %v1240
      %v1317 = vpop.f32.mrf.mxu0
      %v1318 = vadd.f32 0.0, %v1317
      %v1319 = vpop.f32.mrf.mxu0
      %v1320 = vadd.f32 0.0, %v1319
      %1321 = vmatmul.bf16.gmra.mxu0 %v1241
      %v1322 = vpop.f32.mrf.mxu0
      %v1323 = vadd.f32 0.0, %v1322
      %v1324 = vpop.f32.mrf.mxu0
      %v1325 = vadd.f32 0.0, %v1324
      %1326 = vmatmul.bf16.gmra.mxu0 %v1242
      %v1327 = vpop.f32.mrf.mxu0
      %v1328 = vadd.f32 0.0, %v1327
      %v1329 = vpop.f32.mrf.mxu0
      %v1330 = vadd.f32 0.0, %v1329
      %1331 = vmatmul.bf16.gmra.mxu0 %v1243
      %v1332 = vpop.f32.mrf.mxu0
      %v1333 = vadd.f32 0.0, %v1332
      %v1334 = vpop.f32.mrf.mxu0
      %v1335 = vadd.f32 0.0, %v1334
      %1336 = vmatmul.bf16.gmra.mxu0 %v1244
      %v1337 = vpop.f32.mrf.mxu0
      %v1338 = vadd.f32 0.0, %v1337
      %v1339 = vpop.f32.mrf.mxu0
      %v1340 = vadd.f32 0.0, %v1339
      %1341 = vmatmul.bf16.gmra.mxu0 %v1245
      %v1342 = vpop.f32.mrf.mxu0
      %v1343 = vadd.f32 0.0, %v1342
      %v1344 = vpop.f32.mrf.mxu0
      %v1345 = vadd.f32 0.0, %v1344
      %1346 = vmatmul.bf16.gmra.mxu0 %v1246
      %v1347 = vpop.f32.mrf.mxu0
      %v1348 = vadd.f32 0.0, %v1347
      %v1349 = vpop.f32.mrf.mxu0
      %v1350 = vadd.f32 0.0, %v1349
      %1351 = vdwg.mxu0
      %v1352 = vadd.f32 %v1174, %v1313
      %v1353 = vadd.f32 %v1175, %v1315
      %v1354 = vadd.f32 %v1176, %v1318
      %v1355 = vadd.f32 %v1177, %v1320
      %v1356 = vadd.f32 %v1178, %v1323
      %v1357 = vadd.f32 %v1179, %v1325
      %v1358 = vadd.f32 %v1180, %v1328
      %v1359 = vadd.f32 %v1181, %v1330
      %v1360 = vadd.f32 %v1182, %v1333
      %v1361 = vadd.f32 %v1183, %v1335
      %v1362 = vadd.f32 %v1184, %v1338
      %v1363 = vadd.f32 %v1185, %v1340
      %v1364 = vadd.f32 %v1186, %v1343
      %v1365 = vadd.f32 %v1187, %v1345
      %v1366 = vadd.f32 %v1188, %v1348
      %v1367 = vadd.f32 %v1189, %v1350
      %1368 = vst [vmem:[#allocation3] sm:$0xff] %v1352
      %1369 = vst [vmem:[#allocation3 + $0x8] sm:$0xff] %v1353
      %1370 = vst [vmem:[#allocation3 + $0x10] sm:$0xff] %v1354
      %1371 = vst [vmem:[#allocation3 + $0x18] sm:$0xff] %v1355
      %1372 = vst [vmem:[#allocation3 + $0x20] sm:$0xff] %v1356
      %1373 = vst [vmem:[#allocation3 + $0x28] sm:$0xff] %v1357
      %1374 = vst [vmem:[#allocation3 + $0x30] sm:$0xff] %v1358
      %1375 = vst [vmem:[#allocation3 + $0x38] sm:$0xff] %v1359
      %1376 = vst [vmem:[#allocation3 + $0x40] sm:$0xff] %v1360
      %1377 = vst [vmem:[#allocation3 + $0x48] sm:$0xff] %v1361
      %1378 = vst [vmem:[#allocation3 + $0x50] sm:$0xff] %v1362
      %1379 = vst [vmem:[#allocation3 + $0x58] sm:$0xff] %v1363
      %1380 = vst [vmem:[#allocation3 + $0x60] sm:$0xff] %v1364
      %1381 = vst [vmem:[#allocation3 + $0x68] sm:$0xff] %v1365
      %1382 = vst [vmem:[#allocation3 + $0x70] sm:$0xff] %v1366
      %1383 = vst [vmem:[#allocation3 + $0x78] sm:$0xff] %v1367
      %v1384 = vld [vmem:[%s832] sm:$0xff]
      %v1385 = vld [vmem:[%s832 + $0x8] sm:$0xff]
      %v1386 = vld [vmem:[%s832 + $0x10] sm:$0xff]
      %v1387 = vld [vmem:[%s832 + $0x18] sm:$0xff]
      %v1388 = vld [vmem:[%s832 + $0x20] sm:$0xff]
      %v1389 = vld [vmem:[%s832 + $0x28] sm:$0xff]
      %v1390 = vld [vmem:[%s832 + $0x30] sm:$0xff]
      %v1391 = vld [vmem:[%s832 + $0x38] sm:$0xff]
      %v1392 = vld [vmem:[%s832 + $0x40] sm:$0xff]
      %v1393 = vld [vmem:[%s832 + $0x48] sm:$0xff]
      %v1394 = vld [vmem:[%s832 + $0x50] sm:$0xff]
      %v1395 = vld [vmem:[%s832 + $0x58] sm:$0xff]
      %v1396 = vld [vmem:[%s832 + $0x60] sm:$0xff]
      %v1397 = vld [vmem:[%s832 + $0x68] sm:$0xff]
      %v1398 = vld [vmem:[%s832 + $0x70] sm:$0xff]
      %v1399 = vld [vmem:[%s832 + $0x78] sm:$0xff]
      %s1400 = scalar_lea.vmem %s5, 256
      %v1401 = vld [vmem:[%s1400] sm:$0xf]
      %v1402 = vld [vmem:[%s1400 + $0x4] sm:$0xf]
      %v1403 = vld [vmem:[%s1400 + $0x8] sm:$0xf]
      %v1404 = vld [vmem:[%s1400 + $0xc] sm:$0xf]
      %v1405 = vld [vmem:[%s1400 + $0x10] sm:$0xf]
      %v1406 = vld [vmem:[%s1400 + $0x14] sm:$0xf]
      %v1407 = vld [vmem:[%s1400 + $0x18] sm:$0xf]
      %v1408 = vld [vmem:[%s1400 + $0x1c] sm:$0xf]
      %v1409 = vld [vmem:[%s1400 + $0x20] sm:$0xf]
      %v1410 = vld [vmem:[%s1400 + $0x24] sm:$0xf]
      %v1411 = vld [vmem:[%s1400 + $0x28] sm:$0xf]
      %v1412 = vld [vmem:[%s1400 + $0x2c] sm:$0xf]
      %v1413 = vld [vmem:[%s1400 + $0x30] sm:$0xf]
      %v1414 = vld [vmem:[%s1400 + $0x34] sm:$0xf]
      %v1415 = vld [vmem:[%s1400 + $0x38] sm:$0xf]
      %v1416 = vld [vmem:[%s1400 + $0x3c] sm:$0xf]
      %v1433 = vunpack.c.l.b16 %v1401
      %v1434 = vunpack.c.l.b16 %v1402
      %v1435 = vunpack.c.l.b16 %v1403
      %v1436 = vunpack.c.l.b16 %v1404
      %v1437 = vunpack.c.l.b16 %v1405
      %v1438 = vunpack.c.l.b16 %v1406
      %v1439 = vunpack.c.l.b16 %v1407
      %v1440 = vunpack.c.l.b16 %v1408
      %v1441 = vunpack.c.l.b16 %v1409
      %v1442 = vunpack.c.l.b16 %v1410
      %v1443 = vunpack.c.l.b16 %v1411
      %v1444 = vunpack.c.l.b16 %v1412
      %v1445 = vunpack.c.l.b16 %v1413
      %v1446 = vunpack.c.l.b16 %v1414
      %v1447 = vunpack.c.l.b16 %v1415
      %v1448 = vunpack.c.l.b16 %v1416
      %v1449 = vpack.c.b16 %v1434, %v1433
      %v1450 = vpack.c.b16 %v1436, %v1435
      %v1451 = vpack.c.b16 %v1438, %v1437
      %v1452 = vpack.c.b16 %v1440, %v1439
      %v1453 = vpack.c.b16 %v1442, %v1441
      %v1454 = vpack.c.b16 %v1444, %v1443
      %v1455 = vpack.c.b16 %v1446, %v1445
      %v1456 = vpack.c.b16 %v1448, %v1447
      %1465 = vmatpush.bf16.msra.mxu0 %v1456
      %1466 = vmatpush.bf16.msra.mxu0 %v1455
      %1467 = vmatpush.bf16.msra.mxu0 %v1454
      %1468 = vmatpush.bf16.msra.mxu0 %v1453
      %1469 = vmatpush.bf16.msra.mxu0 %v1452
      %1470 = vmatpush.bf16.msra.mxu0 %v1451
      %1471 = vmatpush.bf16.msra.mxu0 %v1450
      %1472 = vmatpush.bf16.msra.mxu0 %v1449
      %1473 = vmatmul.bf16.gmra.mxu0 %v1239
      %v1474 = vpop.f32.mrf.mxu0
      %v1475 = vadd.f32 0.0, %v1474
      %v1476 = vpop.f32.mrf.mxu0
      %v1477 = vadd.f32 0.0, %v1476
      %1478 = vmatmul.bf16.gmra.mxu0 %v1240
      %v1479 = vpop.f32.mrf.mxu0
      %v1480 = vadd.f32 0.0, %v1479
      %v1481 = vpop.f32.mrf.mxu0
      %v1482 = vadd.f32 0.0, %v1481
      %1483 = vmatmul.bf16.gmra.mxu0 %v1241
      %v1484 = vpop.f32.mrf.mxu0
      %v1485 = vadd.f32 0.0, %v1484
      %v1486 = vpop.f32.mrf.mxu0
      %v1487 = vadd.f32 0.0, %v1486
      %1488 = vmatmul.bf16.gmra.mxu0 %v1242
      %v1489 = vpop.f32.mrf.mxu0
      %v1490 = vadd.f32 0.0, %v1489
      %v1491 = vpop.f32.mrf.mxu0
      %v1492 = vadd.f32 0.0, %v1491
      %1493 = vmatmul.bf16.gmra.mxu0 %v1243
      %v1494 = vpop.f32.mrf.mxu0
      %v1495 = vadd.f32 0.0, %v1494
      %v1496 = vpop.f32.mrf.mxu0
      %v1497 = vadd.f32 0.0, %v1496
      %1498 = vmatmul.bf16.gmra.mxu0 %v1244
      %v1499 = vpop.f32.mrf.mxu0
      %v1500 = vadd.f32 0.0, %v1499
      %v1501 = vpop.f32.mrf.mxu0
      %v1502 = vadd.f32 0.0, %v1501
      %1503 = vmatmul.bf16.gmra.mxu0 %v1245
      %v1504 = vpop.f32.mrf.mxu0
      %v1505 = vadd.f32 0.0, %v1504
      %v1506 = vpop.f32.mrf.mxu0
      %v1507 = vadd.f32 0.0, %v1506
      %1508 = vmatmul.bf16.gmra.mxu0 %v1246
      %v1509 = vpop.f32.mrf.mxu0
      %v1510 = vadd.f32 0.0, %v1509
      %v1511 = vpop.f32.mrf.mxu0
      %v1512 = vadd.f32 0.0, %v1511
      %1513 = vdwg.mxu0
      %v1514 = vadd.f32 %v1384, %v1475
      %v1515 = vadd.f32 %v1385, %v1477
      %v1516 = vadd.f32 %v1386, %v1480
      %v1517 = vadd.f32 %v1387, %v1482
      %v1518 = vadd.f32 %v1388, %v1485
      %v1519 = vadd.f32 %v1389, %v1487
      %v1520 = vadd.f32 %v1390, %v1490
      %v1521 = vadd.f32 %v1391, %v1492
      %v1522 = vadd.f32 %v1392, %v1495
      %v1523 = vadd.f32 %v1393, %v1497
      %v1524 = vadd.f32 %v1394, %v1500
      %v1525 = vadd.f32 %v1395, %v1502
      %v1526 = vadd.f32 %v1396, %v1505
      %v1527 = vadd.f32 %v1397, %v1507
      %v1528 = vadd.f32 %v1398, %v1510
      %v1529 = vadd.f32 %v1399, %v1512
      %1530 = vst [vmem:[%s832] sm:$0xff] %v1514
      %1531 = vst [vmem:[%s832 + $0x8] sm:$0xff] %v1515
      %1532 = vst [vmem:[%s832 + $0x10] sm:$0xff] %v1516
      %1533 = vst [vmem:[%s832 + $0x18] sm:$0xff] %v1517
      %1534 = vst [vmem:[%s832 + $0x20] sm:$0xff] %v1518
      %1535 = vst [vmem:[%s832 + $0x28] sm:$0xff] %v1519
      %1536 = vst [vmem:[%s832 + $0x30] sm:$0xff] %v1520
      %1537 = vst [vmem:[%s832 + $0x38] sm:$0xff] %v1521
      %1538 = vst [vmem:[%s832 + $0x40] sm:$0xff] %v1522
      %1539 = vst [vmem:[%s832 + $0x48] sm:$0xff] %v1523
      %1540 = vst [vmem:[%s832 + $0x50] sm:$0xff] %v1524
      %1541 = vst [vmem:[%s832 + $0x58] sm:$0xff] %v1525
      %1542 = vst [vmem:[%s832 + $0x60] sm:$0xff] %v1526
      %1543 = vst [vmem:[%s832 + $0x68] sm:$0xff] %v1527
      %1544 = vst [vmem:[%s832 + $0x70] sm:$0xff] %v1528
      %1545 = vst [vmem:[%s832 + $0x78] sm:$0xff] %v1529
      %v1546 = vld [vmem:[%s995] sm:$0xff]
      %v1547 = vld [vmem:[%s995 + $0x8] sm:$0xff]
      %v1548 = vld [vmem:[%s995 + $0x10] sm:$0xff]
      %v1549 = vld [vmem:[%s995 + $0x18] sm:$0xff]
      %v1550 = vld [vmem:[%s995 + $0x20] sm:$0xff]
      %v1551 = vld [vmem:[%s995 + $0x28] sm:$0xff]
      %v1552 = vld [vmem:[%s995 + $0x30] sm:$0xff]
      %v1553 = vld [vmem:[%s995 + $0x38] sm:$0xff]
      %v1554 = vld [vmem:[%s995 + $0x40] sm:$0xff]
      %v1555 = vld [vmem:[%s995 + $0x48] sm:$0xff]
      %v1556 = vld [vmem:[%s995 + $0x50] sm:$0xff]
      %v1557 = vld [vmem:[%s995 + $0x58] sm:$0xff]
      %v1558 = vld [vmem:[%s995 + $0x60] sm:$0xff]
      %v1559 = vld [vmem:[%s995 + $0x68] sm:$0xff]
      %v1560 = vld [vmem:[%s995 + $0x70] sm:$0xff]
      %v1561 = vld [vmem:[%s995 + $0x78] sm:$0xff]
      %s1562 = scalar_lea.vmem %s5, 320
      %v1563 = vld [vmem:[%s1562] sm:$0xf]
      %v1564 = vld [vmem:[%s1562 + $0x4] sm:$0xf]
      %v1565 = vld [vmem:[%s1562 + $0x8] sm:$0xf]
      %v1566 = vld [vmem:[%s1562 + $0xc] sm:$0xf]
      %v1567 = vld [vmem:[%s1562 + $0x10] sm:$0xf]
      %v1568 = vld [vmem:[%s1562 + $0x14] sm:$0xf]
      %v1569 = vld [vmem:[%s1562 + $0x18] sm:$0xf]
      %v1570 = vld [vmem:[%s1562 + $0x1c] sm:$0xf]
      %v1571 = vld [vmem:[%s1562 + $0x20] sm:$0xf]
      %v1572 = vld [vmem:[%s1562 + $0x24] sm:$0xf]
      %v1573 = vld [vmem:[%s1562 + $0x28] sm:$0xf]
      %v1574 = vld [vmem:[%s1562 + $0x2c] sm:$0xf]
      %v1575 = vld [vmem:[%s1562 + $0x30] sm:$0xf]
      %v1576 = vld [vmem:[%s1562 + $0x34] sm:$0xf]
      %v1577 = vld [vmem:[%s1562 + $0x38] sm:$0xf]
      %v1578 = vld [vmem:[%s1562 + $0x3c] sm:$0xf]
      %v1595 = vunpack.c.l.b16 %v1563
      %v1596 = vunpack.c.l.b16 %v1564
      %v1597 = vunpack.c.l.b16 %v1565
      %v1598 = vunpack.c.l.b16 %v1566
      %v1599 = vunpack.c.l.b16 %v1567
      %v1600 = vunpack.c.l.b16 %v1568
      %v1601 = vunpack.c.l.b16 %v1569
      %v1602 = vunpack.c.l.b16 %v1570
      %v1603 = vunpack.c.l.b16 %v1571
      %v1604 = vunpack.c.l.b16 %v1572
      %v1605 = vunpack.c.l.b16 %v1573
      %v1606 = vunpack.c.l.b16 %v1574
      %v1607 = vunpack.c.l.b16 %v1575
      %v1608 = vunpack.c.l.b16 %v1576
      %v1609 = vunpack.c.l.b16 %v1577
      %v1610 = vunpack.c.l.b16 %v1578
      %v1611 = vpack.c.b16 %v1596, %v1595
      %v1612 = vpack.c.b16 %v1598, %v1597
      %v1613 = vpack.c.b16 %v1600, %v1599
      %v1614 = vpack.c.b16 %v1602, %v1601
      %v1615 = vpack.c.b16 %v1604, %v1603
      %v1616 = vpack.c.b16 %v1606, %v1605
      %v1617 = vpack.c.b16 %v1608, %v1607
      %v1618 = vpack.c.b16 %v1610, %v1609
      %1627 = vmatpush.bf16.msra.mxu0 %v1618
      %1628 = vmatpush.bf16.msra.mxu0 %v1617
      %1629 = vmatpush.bf16.msra.mxu0 %v1616
      %1630 = vmatpush.bf16.msra.mxu0 %v1615
      %1631 = vmatpush.bf16.msra.mxu0 %v1614
      %1632 = vmatpush.bf16.msra.mxu0 %v1613
      %1633 = vmatpush.bf16.msra.mxu0 %v1612
      %1634 = vmatpush.bf16.msra.mxu0 %v1611
      %1635 = vmatmul.bf16.gmra.mxu0 %v1239
      %v1636 = vpop.f32.mrf.mxu0
      %v1637 = vadd.f32 0.0, %v1636
      %v1638 = vpop.f32.mrf.mxu0
      %v1639 = vadd.f32 0.0, %v1638
      %1640 = vmatmul.bf16.gmra.mxu0 %v1240
      %v1641 = vpop.f32.mrf.mxu0
      %v1642 = vadd.f32 0.0, %v1641
      %v1643 = vpop.f32.mrf.mxu0
      %v1644 = vadd.f32 0.0, %v1643
      %1645 = vmatmul.bf16.gmra.mxu0 %v1241
      %v1646 = vpop.f32.mrf.mxu0
      %v1647 = vadd.f32 0.0, %v1646
      %v1648 = vpop.f32.mrf.mxu0
      %v1649 = vadd.f32 0.0, %v1648
      %1650 = vmatmul.bf16.gmra.mxu0 %v1242
      %v1651 = vpop.f32.mrf.mxu0
      %v1652 = vadd.f32 0.0, %v1651
      %v1653 = vpop.f32.mrf.mxu0
      %v1654 = vadd.f32 0.0, %v1653
      %1655 = vmatmul.bf16.gmra.mxu0 %v1243
      %v1656 = vpop.f32.mrf.mxu0
      %v1657 = vadd.f32 0.0, %v1656
      %v1658 = vpop.f32.mrf.mxu0
      %v1659 = vadd.f32 0.0, %v1658
      %1660 = vmatmul.bf16.gmra.mxu0 %v1244
      %v1661 = vpop.f32.mrf.mxu0
      %v1662 = vadd.f32 0.0, %v1661
      %v1663 = vpop.f32.mrf.mxu0
      %v1664 = vadd.f32 0.0, %v1663
      %1665 = vmatmul.bf16.gmra.mxu0 %v1245
      %v1666 = vpop.f32.mrf.mxu0
      %v1667 = vadd.f32 0.0, %v1666
      %v1668 = vpop.f32.mrf.mxu0
      %v1669 = vadd.f32 0.0, %v1668
      %1670 = vmatmul.bf16.gmra.mxu0 %v1246
      %v1671 = vpop.f32.mrf.mxu0
      %v1672 = vadd.f32 0.0, %v1671
      %v1673 = vpop.f32.mrf.mxu0
      %v1674 = vadd.f32 0.0, %v1673
      %1675 = vdwg.mxu0
      %v1676 = vadd.f32 %v1546, %v1637
      %v1677 = vadd.f32 %v1547, %v1639
      %v1678 = vadd.f32 %v1548, %v1642
      %v1679 = vadd.f32 %v1549, %v1644
      %v1680 = vadd.f32 %v1550, %v1647
      %v1681 = vadd.f32 %v1551, %v1649
      %v1682 = vadd.f32 %v1552, %v1652
      %v1683 = vadd.f32 %v1553, %v1654
      %v1684 = vadd.f32 %v1554, %v1657
      %v1685 = vadd.f32 %v1555, %v1659
      %v1686 = vadd.f32 %v1556, %v1662
      %v1687 = vadd.f32 %v1557, %v1664
      %v1688 = vadd.f32 %v1558, %v1667
      %v1689 = vadd.f32 %v1559, %v1669
      %v1690 = vadd.f32 %v1560, %v1672
      %v1691 = vadd.f32 %v1561, %v1674
      %1692 = vst [vmem:[%s995] sm:$0xff] %v1676
      %1693 = vst [vmem:[%s995 + $0x8] sm:$0xff] %v1677
      %1694 = vst [vmem:[%s995 + $0x10] sm:$0xff] %v1678
      %1695 = vst [vmem:[%s995 + $0x18] sm:$0xff] %v1679
      %1696 = vst [vmem:[%s995 + $0x20] sm:$0xff] %v1680
      %1697 = vst [vmem:[%s995 + $0x28] sm:$0xff] %v1681
      %1698 = vst [vmem:[%s995 + $0x30] sm:$0xff] %v1682
      %1699 = vst [vmem:[%s995 + $0x38] sm:$0xff] %v1683
      %1700 = vst [vmem:[%s995 + $0x40] sm:$0xff] %v1684
      %1701 = vst [vmem:[%s995 + $0x48] sm:$0xff] %v1685
      %1702 = vst [vmem:[%s995 + $0x50] sm:$0xff] %v1686
      %1703 = vst [vmem:[%s995 + $0x58] sm:$0xff] %v1687
      %1704 = vst [vmem:[%s995 + $0x60] sm:$0xff] %v1688
      %1705 = vst [vmem:[%s995 + $0x68] sm:$0xff] %v1689
      %1706 = vst [vmem:[%s995 + $0x70] sm:$0xff] %v1690
      %1707 = vst [vmem:[%s995 + $0x78] sm:$0xff] %v1691
      %s1708 = scalar_lea.vmem [#allocation2], 16
      %v1709 = vld [vmem:[%s1708] sm:$0xf]
      %v1710 = vld [vmem:[%s1708 + $0x4] sm:$0xf]
      %v1711 = vld [vmem:[%s1708 + $0x8] sm:$0xf]
      %v1712 = vld [vmem:[%s1708 + $0xc] sm:$0xf]
      %v1713 = vld [vmem:[%s1708 + $0x10] sm:$0xf]
      %v1714 = vld [vmem:[%s1708 + $0x14] sm:$0xf]
      %v1715 = vld [vmem:[%s1708 + $0x18] sm:$0xf]
      %v1716 = vld [vmem:[%s1708 + $0x1c] sm:$0xf]
      %v1717 = vld [vmem:[%s1708 + $0x20] sm:$0xf]
      %v1718 = vld [vmem:[%s1708 + $0x24] sm:$0xf]
      %v1719 = vld [vmem:[%s1708 + $0x28] sm:$0xf]
      %v1720 = vld [vmem:[%s1708 + $0x2c] sm:$0xf]
      %v1721 = vld [vmem:[%s1708 + $0x30] sm:$0xf]
      %v1722 = vld [vmem:[%s1708 + $0x34] sm:$0xf]
      %v1723 = vld [vmem:[%s1708 + $0x38] sm:$0xf]
      %v1724 = vld [vmem:[%s1708 + $0x3c] sm:$0xf]
      %v1725 = vld [vmem:[#allocation3] sm:$0xff]
      %v1726 = vld [vmem:[#allocation3 + $0x8] sm:$0xff]
      %v1727 = vld [vmem:[#allocation3 + $0x10] sm:$0xff]
      %v1728 = vld [vmem:[#allocation3 + $0x18] sm:$0xff]
      %v1729 = vld [vmem:[#allocation3 + $0x20] sm:$0xff]
      %v1730 = vld [vmem:[#allocation3 + $0x28] sm:$0xff]
      %v1731 = vld [vmem:[#allocation3 + $0x30] sm:$0xff]
      %v1732 = vld [vmem:[#allocation3 + $0x38] sm:$0xff]
      %v1733 = vld [vmem:[#allocation3 + $0x40] sm:$0xff]
      %v1734 = vld [vmem:[#allocation3 + $0x48] sm:$0xff]
      %v1735 = vld [vmem:[#allocation3 + $0x50] sm:$0xff]
      %v1736 = vld [vmem:[#allocation3 + $0x58] sm:$0xff]
      %v1737 = vld [vmem:[#allocation3 + $0x60] sm:$0xff]
      %v1738 = vld [vmem:[#allocation3 + $0x68] sm:$0xff]
      %v1739 = vld [vmem:[#allocation3 + $0x70] sm:$0xff]
      %v1740 = vld [vmem:[#allocation3 + $0x78] sm:$0xff]
      %s1741 = scalar_lea.vmem %s5, 384
      %v1742 = vld [vmem:[%s1741] sm:$0xf]
      %v1743 = vld [vmem:[%s1741 + $0x4] sm:$0xf]
      %v1744 = vld [vmem:[%s1741 + $0x8] sm:$0xf]
      %v1745 = vld [vmem:[%s1741 + $0xc] sm:$0xf]
      %v1746 = vld [vmem:[%s1741 + $0x10] sm:$0xf]
      %v1747 = vld [vmem:[%s1741 + $0x14] sm:$0xf]
      %v1748 = vld [vmem:[%s1741 + $0x18] sm:$0xf]
      %v1749 = vld [vmem:[%s1741 + $0x1c] sm:$0xf]
      %v1750 = vld [vmem:[%s1741 + $0x20] sm:$0xf]
      %v1751 = vld [vmem:[%s1741 + $0x24] sm:$0xf]
      %v1752 = vld [vmem:[%s1741 + $0x28] sm:$0xf]
      %v1753 = vld [vmem:[%s1741 + $0x2c] sm:$0xf]
      %v1754 = vld [vmem:[%s1741 + $0x30] sm:$0xf]
      %v1755 = vld [vmem:[%s1741 + $0x34] sm:$0xf]
      %v1756 = vld [vmem:[%s1741 + $0x38] sm:$0xf]
      %v1757 = vld [vmem:[%s1741 + $0x3c] sm:$0xf]
      %v1774 = vunpack.c.l.b16 %v1709
      %v1775 = vunpack.c.l.b16 %v1710
      %v1776 = vunpack.c.l.b16 %v1711
      %v1777 = vunpack.c.l.b16 %v1712
      %v1778 = vunpack.c.l.b16 %v1713
      %v1779 = vunpack.c.l.b16 %v1714
      %v1780 = vunpack.c.l.b16 %v1715
      %v1781 = vunpack.c.l.b16 %v1716
      %v1782 = vunpack.c.l.b16 %v1717
      %v1783 = vunpack.c.l.b16 %v1718
      %v1784 = vunpack.c.l.b16 %v1719
      %v1785 = vunpack.c.l.b16 %v1720
      %v1786 = vunpack.c.l.b16 %v1721
      %v1787 = vunpack.c.l.b16 %v1722
      %v1788 = vunpack.c.l.b16 %v1723
      %v1789 = vunpack.c.l.b16 %v1724
      %v1790 = vpack.c.b16 %v1775, %v1774
      %v1791 = vpack.c.b16 %v1777, %v1776
      %v1792 = vpack.c.b16 %v1779, %v1778
      %v1793 = vpack.c.b16 %v1781, %v1780
      %v1794 = vpack.c.b16 %v1783, %v1782
      %v1795 = vpack.c.b16 %v1785, %v1784
      %v1796 = vpack.c.b16 %v1787, %v1786
      %v1797 = vpack.c.b16 %v1789, %v1788
      %v1822 = vunpack.c.l.b16 %v1742
      %v1823 = vunpack.c.l.b16 %v1743
      %v1824 = vunpack.c.l.b16 %v1744
      %v1825 = vunpack.c.l.b16 %v1745
      %v1826 = vunpack.c.l.b16 %v1746
      %v1827 = vunpack.c.l.b16 %v1747
      %v1828 = vunpack.c.l.b16 %v1748
      %v1829 = vunpack.c.l.b16 %v1749
      %v1830 = vunpack.c.l.b16 %v1750
      %v1831 = vunpack.c.l.b16 %v1751
      %v1832 = vunpack.c.l.b16 %v1752
      %v1833 = vunpack.c.l.b16 %v1753
      %v1834 = vunpack.c.l.b16 %v1754
      %v1835 = vunpack.c.l.b16 %v1755
      %v1836 = vunpack.c.l.b16 %v1756
      %v1837 = vunpack.c.l.b16 %v1757
      %v1838 = vpack.c.b16 %v1823, %v1822
      %v1839 = vpack.c.b16 %v1825, %v1824
      %v1840 = vpack.c.b16 %v1827, %v1826
      %v1841 = vpack.c.b16 %v1829, %v1828
      %v1842 = vpack.c.b16 %v1831, %v1830
      %v1843 = vpack.c.b16 %v1833, %v1832
      %v1844 = vpack.c.b16 %v1835, %v1834
      %v1845 = vpack.c.b16 %v1837, %v1836
      %1854 = vmatpush.bf16.msra.mxu0 %v1845
      %1855 = vmatpush.bf16.msra.mxu0 %v1844
      %1856 = vmatpush.bf16.msra.mxu0 %v1843
      %1857 = vmatpush.bf16.msra.mxu0 %v1842
      %1858 = vmatpush.bf16.msra.mxu0 %v1841
      %1859 = vmatpush.bf16.msra.mxu0 %v1840
      %1860 = vmatpush.bf16.msra.mxu0 %v1839
      %1861 = vmatpush.bf16.msra.mxu0 %v1838
      %1862 = vmatmul.bf16.gmra.mxu0 %v1790
      %v1863 = vpop.f32.mrf.mxu0
      %v1864 = vadd.f32 0.0, %v1863
      %v1865 = vpop.f32.mrf.mxu0
      %v1866 = vadd.f32 0.0, %v1865
      %1867 = vmatmul.bf16.gmra.mxu0 %v1791
      %v1868 = vpop.f32.mrf.mxu0
      %v1869 = vadd.f32 0.0, %v1868
      %v1870 = vpop.f32.mrf.mxu0
      %v1871 = vadd.f32 0.0, %v1870
      %1872 = vmatmul.bf16.gmra.mxu0 %v1792
      %v1873 = vpop.f32.mrf.mxu0
      %v1874 = vadd.f32 0.0, %v1873
      %v1875 = vpop.f32.mrf.mxu0
      %v1876 = vadd.f32 0.0, %v1875
      %1877 = vmatmul.bf16.gmra.mxu0 %v1793
      %v1878 = vpop.f32.mrf.mxu0
      %v1879 = vadd.f32 0.0, %v1878
      %v1880 = vpop.f32.mrf.mxu0
      %v1881 = vadd.f32 0.0, %v1880
      %1882 = vmatmul.bf16.gmra.mxu0 %v1794
      %v1883 = vpop.f32.mrf.mxu0
      %v1884 = vadd.f32 0.0, %v1883
      %v1885 = vpop.f32.mrf.mxu0
      %v1886 = vadd.f32 0.0, %v1885
      %1887 = vmatmul.bf16.gmra.mxu0 %v1795
      %v1888 = vpop.f32.mrf.mxu0
      %v1889 = vadd.f32 0.0, %v1888
      %v1890 = vpop.f32.mrf.mxu0
      %v1891 = vadd.f32 0.0, %v1890
      %1892 = vmatmul.bf16.gmra.mxu0 %v1796
      %v1893 = vpop.f32.mrf.mxu0
      %v1894 = vadd.f32 0.0, %v1893
      %v1895 = vpop.f32.mrf.mxu0
      %v1896 = vadd.f32 0.0, %v1895
      %1897 = vmatmul.bf16.gmra.mxu0 %v1797
      %v1898 = vpop.f32.mrf.mxu0
      %v1899 = vadd.f32 0.0, %v1898
      %v1900 = vpop.f32.mrf.mxu0
      %v1901 = vadd.f32 0.0, %v1900
      %1902 = vdwg.mxu0
      %v1903 = vadd.f32 %v1725, %v1864
      %v1904 = vadd.f32 %v1726, %v1866
      %v1905 = vadd.f32 %v1727, %v1869
      %v1906 = vadd.f32 %v1728, %v1871
      %v1907 = vadd.f32 %v1729, %v1874
      %v1908 = vadd.f32 %v1730, %v1876
      %v1909 = vadd.f32 %v1731, %v1879
      %v1910 = vadd.f32 %v1732, %v1881
      %v1911 = vadd.f32 %v1733, %v1884
      %v1912 = vadd.f32 %v1734, %v1886
      %v1913 = vadd.f32 %v1735, %v1889
      %v1914 = vadd.f32 %v1736, %v1891
      %v1915 = vadd.f32 %v1737, %v1894
      %v1916 = vadd.f32 %v1738, %v1896
      %v1917 = vadd.f32 %v1739, %v1899
      %v1918 = vadd.f32 %v1740, %v1901
      %1919 = vst [vmem:[#allocation3] sm:$0xff] %v1903
      %1920 = vst [vmem:[#allocation3 + $0x8] sm:$0xff] %v1904
      %1921 = vst [vmem:[#allocation3 + $0x10] sm:$0xff] %v1905
      %1922 = vst [vmem:[#allocation3 + $0x18] sm:$0xff] %v1906
      %1923 = vst [vmem:[#allocation3 + $0x20] sm:$0xff] %v1907
      %1924 = vst [vmem:[#allocation3 + $0x28] sm:$0xff] %v1908
      %1925 = vst [vmem:[#allocation3 + $0x30] sm:$0xff] %v1909
      %1926 = vst [vmem:[#allocation3 + $0x38] sm:$0xff] %v1910
      %1927 = vst [vmem:[#allocation3 + $0x40] sm:$0xff] %v1911
      %1928 = vst [vmem:[#allocation3 + $0x48] sm:$0xff] %v1912
      %1929 = vst [vmem:[#allocation3 + $0x50] sm:$0xff] %v1913
      %1930 = vst [vmem:[#allocation3 + $0x58] sm:$0xff] %v1914
      %1931 = vst [vmem:[#allocation3 + $0x60] sm:$0xff] %v1915
      %1932 = vst [vmem:[#allocation3 + $0x68] sm:$0xff] %v1916
      %1933 = vst [vmem:[#allocation3 + $0x70] sm:$0xff] %v1917
      %1934 = vst [vmem:[#allocation3 + $0x78] sm:$0xff] %v1918
      %v1935 = vld [vmem:[%s832] sm:$0xff]
      %v1936 = vld [vmem:[%s832 + $0x8] sm:$0xff]
      %v1937 = vld [vmem:[%s832 + $0x10] sm:$0xff]
      %v1938 = vld [vmem:[%s832 + $0x18] sm:$0xff]
      %v1939 = vld [vmem:[%s832 + $0x20] sm:$0xff]
      %v1940 = vld [vmem:[%s832 + $0x28] sm:$0xff]
      %v1941 = vld [vmem:[%s832 + $0x30] sm:$0xff]
      %v1942 = vld [vmem:[%s832 + $0x38] sm:$0xff]
      %v1943 = vld [vmem:[%s832 + $0x40] sm:$0xff]
      %v1944 = vld [vmem:[%s832 + $0x48] sm:$0xff]
      %v1945 = vld [vmem:[%s832 + $0x50] sm:$0xff]
      %v1946 = vld [vmem:[%s832 + $0x58] sm:$0xff]
      %v1947 = vld [vmem:[%s832 + $0x60] sm:$0xff]
      %v1948 = vld [vmem:[%s832 + $0x68] sm:$0xff]
      %v1949 = vld [vmem:[%s832 + $0x70] sm:$0xff]
      %v1950 = vld [vmem:[%s832 + $0x78] sm:$0xff]
      %s1951 = scalar_lea.vmem %s5, 448
      %v1952 = vld [vmem:[%s1951] sm:$0xf]
      %v1953 = vld [vmem:[%s1951 + $0x4] sm:$0xf]
      %v1954 = vld [vmem:[%s1951 + $0x8] sm:$0xf]
      %v1955 = vld [vmem:[%s1951 + $0xc] sm:$0xf]
      %v1956 = vld [vmem:[%s1951 + $0x10] sm:$0xf]
      %v1957 = vld [vmem:[%s1951 + $0x14] sm:$0xf]
      %v1958 = vld [vmem:[%s1951 + $0x18] sm:$0xf]
      %v1959 = vld [vmem:[%s1951 + $0x1c] sm:$0xf]
      %v1960 = vld [vmem:[%s1951 + $0x20] sm:$0xf]
      %v1961 = vld [vmem:[%s1951 + $0x24] sm:$0xf]
      %v1962 = vld [vmem:[%s1951 + $0x28] sm:$0xf]
      %v1963 = vld [vmem:[%s1951 + $0x2c] sm:$0xf]
      %v1964 = vld [vmem:[%s1951 + $0x30] sm:$0xf]
      %v1965 = vld [vmem:[%s1951 + $0x34] sm:$0xf]
      %v1966 = vld [vmem:[%s1951 + $0x38] sm:$0xf]
      %v1967 = vld [vmem:[%s1951 + $0x3c] sm:$0xf]
      %v1984 = vunpack.c.l.b16 %v1952
      %v1985 = vunpack.c.l.b16 %v1953
      %v1986 = vunpack.c.l.b16 %v1954
      %v1987 = vunpack.c.l.b16 %v1955
      %v1988 = vunpack.c.l.b16 %v1956
      %v1989 = vunpack.c.l.b16 %v1957
      %v1990 = vunpack.c.l.b16 %v1958
      %v1991 = vunpack.c.l.b16 %v1959
      %v1992 = vunpack.c.l.b16 %v1960
      %v1993 = vunpack.c.l.b16 %v1961
      %v1994 = vunpack.c.l.b16 %v1962
      %v1995 = vunpack.c.l.b16 %v1963
      %v1996 = vunpack.c.l.b16 %v1964
      %v1997 = vunpack.c.l.b16 %v1965
      %v1998 = vunpack.c.l.b16 %v1966
      %v1999 = vunpack.c.l.b16 %v1967
      %v2000 = vpack.c.b16 %v1985, %v1984
      %v2001 = vpack.c.b16 %v1987, %v1986
      %v2002 = vpack.c.b16 %v1989, %v1988
      %v2003 = vpack.c.b16 %v1991, %v1990
      %v2004 = vpack.c.b16 %v1993, %v1992
      %v2005 = vpack.c.b16 %v1995, %v1994
      %v2006 = vpack.c.b16 %v1997, %v1996
      %v2007 = vpack.c.b16 %v1999, %v1998
      %2016 = vmatpush.bf16.msra.mxu0 %v2007
      %2017 = vmatpush.bf16.msra.mxu0 %v2006
      %2018 = vmatpush.bf16.msra.mxu0 %v2005
      %2019 = vmatpush.bf16.msra.mxu0 %v2004
      %2020 = vmatpush.bf16.msra.mxu0 %v2003
      %2021 = vmatpush.bf16.msra.mxu0 %v2002
      %2022 = vmatpush.bf16.msra.mxu0 %v2001
      %2023 = vmatpush.bf16.msra.mxu0 %v2000
      %2024 = vmatmul.bf16.gmra.mxu0 %v1790
      %v2025 = vpop.f32.mrf.mxu0
      %v2026 = vadd.f32 0.0, %v2025
      %v2027 = vpop.f32.mrf.mxu0
      %v2028 = vadd.f32 0.0, %v2027
      %2029 = vmatmul.bf16.gmra.mxu0 %v1791
      %v2030 = vpop.f32.mrf.mxu0
      %v2031 = vadd.f32 0.0, %v2030
      %v2032 = vpop.f32.mrf.mxu0
      %v2033 = vadd.f32 0.0, %v2032
      %2034 = vmatmul.bf16.gmra.mxu0 %v1792
      %v2035 = vpop.f32.mrf.mxu0
      %v2036 = vadd.f32 0.0, %v2035
      %v2037 = vpop.f32.mrf.mxu0
      %v2038 = vadd.f32 0.0, %v2037
      %2039 = vmatmul.bf16.gmra.mxu0 %v1793
      %v2040 = vpop.f32.mrf.mxu0
      %v2041 = vadd.f32 0.0, %v2040
      %v2042 = vpop.f32.mrf.mxu0
      %v2043 = vadd.f32 0.0, %v2042
      %2044 = vmatmul.bf16.gmra.mxu0 %v1794
      %v2045 = vpop.f32.mrf.mxu0
      %v2046 = vadd.f32 0.0, %v2045
      %v2047 = vpop.f32.mrf.mxu0
      %v2048 = vadd.f32 0.0, %v2047
      %2049 = vmatmul.bf16.gmra.mxu0 %v1795
      %v2050 = vpop.f32.mrf.mxu0
      %v2051 = vadd.f32 0.0, %v2050
      %v2052 = vpop.f32.mrf.mxu0
      %v2053 = vadd.f32 0.0, %v2052
      %2054 = vmatmul.bf16.gmra.mxu0 %v1796
      %v2055 = vpop.f32.mrf.mxu0
      %v2056 = vadd.f32 0.0, %v2055
      %v2057 = vpop.f32.mrf.mxu0
      %v2058 = vadd.f32 0.0, %v2057
      %2059 = vmatmul.bf16.gmra.mxu0 %v1797
      %v2060 = vpop.f32.mrf.mxu0
      %v2061 = vadd.f32 0.0, %v2060
      %v2062 = vpop.f32.mrf.mxu0
      %v2063 = vadd.f32 0.0, %v2062
      %2064 = vdwg.mxu0
      %v2065 = vadd.f32 %v1935, %v2026
      %v2066 = vadd.f32 %v1936, %v2028
      %v2067 = vadd.f32 %v1937, %v2031
      %v2068 = vadd.f32 %v1938, %v2033
      %v2069 = vadd.f32 %v1939, %v2036
      %v2070 = vadd.f32 %v1940, %v2038
      %v2071 = vadd.f32 %v1941, %v2041
      %v2072 = vadd.f32 %v1942, %v2043
      %v2073 = vadd.f32 %v1943, %v2046
      %v2074 = vadd.f32 %v1944, %v2048
      %v2075 = vadd.f32 %v1945, %v2051
      %v2076 = vadd.f32 %v1946, %v2053
      %v2077 = vadd.f32 %v1947, %v2056
      %v2078 = vadd.f32 %v1948, %v2058
      %v2079 = vadd.f32 %v1949, %v2061
      %v2080 = vadd.f32 %v1950, %v2063
      %2081 = vst [vmem:[%s832] sm:$0xff] %v2065
      %2082 = vst [vmem:[%s832 + $0x8] sm:$0xff] %v2066
      %2083 = vst [vmem:[%s832 + $0x10] sm:$0xff] %v2067
      %2084 = vst [vmem:[%s832 + $0x18] sm:$0xff] %v2068
      %2085 = vst [vmem:[%s832 + $0x20] sm:$0xff] %v2069
      %2086 = vst [vmem:[%s832 + $0x28] sm:$0xff] %v2070
      %2087 = vst [vmem:[%s832 + $0x30] sm:$0xff] %v2071
      %2088 = vst [vmem:[%s832 + $0x38] sm:$0xff] %v2072
      %2089 = vst [vmem:[%s832 + $0x40] sm:$0xff] %v2073
      %2090 = vst [vmem:[%s832 + $0x48] sm:$0xff] %v2074
      %2091 = vst [vmem:[%s832 + $0x50] sm:$0xff] %v2075
      %2092 = vst [vmem:[%s832 + $0x58] sm:$0xff] %v2076
      %2093 = vst [vmem:[%s832 + $0x60] sm:$0xff] %v2077
      %2094 = vst [vmem:[%s832 + $0x68] sm:$0xff] %v2078
      %2095 = vst [vmem:[%s832 + $0x70] sm:$0xff] %v2079
      %2096 = vst [vmem:[%s832 + $0x78] sm:$0xff] %v2080
      %v2097 = vld [vmem:[%s995] sm:$0xff]
      %v2098 = vld [vmem:[%s995 + $0x8] sm:$0xff]
      %v2099 = vld [vmem:[%s995 + $0x10] sm:$0xff]
      %v2100 = vld [vmem:[%s995 + $0x18] sm:$0xff]
      %v2101 = vld [vmem:[%s995 + $0x20] sm:$0xff]
      %v2102 = vld [vmem:[%s995 + $0x28] sm:$0xff]
      %v2103 = vld [vmem:[%s995 + $0x30] sm:$0xff]
      %v2104 = vld [vmem:[%s995 + $0x38] sm:$0xff]
      %v2105 = vld [vmem:[%s995 + $0x40] sm:$0xff]
      %v2106 = vld [vmem:[%s995 + $0x48] sm:$0xff]
      %v2107 = vld [vmem:[%s995 + $0x50] sm:$0xff]
      %v2108 = vld [vmem:[%s995 + $0x58] sm:$0xff]
      %v2109 = vld [vmem:[%s995 + $0x60] sm:$0xff]
      %v2110 = vld [vmem:[%s995 + $0x68] sm:$0xff]
      %v2111 = vld [vmem:[%s995 + $0x70] sm:$0xff]
      %v2112 = vld [vmem:[%s995 + $0x78] sm:$0xff]
      %s2113 = scalar_lea.vmem %s5, 512
      %v2114 = vld [vmem:[%s2113] sm:$0xf]
      %v2115 = vld [vmem:[%s2113 + $0x4] sm:$0xf]
      %v2116 = vld [vmem:[%s2113 + $0x8] sm:$0xf]
      %v2117 = vld [vmem:[%s2113 + $0xc] sm:$0xf]
      %v2118 = vld [vmem:[%s2113 + $0x10] sm:$0xf]
      %v2119 = vld [vmem:[%s2113 + $0x14] sm:$0xf]
      %v2120 = vld [vmem:[%s2113 + $0x18] sm:$0xf]
      %v2121 = vld [vmem:[%s2113 + $0x1c] sm:$0xf]
      %v2122 = vld [vmem:[%s2113 + $0x20] sm:$0xf]
      %v2123 = vld [vmem:[%s2113 + $0x24] sm:$0xf]
      %v2124 = vld [vmem:[%s2113 + $0x28] sm:$0xf]
      %v2125 = vld [vmem:[%s2113 + $0x2c] sm:$0xf]
      %v2126 = vld [vmem:[%s2113 + $0x30] sm:$0xf]
      %v2127 = vld [vmem:[%s2113 + $0x34] sm:$0xf]
      %v2128 = vld [vmem:[%s2113 + $0x38] sm:$0xf]
      %v2129 = vld [vmem:[%s2113 + $0x3c] sm:$0xf]
      %v2146 = vunpack.c.l.b16 %v2114
      %v2147 = vunpack.c.l.b16 %v2115
      %v2148 = vunpack.c.l.b16 %v2116
      %v2149 = vunpack.c.l.b16 %v2117
      %v2150 = vunpack.c.l.b16 %v2118
      %v2151 = vunpack.c.l.b16 %v2119
      %v2152 = vunpack.c.l.b16 %v2120
      %v2153 = vunpack.c.l.b16 %v2121
      %v2154 = vunpack.c.l.b16 %v2122
      %v2155 = vunpack.c.l.b16 %v2123
      %v2156 = vunpack.c.l.b16 %v2124
      %v2157 = vunpack.c.l.b16 %v2125
      %v2158 = vunpack.c.l.b16 %v2126
      %v2159 = vunpack.c.l.b16 %v2127
      %v2160 = vunpack.c.l.b16 %v2128
      %v2161 = vunpack.c.l.b16 %v2129
      %v2162 = vpack.c.b16 %v2147, %v2146
      %v2163 = vpack.c.b16 %v2149, %v2148
      %v2164 = vpack.c.b16 %v2151, %v2150
      %v2165 = vpack.c.b16 %v2153, %v2152
      %v2166 = vpack.c.b16 %v2155, %v2154
      %v2167 = vpack.c.b16 %v2157, %v2156
      %v2168 = vpack.c.b16 %v2159, %v2158
      %v2169 = vpack.c.b16 %v2161, %v2160
      %2178 = vmatpush.bf16.msra.mxu0 %v2169
      %2179 = vmatpush.bf16.msra.mxu0 %v2168
      %2180 = vmatpush.bf16.msra.mxu0 %v2167
      %2181 = vmatpush.bf16.msra.mxu0 %v2166
      %2182 = vmatpush.bf16.msra.mxu0 %v2165
      %2183 = vmatpush.bf16.msra.mxu0 %v2164
      %2184 = vmatpush.bf16.msra.mxu0 %v2163
      %2185 = vmatpush.bf16.msra.mxu0 %v2162
      %2186 = vmatmul.bf16.gmra.mxu0 %v1790
      %v2187 = vpop.f32.mrf.mxu0
      %v2188 = vadd.f32 0.0, %v2187
      %v2189 = vpop.f32.mrf.mxu0
      %v2190 = vadd.f32 0.0, %v2189
      %2191 = vmatmul.bf16.gmra.mxu0 %v1791
      %v2192 = vpop.f32.mrf.mxu0
      %v2193 = vadd.f32 0.0, %v2192
      %v2194 = vpop.f32.mrf.mxu0
      %v2195 = vadd.f32 0.0, %v2194
      %2196 = vmatmul.bf16.gmra.mxu0 %v1792
      %v2197 = vpop.f32.mrf.mxu0
      %v2198 = vadd.f32 0.0, %v2197
      %v2199 = vpop.f32.mrf.mxu0
      %v2200 = vadd.f32 0.0, %v2199
      %2201 = vmatmul.bf16.gmra.mxu0 %v1793
      %v2202 = vpop.f32.mrf.mxu0
      %v2203 = vadd.f32 0.0, %v2202
      %v2204 = vpop.f32.mrf.mxu0
      %v2205 = vadd.f32 0.0, %v2204
      %2206 = vmatmul.bf16.gmra.mxu0 %v1794
      %v2207 = vpop.f32.mrf.mxu0
      %v2208 = vadd.f32 0.0, %v2207
      %v2209 = vpop.f32.mrf.mxu0
      %v2210 = vadd.f32 0.0, %v2209
      %2211 = vmatmul.bf16.gmra.mxu0 %v1795
      %v2212 = vpop.f32.mrf.mxu0
      %v2213 = vadd.f32 0.0, %v2212
      %v2214 = vpop.f32.mrf.mxu0
      %v2215 = vadd.f32 0.0, %v2214
      %2216 = vmatmul.bf16.gmra.mxu0 %v1796
      %v2217 = vpop.f32.mrf.mxu0
      %v2218 = vadd.f32 0.0, %v2217
      %v2219 = vpop.f32.mrf.mxu0
      %v2220 = vadd.f32 0.0, %v2219
      %2221 = vmatmul.bf16.gmra.mxu0 %v1797
      %v2222 = vpop.f32.mrf.mxu0
      %v2223 = vadd.f32 0.0, %v2222
      %v2224 = vpop.f32.mrf.mxu0
      %v2225 = vadd.f32 0.0, %v2224
      %2226 = vdwg.mxu0
      %v2227 = vadd.f32 %v2097, %v2188
      %v2228 = vadd.f32 %v2098, %v2190
      %v2229 = vadd.f32 %v2099, %v2193
      %v2230 = vadd.f32 %v2100, %v2195
      %v2231 = vadd.f32 %v2101, %v2198
      %v2232 = vadd.f32 %v2102, %v2200
      %v2233 = vadd.f32 %v2103, %v2203
      %v2234 = vadd.f32 %v2104, %v2205
      %v2235 = vadd.f32 %v2105, %v2208
      %v2236 = vadd.f32 %v2106, %v2210
      %v2237 = vadd.f32 %v2107, %v2213
      %v2238 = vadd.f32 %v2108, %v2215
      %v2239 = vadd.f32 %v2109, %v2218
      %v2240 = vadd.f32 %v2110, %v2220
      %v2241 = vadd.f32 %v2111, %v2223
      %v2242 = vadd.f32 %v2112, %v2225
      %2243 = vst [vmem:[%s995] sm:$0xff] %v2227
      %2244 = vst [vmem:[%s995 + $0x8] sm:$0xff] %v2228
      %2245 = vst [vmem:[%s995 + $0x10] sm:$0xff] %v2229
      %2246 = vst [vmem:[%s995 + $0x18] sm:$0xff] %v2230
      %2247 = vst [vmem:[%s995 + $0x20] sm:$0xff] %v2231
      %2248 = vst [vmem:[%s995 + $0x28] sm:$0xff] %v2232
      %2249 = vst [vmem:[%s995 + $0x30] sm:$0xff] %v2233
      %2250 = vst [vmem:[%s995 + $0x38] sm:$0xff] %v2234
      %2251 = vst [vmem:[%s995 + $0x40] sm:$0xff] %v2235
      %2252 = vst [vmem:[%s995 + $0x48] sm:$0xff] %v2236
      %2253 = vst [vmem:[%s995 + $0x50] sm:$0xff] %v2237
      %2254 = vst [vmem:[%s995 + $0x58] sm:$0xff] %v2238
      %2255 = vst [vmem:[%s995 + $0x60] sm:$0xff] %v2239
      %2256 = vst [vmem:[%s995 + $0x68] sm:$0xff] %v2240
      %2257 = vst [vmem:[%s995 + $0x70] sm:$0xff] %v2241
      %2258 = vst [vmem:[%s995 + $0x78] sm:$0xff] %v2242
      %v2259 = vld [vmem:[#allocation3] sm:$0xff]
      %v2260 = vld [vmem:[#allocation3 + $0x10] sm:$0xff]
      %v2261 = vld [vmem:[#allocation3 + $0x20] sm:$0xff]
      %v2262 = vld [vmem:[#allocation3 + $0x30] sm:$0xff]
      %v2263 = vld [vmem:[#allocation3 + $0x40] sm:$0xff]
      %v2264 = vld [vmem:[#allocation3 + $0x50] sm:$0xff]
      %v2265 = vld [vmem:[#allocation3 + $0x60] sm:$0xff]
      %v2266 = vld [vmem:[#allocation3 + $0x70] sm:$0xff]
      %v2267 = vld [vmem:[%s832] sm:$0xff]
      %v2268 = vld [vmem:[%s832 + $0x8] sm:$0xff]
      %v2269 = vld [vmem:[%s832 + $0x10] sm:$0xff]
      %v2270 = vld [vmem:[%s832 + $0x18] sm:$0xff]
      %v2271 = vld [vmem:[%s832 + $0x20] sm:$0xff]
      %v2272 = vld [vmem:[%s832 + $0x28] sm:$0xff]
      %v2273 = vld [vmem:[%s832 + $0x30] sm:$0xff]
      %v2274 = vld [vmem:[%s832 + $0x38] sm:$0xff]
      %v2275 = vld [vmem:[%s832 + $0x40] sm:$0xff]
      %v2276 = vld [vmem:[%s832 + $0x48] sm:$0xff]
      %v2277 = vld [vmem:[%s832 + $0x50] sm:$0xff]
      %v2278 = vld [vmem:[%s832 + $0x58] sm:$0xff]
      %v2279 = vld [vmem:[%s832 + $0x60] sm:$0xff]
      %v2280 = vld [vmem:[%s832 + $0x68] sm:$0xff]
      %v2281 = vld [vmem:[%s832 + $0x70] sm:$0xff]
      %v2282 = vld [vmem:[%s832 + $0x78] sm:$0xff]
      %v2283 = vld [vmem:[%s995] sm:$0xff]
      %v2284 = vld [vmem:[%s995 + $0x8] sm:$0xff]
      %v2285 = vld [vmem:[%s995 + $0x10] sm:$0xff]
      %v2286 = vld [vmem:[%s995 + $0x18] sm:$0xff]
      %v2287 = vld [vmem:[%s995 + $0x20] sm:$0xff]
      %v2288 = vld [vmem:[%s995 + $0x28] sm:$0xff]
      %v2289 = vld [vmem:[%s995 + $0x30] sm:$0xff]
      %v2290 = vld [vmem:[%s995 + $0x38] sm:$0xff]
      %v2291 = vld [vmem:[%s995 + $0x40] sm:$0xff]
      %v2292 = vld [vmem:[%s995 + $0x48] sm:$0xff]
      %v2293 = vld [vmem:[%s995 + $0x50] sm:$0xff]
      %v2294 = vld [vmem:[%s995 + $0x58] sm:$0xff]
      %v2295 = vld [vmem:[%s995 + $0x60] sm:$0xff]
      %v2296 = vld [vmem:[%s995 + $0x68] sm:$0xff]
      %v2297 = vld [vmem:[%s995 + $0x70] sm:$0xff]
      %v2298 = vld [vmem:[%s995 + $0x78] sm:$0xff]
      %vm2315 = vcmask 1046528
      %v2316 = vrot.slane %v2267, 1
      %v2317 = vrot.slane %v2268, 1
      %v2318 = vsel %vm2315, %v2316, %v2317
      %v2319 = vrot.slane %v2269, 1
      %v2320 = vrot.slane %v2270, 1
      %v2321 = vsel %vm2315, %v2319, %v2320
      %v2322 = vrot.slane %v2271, 1
      %v2323 = vrot.slane %v2272, 1
      %v2324 = vsel %vm2315, %v2322, %v2323
      %v2325 = vrot.slane %v2273, 1
      %v2326 = vrot.slane %v2274, 1
      %v2327 = vsel %vm2315, %v2325, %v2326
      %v2328 = vrot.slane %v2275, 1
      %v2329 = vrot.slane %v2276, 1
      %v2330 = vsel %vm2315, %v2328, %v2329
      %v2331 = vrot.slane %v2277, 1
      %v2332 = vrot.slane %v2278, 1
      %v2333 = vsel %vm2315, %v2331, %v2332
      %v2334 = vrot.slane %v2279, 1
      %v2335 = vrot.slane %v2280, 1
      %v2336 = vsel %vm2315, %v2334, %v2335
      %v2337 = vrot.slane %v2281, 1
      %v2338 = vrot.slane %v2282, 1
      %v2339 = vsel %vm2315, %v2337, %v2338
      %v2348 = vadd.f32 %v2259, %v2318
      %v2349 = vadd.f32 %v2260, %v2321
      %v2350 = vadd.f32 %v2261, %v2324
      %v2351 = vadd.f32 %v2262, %v2327
      %v2352 = vadd.f32 %v2263, %v2330
      %v2353 = vadd.f32 %v2264, %v2333
      %v2354 = vadd.f32 %v2265, %v2336
      %v2355 = vadd.f32 %v2266, %v2339
      %vm2372 = vcmask 1045504
      %v2373 = vrot.slane %v2283, 2
      %v2374 = vrot.slane %v2284, 2
      %v2375 = vsel %vm2372, %v2373, %v2374
      %v2376 = vrot.slane %v2285, 2
      %v2377 = vrot.slane %v2286, 2
      %v2378 = vsel %vm2372, %v2376, %v2377
      %v2379 = vrot.slane %v2287, 2
      %v2380 = vrot.slane %v2288, 2
      %v2381 = vsel %vm2372, %v2379, %v2380
      %v2382 = vrot.slane %v2289, 2
      %v2383 = vrot.slane %v2290, 2
      %v2384 = vsel %vm2372, %v2382, %v2383
      %v2385 = vrot.slane %v2291, 2
      %v2386 = vrot.slane %v2292, 2
      %v2387 = vsel %vm2372, %v2385, %v2386
      %v2388 = vrot.slane %v2293, 2
      %v2389 = vrot.slane %v2294, 2
      %v2390 = vsel %vm2372, %v2388, %v2389
      %v2391 = vrot.slane %v2295, 2
      %v2392 = vrot.slane %v2296, 2
      %v2393 = vsel %vm2372, %v2391, %v2392
      %v2394 = vrot.slane %v2297, 2
      %v2395 = vrot.slane %v2298, 2
      %v2396 = vsel %vm2372, %v2394, %v2395
      %v2405 = vadd.f32 %v2348, %v2375
      %v2406 = vadd.f32 %v2349, %v2378
      %v2407 = vadd.f32 %v2350, %v2381
      %v2408 = vadd.f32 %v2351, %v2384
      %v2409 = vadd.f32 %v2352, %v2387
      %v2410 = vadd.f32 %v2353, %v2390
      %v2411 = vadd.f32 %v2354, %v2393
      %v2412 = vadd.f32 %v2355, %v2396
      %v2413 = vpack.c.bf16 %v2405, %v2405
      %v2414 = vpack.c.bf16 %v2406, %v2406
      %v2415 = vpack.c.bf16 %v2407, %v2407
      %v2416 = vpack.c.bf16 %v2408, %v2408
      %v2417 = vpack.c.bf16 %v2409, %v2409
      %v2418 = vpack.c.bf16 %v2410, %v2410
      %v2419 = vpack.c.bf16 %v2411, %v2411
      %v2420 = vpack.c.bf16 %v2412, %v2412
      %2421 = vst [vmem:[%s318] sm:$0xf] %v2413
      %2422 = vst [vmem:[%s318 + $0x4] sm:$0xf] %v2414
      %2423 = vst [vmem:[%s318 + $0x8] sm:$0xf] %v2415
      %2424 = vst [vmem:[%s318 + $0xc] sm:$0xf] %v2416
      %2425 = vst [vmem:[%s318 + $0x10] sm:$0xf] %v2417
      %2426 = vst [vmem:[%s318 + $0x14] sm:$0xf] %v2418
      %2427 = vst [vmem:[%s318 + $0x18] sm:$0xf] %v2419
      %2428 = vst [vmem:[%s318 + $0x1c] sm:$0xf] %v2420
      %v2429 = vadd.f32 %v2405, %v2406
      %v2430 = vadd.f32 %v2429, %v2407
      %v2431 = vadd.f32 %v2430, %v2408
      %v2432 = vadd.f32 %v2431, %v2409
      %v2433 = vadd.f32 %v2432, %v2410
      %v2434 = vadd.f32 %v2433, %v2411
      %v2435 = vadd.f32 %v2434, %v2412
      %v2436 = vrot.slane %v2435, 4
      %v2437 = vadd.f32 %v2435, %v2436
      %v2438 = vrot.slane %v2437, 2
      %v2439 = vadd.f32 %v2437, %v2438
      %v2440 = vrot.slane %v2439, 1
      %v2441 = vadd.f32 %v2439, %v2440
      %2442 = vst [vmem:[%s322] sm:$0x1] %v2441
      %v2443 = vmul.f32 %v2405, %v2405
      %v2444 = vmul.f32 %v2406, %v2406
      %v2445 = vmul.f32 %v2407, %v2407
      %v2446 = vmul.f32 %v2408, %v2408
      %v2447 = vmul.f32 %v2409, %v2409
      %v2448 = vmul.f32 %v2410, %v2410
      %v2449 = vmul.f32 %v2411, %v2411
      %v2450 = vmul.f32 %v2412, %v2412
      %v2451 = vadd.f32 %v2443, %v2444
      %v2452 = vadd.f32 %v2451, %v2445
      %v2453 = vadd.f32 %v2452, %v2446
      %v2454 = vadd.f32 %v2453, %v2447
      %v2455 = vadd.f32 %v2454, %v2448
      %v2456 = vadd.f32 %v2455, %v2449
      %v2457 = vadd.f32 %v2456, %v2450
      %v2458 = vrot.slane %v2457, 4
      %v2459 = vadd.f32 %v2457, %v2458
      %v2460 = vrot.slane %v2459, 2
      %v2461 = vadd.f32 %v2459, %v2460
      %v2462 = vrot.slane %v2461, 1
      %v2463 = vadd.f32 %v2461, %v2462
      %2464 = vst [vmem:[%s325] sm:$0x1] %v2463
      %s2465 = smul.u32 8, %s20
      %p2466 = scmp.lt.s32.totalorder %s2465, 15
      %s2467 = scalar_select %p2466, %s2465, 15
      %s2468 = smul.addr %s2467, 4
      %s2469 = scalar_lea.vmem %s6, %s2468
      %p2470 = scmp.lt.s32.totalorder %s20, 1
      %s2471 = scalar_select %p2470, %s20, 1
      %s2472 = scalar_lea.vmem %s7, %s2471
      %p2473 = scmp.lt.s32.totalorder %s20, 1
      %s2474 = scalar_select %p2473, %s20, 1
      %s2475 = scalar_lea.vmem %s8, %s2474
      // Predicated region
      $region45: #{bottleneck_forward.5} parent=43 // pred_check
        %p2476 = pneg %p169
      $region46: #{bottleneck_forward.5} parent=43 // pred_check_branch
        %2478 = sbr.rel (%p2476) target = $region48
      $region47: #{bottleneck_forward.5} parent=43 // pred_region
        %s2479 = smul.u32 8, %s20
      $region48: #{bottleneck_forward.5} parent=43 // pred_fallthru
        _
      // Predicated region
      $region49: #{bottleneck_forward.5} parent=43 // pred_check
        %p2480 = pneg %p195
      $region50: #{bottleneck_forward.5} parent=43 // pred_check_branch
        %2482 = sbr.rel (%p2480) target = $region52
      $region51: #{bottleneck_forward.5} parent=43 // pred_region
        _
      $region52: #{bottleneck_forward.5} parent=43 // pred_fallthru
        _
      // Predicated region
      $region53: #{bottleneck_forward.5} parent=43 // pred_check
        %p2483 = pneg %p221
      $region54: #{bottleneck_forward.5} parent=43 // pred_check_branch
        %2485 = sbr.rel (%p2483) target = $region56
      $region55: #{bottleneck_forward.5} parent=43 // pred_region
        _
      $region56: #{bottleneck_forward.5} parent=43 // pred_fallthru
        _
    $region44: #{bottleneck_forward.5} parent=5 // pred_fallthru
      _
    %p2486 = scmp.le.s32.totalorder 2, %s15
    // Predicated region
    $region57: #{bottleneck_forward.5} parent=5 // pred_check
      %p2487 = pneg %p2486
    $region58: #{bottleneck_forward.5} parent=5 // pred_check_branch
      %2489 = sbr.rel (%p2487) target = $region60
    $region59: #{bottleneck_forward.5} parent=5 // pred_region
      %s2490 = ssub.s32 %s15, 2
      // Predicated region
      $region61: #{bottleneck_forward.5} parent=59 // pred_check
        %p2491 = pneg %p175
      $region62: #{bottleneck_forward.5} parent=59 // pred_check_branch
        %2493 = sbr.rel (%p2491) target = $region64
      $region63: #{bottleneck_forward.5} parent=59 // pred_region
        %s2494 = smul.u32 8, %s21
        %p2495 = scmp.lt.s32.totalorder %s2494, 15
        %s2496 = scalar_select %p2495, %s2494, 15
        %s2497 = smul.addr %s2496, 4
        %s2498 = scalar_lea.vmem %s6, %s2497
      $region64: #{bottleneck_forward.5} parent=59 // pred_fallthru
        _
      // Predicated region
      $region65: #{bottleneck_forward.5} parent=59 // pred_check
        %p2499 = pneg %p201
      $region66: #{bottleneck_forward.5} parent=59 // pred_check_branch
        %2501 = sbr.rel (%p2499) target = $region68
      $region67: #{bottleneck_forward.5} parent=59 // pred_region
        %p2502 = scmp.lt.s32.totalorder %s21, 1
        %s2503 = scalar_select %p2502, %s21, 1
        %s2504 = scalar_lea.vmem %s7, %s2503
      $region68: #{bottleneck_forward.5} parent=59 // pred_fallthru
        _
      // Predicated region
      $region69: #{bottleneck_forward.5} parent=59 // pred_check
        %p2505 = pneg %p227
      $region70: #{bottleneck_forward.5} parent=59 // pred_check_branch
        %2507 = sbr.rel (%p2505) target = $region72
      $region71: #{bottleneck_forward.5} parent=59 // pred_region
        %p2508 = scmp.lt.s32.totalorder %s21, 1
        %s2509 = scalar_select %p2508, %s21, 1
        %s2510 = scalar_lea.vmem %s8, %s2509
      $region72: #{bottleneck_forward.5} parent=59 // pred_fallthru
        _
    $region60: #{bottleneck_forward.5} parent=5 // pred_fallthru
      _
  $region6: #{bottleneck_forward.5} parent=0 // loop_footer
    %s19 = sadd.s32 1, %s15
  $region7: #{bottleneck_forward.5} parent=0 // loop_footer_branch
    %14 = sbr.rel target = $region3
  $region8: #{bottleneck_forward.5} parent=0 // loop_exit
    _

</llo_original>
